<compile_context>
chip_gen: v7x
topology: tpu7x:2x2x1
jax: 0.10.0
libtpu: 0.0.40
codegen_flags: <defaults>
</compile_context>

<pallas_src>
import functools

import numpy as np
import jax
import jax.numpy as jnp
from jax.experimental import pallas as pl
from jax.experimental.pallas import tpu as pltpu


# 3x3 binomial blur taps ([1,2,1] (x) [1,2,1]) / 16 — the `downsamp` filter (exact in binary).
_BLUR_1D = np.array([1.0, 2.0, 1.0])
_BLUR_2D = np.outer(_BLUR_1D, _BLUR_1D)
_BLUR_2D = (_BLUR_2D / _BLUR_2D.sum()).astype(np.float32)          # (3, 3)


def _prelu(y, alpha):
    return jnp.where(y >= 0.0, y, alpha * y)


# ----------------------------------------------------------------------------
# Fused kernel: conv1x1 -> PReLU -> conv3x3 -> PReLU -> blur-down (both branches)
#               -> both tail 1x1 convs -> residual add
# ----------------------------------------------------------------------------
def _fused_kernel(alpha_ref, xp_ref, w1_ref, w2_ref, w3_ref, w4_ref, o_ref, pad_ref,
                  *, H, W, Hp, Wq, C, Ho, Wo):
    a1 = alpha_ref[0]
    a2 = alpha_ref[1]

    xfull = xp_ref[0]                                   # (Hp, Wq, C) bf16, zero padded

    # ---- stage 1: 1x1 conv + PReLU over the zero-padded domain --------------
    # PReLU(0 @ W1) == 0, so the zero halo the 3x3 conv needs is reproduced exactly.
    xflat = xfull.reshape(Hp * Wq, C)
    a = jnp.dot(xflat, w1_ref[...], preferred_element_type=jnp.float32)
    a = _prelu(a, a1).astype(jnp.bfloat16)              # single hoisted cast

    # ---- stage 2: 3x3 conv (zero pad=1) as 9 row-shifted contiguous slices ---
    # A (kh, kw) spatial shift of the flattened activation is a row offset of
    # kh*Wq + kw: free im2col, no per-tap relayout.  f32 MXU accumulation,
    # initialized from the first tap (no zero-fill).
    M = H * Wq
    acc = None
    for kh in range(3):
        for kw in range(3):
            off = kh * Wq + kw
            part = jnp.dot(a[off:off + M, :], w2_ref[kh * 3 + kw],
                           preferred_element_type=jnp.float32)
            acc = part if acc is None else acc + part
    t2 = _prelu(acc, a2).reshape(H, Wq, C)               # f32; columns [0, W) are valid

    # ---- stage 3: reflect-pad + depthwise binomial blur + stride-2 decimate --
    def store_reflect_padded(v):                         # v: (H, W, C)
        rp = jnp.concatenate([v[1:2], v, v[H - 2:H - 1]], axis=0)      # row reflect
        pad_ref[:, 1:W + 1, :] = rp.astype(pad_ref.dtype)
        pad_ref[:, 0:1, :] = rp[:, 1:2, :].astype(pad_ref.dtype)       # col reflect
        pad_ref[:, W + 1:W + 2, :] = rp[:, W - 2:W - 1, :].astype(pad_ref.dtype)

    def blur_decimate():
        s = None
        for kh in range(3):
            for kw in range(3):
                tap = pad_ref[pl.ds(kh, Ho, stride=2), pl.ds(kw, Wo, stride=2), :]
                w = float(_BLUR_2D[kh, kw])
                s = w * tap if s is None else s + w * tap
        return s.reshape(Ho * Wo, C).astype(jnp.bfloat16)

    store_reflect_padded(t2[:, :W, :])                    # top branch activations
    td = blur_decimate()
    store_reflect_padded(xfull[1:H + 1, 1:W + 1, :])      # bottom branch: raw x
    bd = blur_decimate()

    # ---- stage 4: both tail 1x1 convs (C -> 2C) + residual add ---------------
    y = (jnp.dot(td, w3_ref[...], preferred_element_type=jnp.float32)
         + jnp.dot(bd, w4_ref[...], preferred_element_type=jnp.float32))
    o_ref[0] = y.reshape(Ho, Wo, 2 * C).astype(o_ref.dtype)


def _fused_call(alphas, xz, w1, w2, w3, w4, *, H, W, Hp, Wq, C, Ho, Wo, out_dtype):
    N = xz.shape[0]
    kern = functools.partial(_fused_kernel, H=H, W=W, Hp=Hp, Wq=Wq, C=C, Ho=Ho, Wo=Wo)
    return pl.pallas_call(
        kern,
        out_shape=jax.ShapeDtypeStruct((N, Ho, Wo, 2 * C), out_dtype),
        grid=(N,),
        in_specs=[
            pl.BlockSpec(memory_space=pltpu.MemorySpace.SMEM),        # PReLU slopes
            pl.BlockSpec((1, Hp, Wq, C), lambda n: (n, 0, 0, 0)),     # zero-padded x (bf16)
            pl.BlockSpec((C, C), lambda n: (0, 0)),                   # conv1x1 C->C
            pl.BlockSpec((9, C, C), lambda n: (0, 0, 0)),             # conv3x3 taps
            pl.BlockSpec((C, 2 * C), lambda n: (0, 0)),               # top tail 1x1
            pl.BlockSpec((C, 2 * C), lambda n: (0, 0)),               # bottom tail 1x1
        ],
        out_specs=pl.BlockSpec((1, Ho, Wo, 2 * C), lambda n: (n, 0, 0, 0)),
        scratch_shapes=[pltpu.VMEM((H + 2, W + 2, C), jnp.float32)],  # reflect-padded buf
        compiler_params=pltpu.CompilerParams(
            dimension_semantics=("parallel",),
            vmem_limit_bytes=48 * 1024 * 1024),
    )(alphas, xz, w1, w2, w3, w4)


# ----------------------------------------------------------------------------
# Functional forward (NCHW in / NCHW out, like the PyTorch module)
# ----------------------------------------------------------------------------
def residual_downsample_apply(params, x_nchw, out_dtype=jnp.float32):
    N, C, H, W = x_nchw.shape
    assert H % 2 == 0 and W % 2 == 0 and H >= 4 and W >= 4, "expects even spatial dims >= 4"
    Ho, Wo = H // 2, W // 2
    Wq = ((W + 2 + 15) // 16) * 16       # padded width, bf16-sublane aligned (>= W+2)
    Hp = H + 3                           # 1 zero row above, 2 below (row-shift slack)

    w1 = params["w1"].astype(jnp.bfloat16)
    w2 = params["w2"].astype(jnp.bfloat16)
    w3 = params["w3"].astype(jnp.bfloat16)
    w4 = params["w4"].astype(jnp.bfloat16)
    alphas = params["alphas"].astype(jnp.float32)

    # NCHW -> NHWC, bf16 activations: halves the kernel's dominant input DMA stream.
    x = jnp.transpose(x_nchw, (0, 2, 3, 1)).astype(jnp.bfloat16)
    xz = jnp.pad(x, ((0, 0), (1, 2), (1, Wq - W - 1), (0, 0)))

    y = _fused_call(alphas, xz, w1, w2, w3, w4, H=H, W=W, Hp=Hp, Wq=Wq, C=C,
                    Ho=Ho, Wo=Wo, out_dtype=out_dtype)                # (N, Ho, Wo, 2C)
    return jnp.transpose(y, (0, 3, 1, 2))                             # NCHW


# ----------------------------------------------------------------------------
# Pure-XLA float32 reference (mirrors the PyTorch module) for a sanity check
# ----------------------------------------------------------------------------
def residual_downsample_ref(params, x_nchw):
    N, C, H, W = x_nchw.shape
    Ho, Wo = H // 2, W // 2
    x = jnp.transpose(x_nchw, (0, 2, 3, 1)).astype(jnp.float32)
    a1, a2 = params["alphas"][0], params["alphas"][1]

    def blurdown(v):
        vp = jnp.pad(v, ((0, 0), (1, 1), (1, 1), (0, 0)), mode="reflect")
        acc = 0.0
        for kh in range(3):
            for kw in range(3):
                acc = acc + _BLUR_2D[kh, kw] * vp[:, kh::2, kw::2, :][:, :Ho, :Wo, :]
        return acc

    a = _prelu(jnp.einsum("nhwc,cd->nhwd", x, params["w1"]), a1)
    ap = jnp.pad(a, ((0, 0), (1, 1), (1, 1), (0, 0)))
    y = 0.0
    for kh in range(3):
        for kw in range(3):
            y = y + jnp.einsum("nhwc,cd->nhwd",
                               ap[:, kh:kh + H, kw:kw + W, :],
                               params["w2"][kh * 3 + kw])
    y = _prelu(y, a2)
    top = jnp.einsum("nhwc,cd->nhwd", blurdown(y), params["w3"])
    bot = jnp.einsum("nhwc,cd->nhwd", blurdown(x), params["w4"])
    return jnp.transpose(top + bot, (0, 3, 1, 2))


# ----------------------------------------------------------------------------
# Deterministic parameter init (bias=False everywhere in this module)
# ----------------------------------------------------------------------------
def init_params(key, C):
    ks = jax.random.split(key, 4)

    def u(k, shape, fan_in):
        b = 1.0 / np.sqrt(fan_in)
        return jax.random.uniform(k, shape, jnp.float32, -b, b)

    return dict(
        w1=u(ks[0], (C, C), C),              # conv1x1 C->C   (Cin, Cout)
        w2=u(ks[1], (9, C, C), 9 * C),       # conv3x3 taps   [kh*3+kw](Cin, Cout)
        w3=u(ks[2], (C, 2 * C), C),          # top tail 1x1   C->2C
        w4=u(ks[3], (C, 2 * C), C),          # bottom 1x1     C->2C
        alphas=jnp.full((2,), 0.25, jnp.float32),   # the two nn.PReLU() slopes
    )


# ----------------------------------------------------------------------------

if __name__ == "__main__":
    N, C, H, W = 2, 8, 16, 16
    key = jax.random.PRNGKey(0)
    kx, kp = jax.random.split(key)
    x = jax.random.normal(kx, (N, C, H, W), jnp.float32)          # NCHW, like PyTorch
    params = init_params(kp, C)

    fwd = jax.jit(residual_downsample_apply)
    out = jax.block_until_ready(fwd(params, x))

    assert out.shape == (N, 2 * C, H // 2, W // 2), out.shape
    assert out.dtype == jnp.float32
    assert bool(jnp.all(jnp.isfinite(out)))

    ref = residual_downsample_ref(params, x)
    err = float(jnp.max(jnp.abs(out - ref)))
    assert err < 0.1, f"max abs error vs f32 reference: {err}"
    print("KERNEL_OK")
</pallas_src>

<mosaic_0001>
module attributes {stable_mosaic.version = 11 : i64} {
  func.func @_fused_kernel(%arg0: i32, %arg1: memref<2xf32, #tpu.memory_space<smem>>, %arg2: memref<1x19x32x8xbf16, #tpu.memory_space<vmem>>, %arg3: memref<8x8xbf16, #tpu.memory_space<vmem>>, %arg4: memref<9x8x8xbf16, #tpu.memory_space<vmem>>, %arg5: memref<8x16xbf16, #tpu.memory_space<vmem>>, %arg6: memref<8x16xbf16, #tpu.memory_space<vmem>>, %arg7: memref<1x8x8x16xf32, #tpu.memory_space<vmem>>, %arg8: memref<18x18x8xf32, #tpu.memory_space<vmem>>) attributes {dimension_semantics = [#tpu.dimension_semantics<parallel>], iteration_bounds = array<i64: 2>, scalar_prefetch = 0 : i64, scratch_operands = 1 : i64, tpu.core_type = #tpu.core_type<tc>, window_params = [{transform_indices = @transform_0, window_bounds = array<i64: 2>}, {transform_indices = @transform_1, window_bounds = array<i64: 1, 19, 32, 8>}, {pipeline_mode = #tpu.pipeline_mode<synchronous>, transform_indices = @transform_2, window_bounds = array<i64: 8, 8>}, {pipeline_mode = #tpu.pipeline_mode<synchronous>, transform_indices = @transform_3, window_bounds = array<i64: 9, 8, 8>}, {pipeline_mode = #tpu.pipeline_mode<synchronous>, transform_indices = @transform_4, window_bounds = array<i64: 8, 16>}, {pipeline_mode = #tpu.pipeline_mode<synchronous>, transform_indices = @transform_5, window_bounds = array<i64: 8, 16>}, {transform_indices = @transform_6, window_bounds = array<i64: 1, 8, 8, 16>}]} {
    %c0 = arith.constant 0 : index
    %0 = memref.load %arg1[%c0] : memref<2xf32, #tpu.memory_space<smem>>
    %c1 = arith.constant 1 : index
    %1 = memref.load %arg1[%c1] : memref<2xf32, #tpu.memory_space<smem>>
    %c0_0 = arith.constant 0 : index
    %c0_1 = arith.constant 0 : index
    %c0_2 = arith.constant 0 : index
    %c0_3 = arith.constant 0 : index
    %2 = vector.load %arg2[%c0_0, %c0_1, %c0_2, %c0_3] : memref<1x19x32x8xbf16, #tpu.memory_space<vmem>>, vector<1x19x32x8xbf16>
    %3 = vector.shape_cast %2 : vector<1x19x32x8xbf16> to vector<19x32x8xbf16>
    %4 = vector.shape_cast %3 : vector<19x32x8xbf16> to vector<608x8xbf16>
    %c0_4 = arith.constant 0 : index
    %c0_5 = arith.constant 0 : index
    %5 = vector.load %arg3[%c0_4, %c0_5] : memref<8x8xbf16, #tpu.memory_space<vmem>>, vector<8x8xbf16>
    %cst = arith.constant dense<0.000000e+00> : vector<608x8xf32>
    %6 = tpu.matmul %4, %5, %cst {dimension_numbers = #tpu.dot_dimension_numbers<[1], [0], [0], [1], [0, 0, 1, 1], [], []>} : vector<608x8xbf16>, vector<8x8xbf16>, vector<608x8xf32> -> vector<608x8xf32>
    %cst_6 = arith.constant 0.000000e+00 : f32
    %7 = vector.broadcast %cst_6 : f32 to vector<608x8xf32>
    %8 = arith.cmpf oge, %6, %7 : vector<608x8xf32>
    %9 = vector.broadcast %0 : f32 to vector<608x8xf32>
    %10 = arith.mulf %9, %6 : vector<608x8xf32>
    %11 = arith.select %8, %6, %10 : vector<608x8xi1>, vector<608x8xf32>
    %12 = arith.truncf %11 : vector<608x8xf32> to vector<608x8xbf16>
    %13 = vector.extract_strided_slice %12 {offsets = [0, 0], sizes = [512, 8], strides = [1, 1]} : vector<608x8xbf16> to vector<512x8xbf16>
    %c0_7 = arith.constant 0 : index
    %c0_8 = arith.constant 0 : index
    %c0_9 = arith.constant 0 : index
    %14 = vector.load %arg4[%c0_7, %c0_8, %c0_9] : memref<9x8x8xbf16, #tpu.memory_space<vmem>>, vector<1x8x8xbf16>
    %15 = vector.shape_cast %14 : vector<1x8x8xbf16> to vector<8x8xbf16>
    %cst_10 = arith.constant dense<0.000000e+00> : vector<512x8xf32>
    %16 = tpu.matmul %13, %15, %cst_10 {dimension_numbers = #tpu.dot_dimension_numbers<[1], [0], [0], [1], [0, 0, 1, 1], [], []>} : vector<512x8xbf16>, vector<8x8xbf16>, vector<512x8xf32> -> vector<512x8xf32>
    %17 = vector.extract_strided_slice %12 {offsets = [1, 0], sizes = [512, 8], strides = [1, 1]} : vector<608x8xbf16> to vector<512x8xbf16>
    %c1_11 = arith.constant 1 : index
    %c0_12 = arith.constant 0 : index
    %c0_13 = arith.constant 0 : index
    %18 = vector.load %arg4[%c1_11, %c0_12, %c0_13] : memref<9x8x8xbf16, #tpu.memory_space<vmem>>, vector<1x8x8xbf16>
    %19 = vector.shape_cast %18 : vector<1x8x8xbf16> to vector<8x8xbf16>
    %cst_14 = arith.constant dense<0.000000e+00> : vector<512x8xf32>
    %20 = tpu.matmul %17, %19, %cst_14 {dimension_numbers = #tpu.dot_dimension_numbers<[1], [0], [0], [1], [0, 0, 1, 1], [], []>} : vector<512x8xbf16>, vector<8x8xbf16>, vector<512x8xf32> -> vector<512x8xf32>
    %21 = arith.addf %16, %20 : vector<512x8xf32>
    %22 = vector.extract_strided_slice %12 {offsets = [2, 0], sizes = [512, 8], strides = [1, 1]} : vector<608x8xbf16> to vector<512x8xbf16>
    %c2 = arith.constant 2 : index
    %c0_15 = arith.constant 0 : index
    %c0_16 = arith.constant 0 : index
    %23 = vector.load %arg4[%c2, %c0_15, %c0_16] : memref<9x8x8xbf16, #tpu.memory_space<vmem>>, vector<1x8x8xbf16>
    %24 = vector.shape_cast %23 : vector<1x8x8xbf16> to vector<8x8xbf16>
    %cst_17 = arith.constant dense<0.000000e+00> : vector<512x8xf32>
    %25 = tpu.matmul %22, %24, %cst_17 {dimension_numbers = #tpu.dot_dimension_numbers<[1], [0], [0], [1], [0, 0, 1, 1], [], []>} : vector<512x8xbf16>, vector<8x8xbf16>, vector<512x8xf32> -> vector<512x8xf32>
    %26 = arith.addf %21, %25 : vector<512x8xf32>
    %27 = vector.extract_strided_slice %12 {offsets = [32, 0], sizes = [512, 8], strides = [1, 1]} : vector<608x8xbf16> to vector<512x8xbf16>
    %c3 = arith.constant 3 : index
    %c0_18 = arith.constant 0 : index
    %c0_19 = arith.constant 0 : index
    %28 = vector.load %arg4[%c3, %c0_18, %c0_19] : memref<9x8x8xbf16, #tpu.memory_space<vmem>>, vector<1x8x8xbf16>
    %29 = vector.shape_cast %28 : vector<1x8x8xbf16> to vector<8x8xbf16>
    %cst_20 = arith.constant dense<0.000000e+00> : vector<512x8xf32>
    %30 = tpu.matmul %27, %29, %cst_20 {dimension_numbers = #tpu.dot_dimension_numbers<[1], [0], [0], [1], [0, 0, 1, 1], [], []>} : vector<512x8xbf16>, vector<8x8xbf16>, vector<512x8xf32> -> vector<512x8xf32>
    %31 = arith.addf %26, %30 : vector<512x8xf32>
    %32 = vector.extract_strided_slice %12 {offsets = [33, 0], sizes = [512, 8], strides = [1, 1]} : vector<608x8xbf16> to vector<512x8xbf16>
    %c4 = arith.constant 4 : index
    %c0_21 = arith.constant 0 : index
    %c0_22 = arith.constant 0 : index
    %33 = vector.load %arg4[%c4, %c0_21, %c0_22] : memref<9x8x8xbf16, #tpu.memory_space<vmem>>, vector<1x8x8xbf16>
    %34 = vector.shape_cast %33 : vector<1x8x8xbf16> to vector<8x8xbf16>
    %cst_23 = arith.constant dense<0.000000e+00> : vector<512x8xf32>
    %35 = tpu.matmul %32, %34, %cst_23 {dimension_numbers = #tpu.dot_dimension_numbers<[1], [0], [0], [1], [0, 0, 1, 1], [], []>} : vector<512x8xbf16>, vector<8x8xbf16>, vector<512x8xf32> -> vector<512x8xf32>
    %36 = arith.addf %31, %35 : vector<512x8xf32>
    %37 = vector.extract_strided_slice %12 {offsets = [34, 0], sizes = [512, 8], strides = [1, 1]} : vector<608x8xbf16> to vector<512x8xbf16>
    %c5 = arith.constant 5 : index
    %c0_24 = arith.constant 0 : index
    %c0_25 = arith.constant 0 : index
    %38 = vector.load %arg4[%c5, %c0_24, %c0_25] : memref<9x8x8xbf16, #tpu.memory_space<vmem>>, vector<1x8x8xbf16>
    %39 = vector.shape_cast %38 : vector<1x8x8xbf16> to vector<8x8xbf16>
    %cst_26 = arith.constant dense<0.000000e+00> : vector<512x8xf32>
    %40 = tpu.matmul %37, %39, %cst_26 {dimension_numbers = #tpu.dot_dimension_numbers<[1], [0], [0], [1], [0, 0, 1, 1], [], []>} : vector<512x8xbf16>, vector<8x8xbf16>, vector<512x8xf32> -> vector<512x8xf32>
    %41 = arith.addf %36, %40 : vector<512x8xf32>
    %42 = vector.extract_strided_slice %12 {offsets = [64, 0], sizes = [512, 8], strides = [1, 1]} : vector<608x8xbf16> to vector<512x8xbf16>
    %c6 = arith.constant 6 : index
    %c0_27 = arith.constant 0 : index
    %c0_28 = arith.constant 0 : index
    %43 = vector.load %arg4[%c6, %c0_27, %c0_28] : memref<9x8x8xbf16, #tpu.memory_space<vmem>>, vector<1x8x8xbf16>
    %44 = vector.shape_cast %43 : vector<1x8x8xbf16> to vector<8x8xbf16>
    %cst_29 = arith.constant dense<0.000000e+00> : vector<512x8xf32>
    %45 = tpu.matmul %42, %44, %cst_29 {dimension_numbers = #tpu.dot_dimension_numbers<[1], [0], [0], [1], [0, 0, 1, 1], [], []>} : vector<512x8xbf16>, vector<8x8xbf16>, vector<512x8xf32> -> vector<512x8xf32>
    %46 = arith.addf %41, %45 : vector<512x8xf32>
    %47 = vector.extract_strided_slice %12 {offsets = [65, 0], sizes = [512, 8], strides = [1, 1]} : vector<608x8xbf16> to vector<512x8xbf16>
    %c7 = arith.constant 7 : index
    %c0_30 = arith.constant 0 : index
    %c0_31 = arith.constant 0 : index
    %48 = vector.load %arg4[%c7, %c0_30, %c0_31] : memref<9x8x8xbf16, #tpu.memory_space<vmem>>, vector<1x8x8xbf16>
    %49 = vector.shape_cast %48 : vector<1x8x8xbf16> to vector<8x8xbf16>
    %cst_32 = arith.constant dense<0.000000e+00> : vector<512x8xf32>
    %50 = tpu.matmul %47, %49, %cst_32 {dimension_numbers = #tpu.dot_dimension_numbers<[1], [0], [0], [1], [0, 0, 1, 1], [], []>} : vector<512x8xbf16>, vector<8x8xbf16>, vector<512x8xf32> -> vector<512x8xf32>
    %51 = arith.addf %46, %50 : vector<512x8xf32>
    %52 = vector.extract_strided_slice %12 {offsets = [66, 0], sizes = [512, 8], strides = [1, 1]} : vector<608x8xbf16> to vector<512x8xbf16>
    %c8 = arith.constant 8 : index
    %c0_33 = arith.constant 0 : index
    %c0_34 = arith.constant 0 : index
    %53 = vector.load %arg4[%c8, %c0_33, %c0_34] : memref<9x8x8xbf16, #tpu.memory_space<vmem>>, vector<1x8x8xbf16>
    %54 = vector.shape_cast %53 : vector<1x8x8xbf16> to vector<8x8xbf16>
    %cst_35 = arith.constant dense<0.000000e+00> : vector<512x8xf32>
    %55 = tpu.matmul %52, %54, %cst_35 {dimension_numbers = #tpu.dot_dimension_numbers<[1], [0], [0], [1], [0, 0, 1, 1], [], []>} : vector<512x8xbf16>, vector<8x8xbf16>, vector<512x8xf32> -> vector<512x8xf32>
    %56 = arith.addf %51, %55 : vector<512x8xf32>
    %cst_36 = arith.constant 0.000000e+00 : f32
    %57 = vector.broadcast %cst_36 : f32 to vector<512x8xf32>
    %58 = arith.cmpf oge, %56, %57 : vector<512x8xf32>
    %59 = vector.broadcast %1 : f32 to vector<512x8xf32>
    %60 = arith.mulf %59, %56 : vector<512x8xf32>
    %61 = arith.select %58, %56, %60 : vector<512x8xi1>, vector<512x8xf32>
    %62 = vector.shape_cast %61 : vector<512x8xf32> to vector<16x32x8xf32>
    %63 = vector.extract_strided_slice %62 {offsets = [0, 0, 0], sizes = [16, 16, 8], strides = [1, 1, 1]} : vector<16x32x8xf32> to vector<16x16x8xf32>
    %64 = vector.extract_strided_slice %63 {offsets = [1, 0, 0], sizes = [1, 16, 8], strides = [1, 1, 1]} : vector<16x16x8xf32> to vector<1x16x8xf32>
    %65 = vector.extract_strided_slice %63 {offsets = [14, 0, 0], sizes = [1, 16, 8], strides = [1, 1, 1]} : vector<16x16x8xf32> to vector<1x16x8xf32>
    %66 = tpu.concatenate %64, %63, %65 in 0 : vector<1x16x8xf32>, vector<16x16x8xf32>, vector<1x16x8xf32> -> vector<18x16x8xf32>
    %c0_37 = arith.constant 0 : index
    %c1_38 = arith.constant 1 : index
    %c0_39 = arith.constant 0 : index
    %67 = vector.load %arg8[%c0_37, %c1_38, %c0_39] : memref<18x18x8xf32, #tpu.memory_space<vmem>>, vector<18x16x8xf32>
    tpu.vector_store %arg8[%c0_37, %c1_38, %c0_39], %66 {strides = array<i32>} : memref<18x18x8xf32, #tpu.memory_space<vmem>>, vector<18x16x8xf32>,
    %68 = vector.extract_strided_slice %66 {offsets = [0, 1, 0], sizes = [18, 1, 8], strides = [1, 1, 1]} : vector<18x16x8xf32> to vector<18x1x8xf32>
    %c0_40 = arith.constant 0 : index
    %c0_41 = arith.constant 0 : index
    %c0_42 = arith.constant 0 : index
    %69 = vector.load %arg8[%c0_40, %c0_41, %c0_42] : memref<18x18x8xf32, #tpu.memory_space<vmem>>, vector<18x1x8xf32>
    tpu.vector_store %arg8[%c0_40, %c0_41, %c0_42], %68 {strides = array<i32>} : memref<18x18x8xf32, #tpu.memory_space<vmem>>, vector<18x1x8xf32>,
    %70 = vector.extract_strided_slice %66 {offsets = [0, 14, 0], sizes = [18, 1, 8], strides = [1, 1, 1]} : vector<18x16x8xf32> to vector<18x1x8xf32>
    %c0_43 = arith.constant 0 : index
    %c17 = arith.constant 17 : index
    %c0_44 = arith.constant 0 : index
    %71 = vector.load %arg8[%c0_43, %c17, %c0_44] : memref<18x18x8xf32, #tpu.memory_space<vmem>>, vector<18x1x8xf32>
    tpu.vector_store %arg8[%c0_43, %c17, %c0_44], %70 {strides = array<i32>} : memref<18x18x8xf32, #tpu.memory_space<vmem>>, vector<18x1x8xf32>,
    %c0_45 = arith.constant 0 : index
    %c0_46 = arith.constant 0 : index
    %c0_47 = arith.constant 0 : index
    %72 = tpu.strided_load %arg8[%c0_45, %c0_46, %c0_47] {strides = array<i32: 2, 2, 1>} : memref<18x18x8xf32, #tpu.memory_space<vmem>>, vector<8x8x8xf32>
    %cst_48 = arith.constant 6.250000e-02 : f32
    %73 = vector.broadcast %cst_48 : f32 to vector<8x8x8xf32>
    %74 = arith.mulf %73, %72 : vector<8x8x8xf32>
    %c0_49 = arith.constant 0 : index
    %c1_50 = arith.constant 1 : index
    %c0_51 = arith.constant 0 : index
    %75 = tpu.strided_load %arg8[%c0_49, %c1_50, %c0_51] {strides = array<i32: 2, 2, 1>} : memref<18x18x8xf32, #tpu.memory_space<vmem>>, vector<8x8x8xf32>
    %cst_52 = arith.constant 1.250000e-01 : f32
    %76 = vector.broadcast %cst_52 : f32 to vector<8x8x8xf32>
    %77 = arith.mulf %76, %75 : vector<8x8x8xf32>
    %78 = arith.addf %74, %77 : vector<8x8x8xf32>
    %c0_53 = arith.constant 0 : index
    %c2_54 = arith.constant 2 : index
    %c0_55 = arith.constant 0 : index
    %79 = tpu.strided_load %arg8[%c0_53, %c2_54, %c0_55] {strides = array<i32: 2, 2, 1>} : memref<18x18x8xf32, #tpu.memory_space<vmem>>, vector<8x8x8xf32>
    %cst_56 = arith.constant 6.250000e-02 : f32
    %80 = vector.broadcast %cst_56 : f32 to vector<8x8x8xf32>
    %81 = arith.mulf %80, %79 : vector<8x8x8xf32>
    %82 = arith.addf %78, %81 : vector<8x8x8xf32>
    %c1_57 = arith.constant 1 : index
    %c0_58 = arith.constant 0 : index
    %c0_59 = arith.constant 0 : index
    %83 = tpu.strided_load %arg8[%c1_57, %c0_58, %c0_59] {strides = array<i32: 2, 2, 1>} : memref<18x18x8xf32, #tpu.memory_space<vmem>>, vector<8x8x8xf32>
    %cst_60 = arith.constant 1.250000e-01 : f32
    %84 = vector.broadcast %cst_60 : f32 to vector<8x8x8xf32>
    %85 = arith.mulf %84, %83 : vector<8x8x8xf32>
    %86 = arith.addf %82, %85 : vector<8x8x8xf32>
    %c1_61 = arith.constant 1 : index
    %c1_62 = arith.constant 1 : index
    %c0_63 = arith.constant 0 : index
    %87 = tpu.strided_load %arg8[%c1_61, %c1_62, %c0_63] {strides = array<i32: 2, 2, 1>} : memref<18x18x8xf32, #tpu.memory_space<vmem>>, vector<8x8x8xf32>
    %cst_64 = arith.constant 2.500000e-01 : f32
    %88 = vector.broadcast %cst_64 : f32 to vector<8x8x8xf32>
    %89 = arith.mulf %88, %87 : vector<8x8x8xf32>
    %90 = arith.addf %86, %89 : vector<8x8x8xf32>
    %c1_65 = arith.constant 1 : index
    %c2_66 = arith.constant 2 : index
    %c0_67 = arith.constant 0 : index
    %91 = tpu.strided_load %arg8[%c1_65, %c2_66, %c0_67] {strides = array<i32: 2, 2, 1>} : memref<18x18x8xf32, #tpu.memory_space<vmem>>, vector<8x8x8xf32>
    %cst_68 = arith.constant 1.250000e-01 : f32
    %92 = vector.broadcast %cst_68 : f32 to vector<8x8x8xf32>
    %93 = arith.mulf %92, %91 : vector<8x8x8xf32>
    %94 = arith.addf %90, %93 : vector<8x8x8xf32>
    %c2_69 = arith.constant 2 : index
    %c0_70 = arith.constant 0 : index
    %c0_71 = arith.constant 0 : index
    %95 = tpu.strided_load %arg8[%c2_69, %c0_70, %c0_71] {strides = array<i32: 2, 2, 1>} : memref<18x18x8xf32, #tpu.memory_space<vmem>>, vector<8x8x8xf32>
    %cst_72 = arith.constant 6.250000e-02 : f32
    %96 = vector.broadcast %cst_72 : f32 to vector<8x8x8xf32>
    %97 = arith.mulf %96, %95 : vector<8x8x8xf32>
    %98 = arith.addf %94, %97 : vector<8x8x8xf32>
    %c2_73 = arith.constant 2 : index
    %c1_74 = arith.constant 1 : index
    %c0_75 = arith.constant 0 : index
    %99 = tpu.strided_load %arg8[%c2_73, %c1_74, %c0_75] {strides = array<i32: 2, 2, 1>} : memref<18x18x8xf32, #tpu.memory_space<vmem>>, vector<8x8x8xf32>
    %cst_76 = arith.constant 1.250000e-01 : f32
    %100 = vector.broadcast %cst_76 : f32 to vector<8x8x8xf32>
    %101 = arith.mulf %100, %99 : vector<8x8x8xf32>
    %102 = arith.addf %98, %101 : vector<8x8x8xf32>
    %c2_77 = arith.constant 2 : index
    %c2_78 = arith.constant 2 : index
    %c0_79 = arith.constant 0 : index
    %103 = tpu.strided_load %arg8[%c2_77, %c2_78, %c0_79] {strides = array<i32: 2, 2, 1>} : memref<18x18x8xf32, #tpu.memory_space<vmem>>, vector<8x8x8xf32>
    %cst_80 = arith.constant 6.250000e-02 : f32
    %104 = vector.broadcast %cst_80 : f32 to vector<8x8x8xf32>
    %105 = arith.mulf %104, %103 : vector<8x8x8xf32>
    %106 = arith.addf %102, %105 : vector<8x8x8xf32>
    %107 = vector.shape_cast %106 : vector<8x8x8xf32> to vector<64x8xf32>
    %108 = arith.truncf %107 : vector<64x8xf32> to vector<64x8xbf16>
    %109 = vector.extract_strided_slice %3 {offsets = [1, 1, 0], sizes = [16, 16, 8], strides = [1, 1, 1]} : vector<19x32x8xbf16> to vector<16x16x8xbf16>
    %110 = vector.extract_strided_slice %109 {offsets = [1, 0, 0], sizes = [1, 16, 8], strides = [1, 1, 1]} : vector<16x16x8xbf16> to vector<1x16x8xbf16>
    %111 = vector.extract_strided_slice %109 {offsets = [14, 0, 0], sizes = [1, 16, 8], strides = [1, 1, 1]} : vector<16x16x8xbf16> to vector<1x16x8xbf16>
    %112 = tpu.concatenate %110, %109, %111 in 0 : vector<1x16x8xbf16>, vector<16x16x8xbf16>, vector<1x16x8xbf16> -> vector<18x16x8xbf16>
    %113 = arith.extf %112 : vector<18x16x8xbf16> to vector<18x16x8xf32>
    %c0_81 = arith.constant 0 : index
    %c1_82 = arith.constant 1 : index
    %c0_83 = arith.constant 0 : index
    %114 = vector.load %arg8[%c0_81, %c1_82, %c0_83] : memref<18x18x8xf32, #tpu.memory_space<vmem>>, vector<18x16x8xf32>
    tpu.vector_store %arg8[%c0_81, %c1_82, %c0_83], %113 {strides = array<i32>} : memref<18x18x8xf32, #tpu.memory_space<vmem>>, vector<18x16x8xf32>,
    %115 = vector.extract_strided_slice %112 {offsets = [0, 1, 0], sizes = [18, 1, 8], strides = [1, 1, 1]} : vector<18x16x8xbf16> to vector<18x1x8xbf16>
    %116 = arith.extf %115 : vector<18x1x8xbf16> to vector<18x1x8xf32>
    %c0_84 = arith.constant 0 : index
    %c0_85 = arith.constant 0 : index
    %c0_86 = arith.constant 0 : index
    %117 = vector.load %arg8[%c0_84, %c0_85, %c0_86] : memref<18x18x8xf32, #tpu.memory_space<vmem>>, vector<18x1x8xf32>
    tpu.vector_store %arg8[%c0_84, %c0_85, %c0_86], %116 {strides = array<i32>} : memref<18x18x8xf32, #tpu.memory_space<vmem>>, vector<18x1x8xf32>,
    %118 = vector.extract_strided_slice %112 {offsets = [0, 14, 0], sizes = [18, 1, 8], strides = [1, 1, 1]} : vector<18x16x8xbf16> to vector<18x1x8xbf16>
    %119 = arith.extf %118 : vector<18x1x8xbf16> to vector<18x1x8xf32>
    %c0_87 = arith.constant 0 : index
    %c17_88 = arith.constant 17 : index
    %c0_89 = arith.constant 0 : index
    %120 = vector.load %arg8[%c0_87, %c17_88, %c0_89] : memref<18x18x8xf32, #tpu.memory_space<vmem>>, vector<18x1x8xf32>
    tpu.vector_store %arg8[%c0_87, %c17_88, %c0_89], %119 {strides = array<i32>} : memref<18x18x8xf32, #tpu.memory_space<vmem>>, vector<18x1x8xf32>,
    %c0_90 = arith.constant 0 : index
    %c0_91 = arith.constant 0 : index
    %c0_92 = arith.constant 0 : index
    %121 = tpu.strided_load %arg8[%c0_90, %c0_91, %c0_92] {strides = array<i32: 2, 2, 1>} : memref<18x18x8xf32, #tpu.memory_space<vmem>>, vector<8x8x8xf32>
    %cst_93 = arith.constant 6.250000e-02 : f32
    %122 = vector.broadcast %cst_93 : f32 to vector<8x8x8xf32>
    %123 = arith.mulf %122, %121 : vector<8x8x8xf32>
    %c0_94 = arith.constant 0 : index
    %c1_95 = arith.constant 1 : index
    %c0_96 = arith.constant 0 : index
    %124 = tpu.strided_load %arg8[%c0_94, %c1_95, %c0_96] {strides = array<i32: 2, 2, 1>} : memref<18x18x8xf32, #tpu.memory_space<vmem>>, vector<8x8x8xf32>
    %cst_97 = arith.constant 1.250000e-01 : f32
    %125 = vector.broadcast %cst_97 : f32 to vector<8x8x8xf32>
    %126 = arith.mulf %125, %124 : vector<8x8x8xf32>
    %127 = arith.addf %123, %126 : vector<8x8x8xf32>
    %c0_98 = arith.constant 0 : index
    %c2_99 = arith.constant 2 : index
    %c0_100 = arith.constant 0 : index
    %128 = tpu.strided_load %arg8[%c0_98, %c2_99, %c0_100] {strides = array<i32: 2, 2, 1>} : memref<18x18x8xf32, #tpu.memory_space<vmem>>, vector<8x8x8xf32>
    %cst_101 = arith.constant 6.250000e-02 : f32
    %129 = vector.broadcast %cst_101 : f32 to vector<8x8x8xf32>
    %130 = arith.mulf %129, %128 : vector<8x8x8xf32>
    %131 = arith.addf %127, %130 : vector<8x8x8xf32>
    %c1_102 = arith.constant 1 : index
    %c0_103 = arith.constant 0 : index
    %c0_104 = arith.constant 0 : index
    %132 = tpu.strided_load %arg8[%c1_102, %c0_103, %c0_104] {strides = array<i32: 2, 2, 1>} : memref<18x18x8xf32, #tpu.memory_space<vmem>>, vector<8x8x8xf32>
    %cst_105 = arith.constant 1.250000e-01 : f32
    %133 = vector.broadcast %cst_105 : f32 to vector<8x8x8xf32>
    %134 = arith.mulf %133, %132 : vector<8x8x8xf32>
    %135 = arith.addf %131, %134 : vector<8x8x8xf32>
    %c1_106 = arith.constant 1 : index
    %c1_107 = arith.constant 1 : index
    %c0_108 = arith.constant 0 : index
    %136 = tpu.strided_load %arg8[%c1_106, %c1_107, %c0_108] {strides = array<i32: 2, 2, 1>} : memref<18x18x8xf32, #tpu.memory_space<vmem>>, vector<8x8x8xf32>
    %cst_109 = arith.constant 2.500000e-01 : f32
    %137 = vector.broadcast %cst_109 : f32 to vector<8x8x8xf32>
    %138 = arith.mulf %137, %136 : vector<8x8x8xf32>
    %139 = arith.addf %135, %138 : vector<8x8x8xf32>
    %c1_110 = arith.constant 1 : index
    %c2_111 = arith.constant 2 : index
    %c0_112 = arith.constant 0 : index
    %140 = tpu.strided_load %arg8[%c1_110, %c2_111, %c0_112] {strides = array<i32: 2, 2, 1>} : memref<18x18x8xf32, #tpu.memory_space<vmem>>, vector<8x8x8xf32>
    %cst_113 = arith.constant 1.250000e-01 : f32
    %141 = vector.broadcast %cst_113 : f32 to vector<8x8x8xf32>
    %142 = arith.mulf %141, %140 : vector<8x8x8xf32>
    %143 = arith.addf %139, %142 : vector<8x8x8xf32>
    %c2_114 = arith.constant 2 : index
    %c0_115 = arith.constant 0 : index
    %c0_116 = arith.constant 0 : index
    %144 = tpu.strided_load %arg8[%c2_114, %c0_115, %c0_116] {strides = array<i32: 2, 2, 1>} : memref<18x18x8xf32, #tpu.memory_space<vmem>>, vector<8x8x8xf32>
    %cst_117 = arith.constant 6.250000e-02 : f32
    %145 = vector.broadcast %cst_117 : f32 to vector<8x8x8xf32>
    %146 = arith.mulf %145, %144 : vector<8x8x8xf32>
    %147 = arith.addf %143, %146 : vector<8x8x8xf32>
    %c2_118 = arith.constant 2 : index
    %c1_119 = arith.constant 1 : index
    %c0_120 = arith.constant 0 : index
    %148 = tpu.strided_load %arg8[%c2_118, %c1_119, %c0_120] {strides = array<i32: 2, 2, 1>} : memref<18x18x8xf32, #tpu.memory_space<vmem>>, vector<8x8x8xf32>
    %cst_121 = arith.constant 1.250000e-01 : f32
    %149 = vector.broadcast %cst_121 : f32 to vector<8x8x8xf32>
    %150 = arith.mulf %149, %148 : vector<8x8x8xf32>
    %151 = arith.addf %147, %150 : vector<8x8x8xf32>
    %c2_122 = arith.constant 2 : index
    %c2_123 = arith.constant 2 : index
    %c0_124 = arith.constant 0 : index
    %152 = tpu.strided_load %arg8[%c2_122, %c2_123, %c0_124] {strides = array<i32: 2, 2, 1>} : memref<18x18x8xf32, #tpu.memory_space<vmem>>, vector<8x8x8xf32>
    %cst_125 = arith.constant 6.250000e-02 : f32
    %153 = vector.broadcast %cst_125 : f32 to vector<8x8x8xf32>
    %154 = arith.mulf %153, %152 : vector<8x8x8xf32>
    %155 = arith.addf %151, %154 : vector<8x8x8xf32>
    %156 = vector.shape_cast %155 : vector<8x8x8xf32> to vector<64x8xf32>
    %157 = arith.truncf %156 : vector<64x8xf32> to vector<64x8xbf16>
    %c0_126 = arith.constant 0 : index
    %c0_127 = arith.constant 0 : index
    %158 = vector.load %arg5[%c0_126, %c0_127] : memref<8x16xbf16, #tpu.memory_space<vmem>>, vector<8x16xbf16>
    %cst_128 = arith.constant dense<0.000000e+00> : vector<64x16xf32>
    %159 = tpu.matmul %108, %158, %cst_128 {dimension_numbers = #tpu.dot_dimension_numbers<[1], [0], [0], [1], [0, 0, 1, 1], [], []>} : vector<64x8xbf16>, vector<8x16xbf16>, vector<64x16xf32> -> vector<64x16xf32>
    %c0_129 = arith.constant 0 : index
    %c0_130 = arith.constant 0 : index
    %160 = vector.load %arg6[%c0_129, %c0_130] : memref<8x16xbf16, #tpu.memory_space<vmem>>, vector<8x16xbf16>
    %cst_131 = arith.constant dense<0.000000e+00> : vector<64x16xf32>
    %161 = tpu.matmul %157, %160, %cst_131 {dimension_numbers = #tpu.dot_dimension_numbers<[1], [0], [0], [1], [0, 0, 1, 1], [], []>} : vector<64x8xbf16>, vector<8x16xbf16>, vector<64x16xf32> -> vector<64x16xf32>
    %162 = arith.addf %159, %161 : vector<64x16xf32>
    %163 = vector.shape_cast %162 : vector<64x16xf32> to vector<8x8x16xf32>
    %c0_132 = arith.constant 0 : index
    %c0_133 = arith.constant 0 : index
    %c0_134 = arith.constant 0 : index
    %c0_135 = arith.constant 0 : index
    %164 = vector.load %arg7[%c0_132, %c0_133, %c0_134, %c0_135] : memref<1x8x8x16xf32, #tpu.memory_space<vmem>>, vector<1x8x8x16xf32>
    %165 = vector.shape_cast %164 : vector<1x8x8x16xf32> to vector<8x8x16xf32>
    %166 = vector.shape_cast %163 : vector<8x8x16xf32> to vector<1x8x8x16xf32>
    tpu.vector_store %arg7[%c0_132, %c0_133, %c0_134, %c0_135], %166 {strides = array<i32>} : memref<1x8x8x16xf32, #tpu.memory_space<vmem>>, vector<1x8x8x16xf32>,
    return
  }
  func.func @transform_0(%arg0: i32) -> i32 {
    %c0_i32 = arith.constant 0 : i32
    %c0_i32_0 = arith.constant 0 : i32
    return %c0_i32 : i32
  }
  func.func @transform_1(%arg0: i32) -> (i32, i32, i32, i32) {
    %c0_i32 = arith.constant 0 : i32
    %c0_i32_0 = arith.constant 0 : i32
    %c0_i32_1 = arith.constant 0 : i32
    %c0_i32_2 = arith.constant 0 : i32
    return %arg0, %c0_i32, %c0_i32_0, %c0_i32_1 : i32, i32, i32, i32
  }
  func.func @transform_2(%arg0: i32) -> (i32, i32) {
    %c0_i32 = arith.constant 0 : i32
    %c0_i32_0 = arith.constant 0 : i32
    %c0_i32_1 = arith.constant 0 : i32
    return %c0_i32, %c0_i32_0 : i32, i32
  }
  func.func @transform_3(%arg0: i32) -> (i32, i32, i32) {
    %c0_i32 = arith.constant 0 : i32
    %c0_i32_0 = arith.constant 0 : i32
    %c0_i32_1 = arith.constant 0 : i32
    %c0_i32_2 = arith.constant 0 : i32
    return %c0_i32, %c0_i32_0, %c0_i32_1 : i32, i32, i32
  }
  func.func @transform_4(%arg0: i32) -> (i32, i32) {
    %c0_i32 = arith.constant 0 : i32
    %c0_i32_0 = arith.constant 0 : i32
    %c0_i32_1 = arith.constant 0 : i32
    return %c0_i32, %c0_i32_0 : i32, i32
  }
  func.func @transform_5(%arg0: i32) -> (i32, i32) {
    %c0_i32 = arith.constant 0 : i32
    %c0_i32_0 = arith.constant 0 : i32
    %c0_i32_1 = arith.constant 0 : i32
    return %c0_i32, %c0_i32_0 : i32, i32
  }
  func.func @transform_6(%arg0: i32) -> (i32, i32, i32, i32) {
    %c0_i32 = arith.constant 0 : i32
    %c0_i32_0 = arith.constant 0 : i32
    %c0_i32_1 = arith.constant 0 : i32
    %c0_i32_2 = arith.constant 0 : i32
    return %arg0, %c0_i32, %c0_i32_0, %c0_i32_1 : i32, i32, i32, i32
  }
}

</mosaic_0001>

<llo_original>
// kernel: residual_downsample_apply.1
$region0: #{residual_downsample_apply.1}
  #allocation0 [shape = 'u32[]', space=smem, size = 0x4, offset = 0x4, fixed_abs, tag = 'smem constant byte address 0x4 - core index']
  #allocation1 [shape = 'u32[144,128]{1,0:T(1,128)}', space=vmem, size = 0x12000, scoped, tag = 'internal scratch']
  #allocation2 [shape = 'f32[18,18,8]{2,1,0:T(8,128)}', space=vmem, size = 0x36000, scoped, tag = 'scratch operand']
  %s0 = inlined_call_operand.vmem [shape: f32[2], index: 0, kind: input, shape index: {}]
  %s1 = inlined_call_operand.vmem [shape: bf16[2,19,32,8], index: 1, kind: input, shape index: {}]
  %s2 = inlined_call_operand.vmem [shape: bf16[8,8], index: 2, kind: input, shape index: {}]
  %s3 = inlined_call_operand.vmem [shape: bf16[9,8,8], index: 3, kind: input, shape index: {}]
  %s4 = inlined_call_operand.vmem [shape: bf16[8,16], index: 4, kind: input, shape index: {}]
  %s5 = inlined_call_operand.vmem [shape: bf16[8,16], index: 5, kind: input, shape index: {}]
  %s6 = inlined_call_operand.hbm [shape: f32[2,8,8,16], index: 6, kind: output, shape index: {}]
  %s7 = sld [smem:[#allocation0]]
  $region61: #{residual_downsample_apply.1} parent=0
    _
  %s9 = ssub.s32 1, %s7
  %s10 = scalar_select 0, %s9, %s7
  $region1: #{residual_downsample_apply.1} parent=0
    #allocation3 [shape = 'u8[512]{0}', space=smem, size = 0x200, scoped, tag = 'input window, operand 0, single buffered']
    #allocation4 [shape = 's32[2]{0}', space=sflag, size = 0x8, scoped, tag = 'scoped memory for residual_downsample_apply.1']
    #allocation5 [shape = 's32[2]{0}', space=sflag, size = 0x8, scoped, tag = 'scoped memory for residual_downsample_apply.1']
    #allocation6 [shape = 'u8[65536]{0}', space=vmem, size = 0x10000, scoped, tag = 'output window, operand 0']
    %11 = vsyncpa [#allocation5], 0
    %12 = vsyncpa [#allocation4], 0
    %s13 = scalar_lea.sflag [#allocation4], 1
    %14 = vsyncpa %s13, 0
    loop: start=0, step=1, limit=4
    $region2: #{residual_downsample_apply.1} parent=1 // loop_pre_header
      _
    $region3: #{residual_downsample_apply.1} parent=1 // loop_header
      %s16 = sphi 0, %s20
      %p17 = scmp.ge.s32.totalorder %s16, 4
      %s24 = sphi 0, %s24
      %s26 = sphi 0, %s24
      %s27 = sphi 0, %s26
      %s41 = sphi 0, %s27
      %s47 = sphi 0, %s49
      %s50 = sphi 0, %s47
      %s51 = sphi 0, %s50
      %s67 = sphi 0, %s51
      %s71 = sphi 0, %s71
      %s73 = sphi 0, %s71
      %s74 = sphi 0, %s73
      %s88 = sphi 0, %s74
      %s92 = sphi 0, %s92
      %s94 = sphi 0, %s92
      %s95 = sphi 0, %s94
      %s109 = sphi 0, %s95
      %s113 = sphi 0, %s113
      %s115 = sphi 0, %s113
      %s116 = sphi 0, %s115
      %s130 = sphi 0, %s116
      %s134 = sphi 0, %s134
      %s136 = sphi 0, %s134
      %s137 = sphi 0, %s136
      %s151 = sphi 0, %s137
      %s157 = sphi 0, %s159
      %s160 = sphi 0, %s157
      %s161 = sphi 0, %s160
      %s177 = sphi 0, %s161
    $region4: #{residual_downsample_apply.1} parent=1 // loop_header_branch
      %19 = sbr.rel (%p17) target = $region8
    $region5: #{residual_downsample_apply.1} parent=1 // loop_body
      %s21 = ssub.s32 %s16, 1
      %s22 = ssub.s32 %s16, 2
      %s23 = sadd.s32 %s16, 1
      %s25 = sadd.s32 %s24, 1
      %p28 = scmp.eq.s32.totalorder %s16, 1
      %p29 = scmp.ne.s32.totalorder %s24, %s26
      %p30 = scmp.eq.s32.totalorder %s16, 0
      %p31 = por %p29, %p30
      %p32 = scmp.ne.s32.totalorder %s24, %s26
      %p33 = scmp.eq.s32.totalorder %s21, 1
      %p34 = por %p32, %p33
      %p35 = scmp.ne.s32.totalorder %s26, %s27
      %p36 = scmp.eq.s32.totalorder %s21, 0
      %p37 = por %p35, %p36
      %p38 = scmp.ne.s32.totalorder %s26, %s27
      %p39 = scmp.eq.s32.totalorder %s22, 1
      %p40 = por %p38, %p39
      %p42 = scmp.ne.s32.totalorder %s27, %s41
      %p43 = scmp.eq.s32.totalorder %s22, 0
      %p44 = por %p42, %p43
      %s45 = ssub.s32 %s16, %s23
      %p46 = scmp.eq.s32.totalorder %s45, 0
      %s48 = sadd.s32 %s47, 1
      %s49 = scalar_select %p46, %s47, %s48
      %p52 = pneg %p46
      %p53 = scmp.eq.s32.totalorder %s16, 1
      %p54 = por %p52, %p53
      %p55 = scmp.ne.s32.totalorder %s47, %s50
      %p56 = scmp.eq.s32.totalorder %s16, 0
      %p57 = por %p55, %p56
      %p58 = scmp.ne.s32.totalorder %s47, %s50
      %p59 = scmp.eq.s32.totalorder %s21, 1
      %p60 = por %p58, %p59
      %p61 = scmp.ne.s32.totalorder %s50, %s51
      %p62 = scmp.eq.s32.totalorder %s21, 0
      %p63 = por %p61, %p62
      %p64 = scmp.ne.s32.totalorder %s50, %s51
      %p65 = scmp.eq.s32.totalorder %s22, 1
      %p66 = por %p64, %p65
      %p68 = scmp.ne.s32.totalorder %s51, %s67
      %p69 = scmp.eq.s32.totalorder %s22, 0
      %p70 = por %p68, %p69
      %s72 = sadd.s32 %s71, 1
      %p75 = scmp.eq.s32.totalorder %s16, 1
      %p76 = scmp.ne.s32.totalorder %s71, %s73
      %p77 = scmp.eq.s32.totalorder %s16, 0
      %p78 = por %p76, %p77
      %p79 = scmp.ne.s32.totalorder %s71, %s73
      %p80 = scmp.eq.s32.totalorder %s21, 1
      %p81 = por %p79, %p80
      %p82 = scmp.ne.s32.totalorder %s73, %s74
      %p83 = scmp.eq.s32.totalorder %s21, 0
      %p84 = por %p82, %p83
      %p85 = scmp.ne.s32.totalorder %s73, %s74
      %p86 = scmp.eq.s32.totalorder %s22, 1
      %p87 = por %p85, %p86
      %p89 = scmp.ne.s32.totalorder %s74, %s88
      %p90 = scmp.eq.s32.totalorder %s22, 0
      %p91 = por %p89, %p90
      %s93 = sadd.s32 %s92, 1
      %p96 = scmp.eq.s32.totalorder %s16, 1
      %p97 = scmp.ne.s32.totalorder %s92, %s94
      %p98 = scmp.eq.s32.totalorder %s16, 0
      %p99 = por %p97, %p98
      %p100 = scmp.ne.s32.totalorder %s92, %s94
      %p101 = scmp.eq.s32.totalorder %s21, 1
      %p102 = por %p100, %p101
      %p103 = scmp.ne.s32.totalorder %s94, %s95
      %p104 = scmp.eq.s32.totalorder %s21, 0
      %p105 = por %p103, %p104
      %p106 = scmp.ne.s32.totalorder %s94, %s95
      %p107 = scmp.eq.s32.totalorder %s22, 1
      %p108 = por %p106, %p107
      %p110 = scmp.ne.s32.totalorder %s95, %s109
      %p111 = scmp.eq.s32.totalorder %s22, 0
      %p112 = por %p110, %p111
      %s114 = sadd.s32 %s113, 1
      %p117 = scmp.eq.s32.totalorder %s16, 1
      %p118 = scmp.ne.s32.totalorder %s113, %s115
      %p119 = scmp.eq.s32.totalorder %s16, 0
      %p120 = por %p118, %p119
      %p121 = scmp.ne.s32.totalorder %s113, %s115
      %p122 = scmp.eq.s32.totalorder %s21, 1
      %p123 = por %p121, %p122
      %p124 = scmp.ne.s32.totalorder %s115, %s116
      %p125 = scmp.eq.s32.totalorder %s21, 0
      %p126 = por %p124, %p125
      %p127 = scmp.ne.s32.totalorder %s115, %s116
      %p128 = scmp.eq.s32.totalorder %s22, 1
      %p129 = por %p127, %p128
      %p131 = scmp.ne.s32.totalorder %s116, %s130
      %p132 = scmp.eq.s32.totalorder %s22, 0
      %p133 = por %p131, %p132
      %s135 = sadd.s32 %s134, 1
      %p138 = scmp.eq.s32.totalorder %s16, 1
      %p139 = scmp.ne.s32.totalorder %s134, %s136
      %p140 = scmp.eq.s32.totalorder %s16, 0
      %p141 = por %p139, %p140
      %p142 = scmp.ne.s32.totalorder %s134, %s136
      %p143 = scmp.eq.s32.totalorder %s21, 1
      %p144 = por %p142, %p143
      %p145 = scmp.ne.s32.totalorder %s136, %s137
      %p146 = scmp.eq.s32.totalorder %s21, 0
      %p147 = por %p145, %p146
      %p148 = scmp.ne.s32.totalorder %s136, %s137
      %p149 = scmp.eq.s32.totalorder %s22, 1
      %p150 = por %p148, %p149
      %p152 = scmp.ne.s32.totalorder %s137, %s151
      %p153 = scmp.eq.s32.totalorder %s22, 0
      %p154 = por %p152, %p153
      %s155 = ssub.s32 %s16, %s23
      %p156 = scmp.eq.s32.totalorder %s155, 0
      %s158 = sadd.s32 %s157, 1
      %s159 = scalar_select %p156, %s157, %s158
      %p162 = pneg %p156
      %p163 = scmp.eq.s32.totalorder %s16, 1
      %p164 = por %p162, %p163
      %p165 = scmp.ne.s32.totalorder %s157, %s160
      %p166 = scmp.eq.s32.totalorder %s16, 0
      %p167 = por %p165, %p166
      %p168 = scmp.ne.s32.totalorder %s157, %s160
      %p169 = scmp.eq.s32.totalorder %s21, 1
      %p170 = por %p168, %p169
      %p171 = scmp.ne.s32.totalorder %s160, %s161
      %p172 = scmp.eq.s32.totalorder %s21, 0
      %p173 = por %p171, %p172
      %p174 = scmp.ne.s32.totalorder %s160, %s161
      %p175 = scmp.eq.s32.totalorder %s22, 1
      %p176 = por %p174, %p175
      %p178 = scmp.ne.s32.totalorder %s161, %s177
      %p179 = scmp.eq.s32.totalorder %s22, 0
      %p180 = por %p178, %p179
      %p181 = scmp.le.s32.totalorder 1, %s16
      %p182 = scmp.lt.s32.totalorder %s16, 3
      %p183 = pnand %p181, %p182
      %p184 = pneg %p183
      // Predicated region
      $region9: #{residual_downsample_apply.1} parent=5 // pred_check
        _
      $region10: #{residual_downsample_apply.1} parent=5 // pred_check_branch
        %186 = sbr.rel (%p183) target = $region12
      $region11: #{residual_downsample_apply.1} parent=5 // pred_region
        %s187 = ssub.s32 %s16, 1
        // Predicated region
        $region13: #{residual_downsample_apply.1} parent=11 // pred_check
          %p188 = pneg %p37
        $region14: #{residual_downsample_apply.1} parent=11 // pred_check_branch
          %190 = sbr.rel (%p188) target = $region16
        $region15: #{residual_downsample_apply.1} parent=11 // pred_region
          %s192 = ssub.s32 16, 16
          %193 = vsyncadd [#allocation5], %s192
          %s195 = sshll.u32 %s0, 4
          %s196 = int_to_ptr.vmem [resolvable:$true] %s195
          %198 = dma.vmem_to_smem %s196, 16, [#allocation3], [#allocation5]
        $region16: #{residual_downsample_apply.1} parent=11 // pred_fallthru
          _
        // Predicated region
        $region17: #{residual_downsample_apply.1} parent=11 // pred_check
          %p199 = pneg %p84
        $region18: #{residual_downsample_apply.1} parent=11 // pred_check_branch
          %201 = sbr.rel (%p199) target = $region20
        $region19: #{residual_downsample_apply.1} parent=11 // pred_region
          _
        $region20: #{residual_downsample_apply.1} parent=11 // pred_fallthru
          _
        // Predicated region
        $region21: #{residual_downsample_apply.1} parent=11 // pred_check
          %p202 = pneg %p105
        $region22: #{residual_downsample_apply.1} parent=11 // pred_check_branch
          %204 = sbr.rel (%p202) target = $region24
        $region23: #{residual_downsample_apply.1} parent=11 // pred_region
          _
        $region24: #{residual_downsample_apply.1} parent=11 // pred_fallthru
          _
        // Predicated region
        $region25: #{residual_downsample_apply.1} parent=11 // pred_check
          %p205 = pneg %p126
        $region26: #{residual_downsample_apply.1} parent=11 // pred_check_branch
          %207 = sbr.rel (%p205) target = $region28
        $region27: #{residual_downsample_apply.1} parent=11 // pred_region
          _
        $region28: #{residual_downsample_apply.1} parent=11 // pred_fallthru
          _
        // Predicated region
        $region29: #{residual_downsample_apply.1} parent=11 // pred_check
          %p208 = pneg %p147
        $region30: #{residual_downsample_apply.1} parent=11 // pred_check_branch
          %210 = sbr.rel (%p208) target = $region32
        $region31: #{residual_downsample_apply.1} parent=11 // pred_region
          _
        $region32: #{residual_downsample_apply.1} parent=11 // pred_fallthru
          _
      $region12: #{residual_downsample_apply.1} parent=5 // pred_fallthru
        _
      %p211 = scmp.lt.s32.totalorder %s16, 2
      // Predicated region
      $region33: #{residual_downsample_apply.1} parent=5 // pred_check
        %p212 = pneg %p211
      $region34: #{residual_downsample_apply.1} parent=5 // pred_check_branch
        %214 = sbr.rel (%p212) target = $region36
      $region35: #{residual_downsample_apply.1} parent=5 // pred_region
        // Predicated region
        $region37: #{residual_downsample_apply.1} parent=35 // pred_check
          %p215 = pneg %p57
        $region38: #{residual_downsample_apply.1} parent=35 // pred_check_branch
          %217 = sbr.rel (%p215) target = $region40
        $region39: #{residual_downsample_apply.1} parent=35 // pred_region
          %p218 = scmp.lt.s32.totalorder %s16, 1
          %s219 = scalar_select %p218, %s16, 1
          %s220 = smul.addr %s219, 76
          %s221 = smul.addr %s220, 4
          %s222 = scalar_lea.vmem %s1, %s221
        $region40: #{residual_downsample_apply.1} parent=35 // pred_fallthru
          _
      $region36: #{residual_downsample_apply.1} parent=5 // pred_fallthru
        _
      %p223 = scmp.le.s32.totalorder 1, %s16
      %p224 = scmp.lt.s32.totalorder %s16, 3
      %p225 = pnand %p223, %p224
      %p226 = pneg %p225
      // Predicated region
      $region41: #{residual_downsample_apply.1} parent=5 // pred_check
        _
      $region42: #{residual_downsample_apply.1} parent=5 // pred_check_branch
        %228 = sbr.rel (%p225) target = $region44
      $region43: #{residual_downsample_apply.1} parent=5 // pred_region
        %s229 = ssub.s32 %s16, 1
        // Predicated region
        $region45: #{residual_downsample_apply.1} parent=43 // pred_check
          %p230 = pneg %p37
        $region46: #{residual_downsample_apply.1} parent=43 // pred_check_branch
          %232 = sbr.rel (%p230) target = $region48
        $region47: #{residual_downsample_apply.1} parent=43 // pred_region
          %233 = dma.done [#allocation5], 16
        $region48: #{residual_downsample_apply.1} parent=43 // pred_fallthru
          _
        %234 = sfence
        %p235 = pneg %p37
        %p236 = pneg %p34
        %p237 = scmp.lt.s32.totalorder %s21, 1
        %s238 = scalar_select %p237, %s21, 1
        %s239 = smul.addr %s238, 76
        %s240 = smul.addr %s239, 4
        %s241 = scalar_lea.vmem %s1, %s240
        %p242 = pneg %p63
        %p243 = pneg %p60
        %p244 = pneg %p84
        %p245 = pneg %p81
        %p246 = pneg %p105
        %p247 = pneg %p102
        %p248 = pneg %p126
        %p249 = pneg %p123
        %p250 = pneg %p147
        %p251 = pneg %p144
        %p252 = pneg %p173
        %p253 = pneg %p170
        %s254 = sand.u32 %s160, 1
        %s255 = scalar_lea.sflag [#allocation4], %s254
        %s256 = sand.u32 %s160, 1
        %s257 = smul.addr %s256, 64
        %s258 = scalar_lea.vmem [#allocation6], %s257
        %p259 = scmp.lt.s32.totalorder %s21, 1
        %s260 = scalar_select %p259, %s21, 1
        %s261 = smul.addr %s260, 76
        %s262 = smul.addr %s261, 4
        %s263 = scalar_lea.vmem %s1, %s262
        %s265 = sld [smem:[#allocation3]]
        %s266 = sld [smem:[#allocation3 + $0x1]]
        %v267 = vld [vmem:[%s263] sm:$0xf]
        %v268 = vld [vmem:[%s263 + $0x4] sm:$0xf]
        %v269 = vld [vmem:[%s263 + $0x8] sm:$0xf]
        %v270 = vld [vmem:[%s263 + $0xc] sm:$0xf]
        %v271 = vld [vmem:[%s263 + $0x10] sm:$0xf]
        %v272 = vld [vmem:[%s263 + $0x14] sm:$0xf]
        %v273 = vld [vmem:[%s263 + $0x18] sm:$0xf]
        %v274 = vld [vmem:[%s263 + $0x1c] sm:$0xf]
        %v275 = vld [vmem:[%s263 + $0x20] sm:$0xf]
        %v276 = vld [vmem:[%s263 + $0x24] sm:$0xf]
        %v277 = vld [vmem:[%s263 + $0x28] sm:$0xf]
        %v278 = vld [vmem:[%s263 + $0x2c] sm:$0xf]
        %v279 = vld [vmem:[%s263 + $0x30] sm:$0xf]
        %v280 = vld [vmem:[%s263 + $0x34] sm:$0xf]
        %v281 = vld [vmem:[%s263 + $0x38] sm:$0xf]
        %v282 = vld [vmem:[%s263 + $0x3c] sm:$0xf]
        %v283 = vld [vmem:[%s263 + $0x40] sm:$0xf]
        %v284 = vld [vmem:[%s263 + $0x44] sm:$0xf]
        %v285 = vld [vmem:[%s263 + $0x48] sm:$0xf]
        %v286 = vld [vmem:[%s263 + $0x4c] sm:$0xf]
        %v287 = vld [vmem:[%s263 + $0x50] sm:$0xf]
        %v288 = vld [vmem:[%s263 + $0x54] sm:$0xf]
        %v289 = vld [vmem:[%s263 + $0x58] sm:$0xf]
        %v290 = vld [vmem:[%s263 + $0x5c] sm:$0xf]
        %v291 = vld [vmem:[%s263 + $0x60] sm:$0xf]
        %v292 = vld [vmem:[%s263 + $0x64] sm:$0xf]
        %v293 = vld [vmem:[%s263 + $0x68] sm:$0xf]
        %v294 = vld [vmem:[%s263 + $0x6c] sm:$0xf]
        %v295 = vld [vmem:[%s263 + $0x70] sm:$0xf]
        %v296 = vld [vmem:[%s263 + $0x74] sm:$0xf]
        %v297 = vld [vmem:[%s263 + $0x78] sm:$0xf]
        %v298 = vld [vmem:[%s263 + $0x7c] sm:$0xf]
        %v299 = vld [vmem:[%s263 + $0x80] sm:$0xf]
        %v300 = vld [vmem:[%s263 + $0x84] sm:$0xf]
        %v301 = vld [vmem:[%s263 + $0x88] sm:$0xf]
        %v302 = vld [vmem:[%s263 + $0x8c] sm:$0xf]
        %v303 = vld [vmem:[%s263 + $0x90] sm:$0xf]
        %v304 = vld [vmem:[%s263 + $0x94] sm:$0xf]
        %v305 = vld [vmem:[%s263 + $0x98] sm:$0xf]
        %v306 = vld [vmem:[%s263 + $0x9c] sm:$0xf]
        %v307 = vld [vmem:[%s263 + $0xa0] sm:$0xf]
        %v308 = vld [vmem:[%s263 + $0xa4] sm:$0xf]
        %v309 = vld [vmem:[%s263 + $0xa8] sm:$0xf]
        %v310 = vld [vmem:[%s263 + $0xac] sm:$0xf]
        %v311 = vld [vmem:[%s263 + $0xb0] sm:$0xf]
        %v312 = vld [vmem:[%s263 + $0xb4] sm:$0xf]
        %v313 = vld [vmem:[%s263 + $0xb8] sm:$0xf]
        %v314 = vld [vmem:[%s263 + $0xbc] sm:$0xf]
        %v315 = vld [vmem:[%s263 + $0xc0] sm:$0xf]
        %v316 = vld [vmem:[%s263 + $0xc4] sm:$0xf]
        %v317 = vld [vmem:[%s263 + $0xc8] sm:$0xf]
        %v318 = vld [vmem:[%s263 + $0xcc] sm:$0xf]
        %v319 = vld [vmem:[%s263 + $0xd0] sm:$0xf]
        %v320 = vld [vmem:[%s263 + $0xd4] sm:$0xf]
        %v321 = vld [vmem:[%s263 + $0xd8] sm:$0xf]
        %v322 = vld [vmem:[%s263 + $0xdc] sm:$0xf]
        %v323 = vld [vmem:[%s263 + $0xe0] sm:$0xf]
        %v324 = vld [vmem:[%s263 + $0xe4] sm:$0xf]
        %v325 = vld [vmem:[%s263 + $0xe8] sm:$0xf]
        %v326 = vld [vmem:[%s263 + $0xec] sm:$0xf]
        %v327 = vld [vmem:[%s263 + $0xf0] sm:$0xf]
        %v328 = vld [vmem:[%s263 + $0xf4] sm:$0xf]
        %v329 = vld [vmem:[%s263 + $0xf8] sm:$0xf]
        %v330 = vld [vmem:[%s263 + $0xfc] sm:$0xf]
        %v331 = vld [vmem:[%s263 + $0x100] sm:$0xf]
        %v332 = vld [vmem:[%s263 + $0x104] sm:$0xf]
        %v333 = vld [vmem:[%s263 + $0x108] sm:$0xf]
        %v334 = vld [vmem:[%s263 + $0x10c] sm:$0xf]
        %v335 = vld [vmem:[%s263 + $0x110] sm:$0xf]
        %v336 = vld [vmem:[%s263 + $0x114] sm:$0xf]
        %v337 = vld [vmem:[%s263 + $0x118] sm:$0xf]
        %v338 = vld [vmem:[%s263 + $0x11c] sm:$0xf]
        %v339 = vld [vmem:[%s263 + $0x120] sm:$0xf]
        %v340 = vld [vmem:[%s263 + $0x124] sm:$0xf]
        %v341 = vld [vmem:[%s263 + $0x128] sm:$0xf]
        %v342 = vld [vmem:[%s263 + $0x12c] sm:$0xf]
        %v343 = vld [vmem:[%s2] sm:$0xf]
        %v420 = vunpack.c.l.b16 %v267
        %v421 = vunpack.c.l.b16 %v268
        %v422 = vunpack.c.l.b16 %v269
        %v423 = vunpack.c.l.b16 %v270
        %v424 = vunpack.c.l.b16 %v271
        %v425 = vunpack.c.l.b16 %v272
        %v426 = vunpack.c.l.b16 %v273
        %v427 = vunpack.c.l.b16 %v274
        %v428 = vunpack.c.l.b16 %v275
        %v429 = vunpack.c.l.b16 %v276
        %v430 = vunpack.c.l.b16 %v277
        %v431 = vunpack.c.l.b16 %v278
        %v432 = vunpack.c.l.b16 %v279
        %v433 = vunpack.c.l.b16 %v280
        %v434 = vunpack.c.l.b16 %v281
        %v435 = vunpack.c.l.b16 %v282
        %v436 = vunpack.c.l.b16 %v283
        %v437 = vunpack.c.l.b16 %v284
        %v438 = vunpack.c.l.b16 %v285
        %v439 = vunpack.c.l.b16 %v286
        %v440 = vunpack.c.l.b16 %v287
        %v441 = vunpack.c.l.b16 %v288
        %v442 = vunpack.c.l.b16 %v289
        %v443 = vunpack.c.l.b16 %v290
        %v444 = vunpack.c.l.b16 %v291
        %v445 = vunpack.c.l.b16 %v292
        %v446 = vunpack.c.l.b16 %v293
        %v447 = vunpack.c.l.b16 %v294
        %v448 = vunpack.c.l.b16 %v295
        %v449 = vunpack.c.l.b16 %v296
        %v450 = vunpack.c.l.b16 %v297
        %v451 = vunpack.c.l.b16 %v298
        %v452 = vunpack.c.l.b16 %v299
        %v453 = vunpack.c.l.b16 %v300
        %v454 = vunpack.c.l.b16 %v301
        %v455 = vunpack.c.l.b16 %v302
        %v456 = vunpack.c.l.b16 %v303
        %v457 = vunpack.c.l.b16 %v304
        %v458 = vunpack.c.l.b16 %v305
        %v459 = vunpack.c.l.b16 %v306
        %v460 = vunpack.c.l.b16 %v307
        %v461 = vunpack.c.l.b16 %v308
        %v462 = vunpack.c.l.b16 %v309
        %v463 = vunpack.c.l.b16 %v310
        %v464 = vunpack.c.l.b16 %v311
        %v465 = vunpack.c.l.b16 %v312
        %v466 = vunpack.c.l.b16 %v313
        %v467 = vunpack.c.l.b16 %v314
        %v468 = vunpack.c.l.b16 %v315
        %v469 = vunpack.c.l.b16 %v316
        %v470 = vunpack.c.l.b16 %v317
        %v471 = vunpack.c.l.b16 %v318
        %v472 = vunpack.c.l.b16 %v319
        %v473 = vunpack.c.l.b16 %v320
        %v474 = vunpack.c.l.b16 %v321
        %v475 = vunpack.c.l.b16 %v322
        %v476 = vunpack.c.l.b16 %v323
        %v477 = vunpack.c.l.b16 %v324
        %v478 = vunpack.c.l.b16 %v325
        %v479 = vunpack.c.l.b16 %v326
        %v480 = vunpack.c.l.b16 %v327
        %v481 = vunpack.c.l.b16 %v328
        %v482 = vunpack.c.l.b16 %v329
        %v483 = vunpack.c.l.b16 %v330
        %v484 = vunpack.c.l.b16 %v331
        %v485 = vunpack.c.l.b16 %v332
        %v486 = vunpack.c.l.b16 %v333
        %v487 = vunpack.c.l.b16 %v334
        %v488 = vunpack.c.l.b16 %v335
        %v489 = vunpack.c.l.b16 %v336
        %v490 = vunpack.c.l.b16 %v337
        %v491 = vunpack.c.l.b16 %v338
        %v492 = vunpack.c.l.b16 %v339
        %v493 = vunpack.c.l.b16 %v340
        %v494 = vunpack.c.l.b16 %v341
        %v495 = vunpack.c.l.b16 %v342
        %v496 = vpack.c.b16 %v421, %v420
        %v497 = vpack.c.b16 %v423, %v422
        %v498 = vpack.c.b16 %v425, %v424
        %v499 = vpack.c.b16 %v427, %v426
        %v500 = vpack.c.b16 %v429, %v428
        %v501 = vpack.c.b16 %v431, %v430
        %v502 = vpack.c.b16 %v433, %v432
        %v503 = vpack.c.b16 %v435, %v434
        %v504 = vpack.c.b16 %v437, %v436
        %v505 = vpack.c.b16 %v439, %v438
        %v506 = vpack.c.b16 %v441, %v440
        %v507 = vpack.c.b16 %v443, %v442
        %v508 = vpack.c.b16 %v445, %v444
        %v509 = vpack.c.b16 %v447, %v446
        %v510 = vpack.c.b16 %v449, %v448
        %v511 = vpack.c.b16 %v451, %v450
        %v512 = vpack.c.b16 %v453, %v452
        %v513 = vpack.c.b16 %v455, %v454
        %v514 = vpack.c.b16 %v457, %v456
        %v515 = vpack.c.b16 %v459, %v458
        %v516 = vpack.c.b16 %v461, %v460
        %v517 = vpack.c.b16 %v463, %v462
        %v518 = vpack.c.b16 %v465, %v464
        %v519 = vpack.c.b16 %v467, %v466
        %v520 = vpack.c.b16 %v469, %v468
        %v521 = vpack.c.b16 %v471, %v470
        %v522 = vpack.c.b16 %v473, %v472
        %v523 = vpack.c.b16 %v475, %v474
        %v524 = vpack.c.b16 %v477, %v476
        %v525 = vpack.c.b16 %v479, %v478
        %v526 = vpack.c.b16 %v481, %v480
        %v527 = vpack.c.b16 %v483, %v482
        %v528 = vpack.c.b16 %v485, %v484
        %v529 = vpack.c.b16 %v487, %v486
        %v530 = vpack.c.b16 %v489, %v488
        %v531 = vpack.c.b16 %v491, %v490
        %v532 = vpack.c.b16 %v493, %v492
        %v533 = vpack.c.b16 %v495, %v494
        %vm534 = vcmask 64512
        %v536 = vsel %vm534, %v496, 0
        %v539 = vsel %vm534, %v497, 0
        %v542 = vsel %vm534, %v498, 0
        %v545 = vsel %vm534, %v499, 0
        %v548 = vsel %vm534, %v500, 0
        %v551 = vsel %vm534, %v501, 0
        %v554 = vsel %vm534, %v502, 0
        %v557 = vsel %vm534, %v503, 0
        %v560 = vsel %vm534, %v504, 0
        %v563 = vsel %vm534, %v505, 0
        %v566 = vsel %vm534, %v506, 0
        %v569 = vsel %vm534, %v507, 0
        %v572 = vsel %vm534, %v508, 0
        %v575 = vsel %vm534, %v509, 0
        %v578 = vsel %vm534, %v510, 0
        %v581 = vsel %vm534, %v511, 0
        %v584 = vsel %vm534, %v512, 0
        %v587 = vsel %vm534, %v513, 0
        %v590 = vsel %vm534, %v514, 0
        %v593 = vsel %vm534, %v515, 0
        %v596 = vsel %vm534, %v516, 0
        %v599 = vsel %vm534, %v517, 0
        %v602 = vsel %vm534, %v518, 0
        %v605 = vsel %vm534, %v519, 0
        %v608 = vsel %vm534, %v520, 0
        %v611 = vsel %vm534, %v521, 0
        %v614 = vsel %vm534, %v522, 0
        %v617 = vsel %vm534, %v523, 0
        %v620 = vsel %vm534, %v524, 0
        %v623 = vsel %vm534, %v525, 0
        %v626 = vsel %vm534, %v526, 0
        %v629 = vsel %vm534, %v527, 0
        %v632 = vsel %vm534, %v528, 0
        %v635 = vsel %vm534, %v529, 0
        %v638 = vsel %vm534, %v530, 0
        %v641 = vsel %vm534, %v531, 0
        %v644 = vsel %vm534, %v532, 0
        %v647 = vsel %vm534, %v533, 0
        %vm649 = vcmask 1043456
        %v651 = vsel %vm649, %v343, 0
        %653 = vmatprep.subr.bf16.mxu0 0
        %654 = vmatpush1.bf16.msra.mxu0 %v651
        %655 = vmatprep.subr.bf16.mxu0 0
        %656 = vmatpush1.bf16.msra.mxu0 0
        %657 = vmatprep.subr.bf16.mxu0 0
        %658 = vmatpush1.bf16.msra.mxu0 0
        %659 = vmatprep.subr.bf16.mxu0 0
        %660 = vmatpush1.bf16.msra.mxu0 0
        %661 = vmatprep.subr.bf16.mxu0 0
        %662 = vmatpush1.bf16.msra.mxu0 0
        %663 = vmatprep.subr.bf16.mxu0 0
        %664 = vmatpush1.bf16.msra.mxu0 0
        %665 = vmatprep.subr.bf16.mxu0 0
        %666 = vmatpush1.bf16.msra.mxu0 0
        %667 = vmatprep.subr.bf16.mxu0 0
        %668 = vmatpush1.bf16.msra.mxu0 0
        %669 = vmatprep.subr.bf16.mxu0 0
        %670 = vmatpush1.bf16.msra.mxu0 0
        %671 = vmatprep.subr.bf16.mxu0 0
        %672 = vmatpush1.bf16.msra.mxu0 0
        %673 = vmatprep.subr.bf16.mxu0 0
        %674 = vmatpush1.bf16.msra.mxu0 0
        %675 = vmatprep.subr.bf16.mxu0 0
        %676 = vmatpush1.bf16.msra.mxu0 0
        %677 = vmatprep.subr.bf16.mxu0 0
        %678 = vmatpush1.bf16.msra.mxu0 0
        %679 = vmatprep.subr.bf16.mxu0 0
        %680 = vmatpush1.bf16.msra.mxu0 0
        %681 = vmatprep.subr.bf16.mxu0 0
        %682 = vmatpush1.bf16.msra.mxu0 0
        %683 = vmatprep.subr.bf16.mxu0 0
        %684 = vmatpush1.bf16.msra.mxu0 0
        %685 = vmatprep.mubr.bf16.mxu0 0
        %686 = vmatmul.mubr.bf16.gmra.mrb[0].mxu0 %v536
        %v687 = vpop.f32.mrb[0].mxu0
        %v688 = vadd.f32 0.0, %v687
        %v689 = vpop.f32.mrb[0].mxu0
        %v690 = vpop.f32.mrb[0].mxu0
        %v691 = vadd.f32 0.0, %v690
        %v692 = vpop.f32.mrb[0].mxu0
        %693 = vmatprep.mubr.bf16.mxu0 0
        %694 = vmatmul.mubr.bf16.gmra.mrb[0].mxu0 %v539
        %v695 = vpop.f32.mrb[0].mxu0
        %v696 = vadd.f32 0.0, %v695
        %v697 = vpop.f32.mrb[0].mxu0
        %v698 = vpop.f32.mrb[0].mxu0
        %v699 = vadd.f32 0.0, %v698
        %v700 = vpop.f32.mrb[0].mxu0
        %701 = vmatprep.mubr.bf16.mxu0 0
        %702 = vmatmul.mubr.bf16.gmra.mrb[0].mxu0 %v542
        %v703 = vpop.f32.mrb[0].mxu0
        %v704 = vadd.f32 0.0, %v703
        %v705 = vpop.f32.mrb[0].mxu0
        %v706 = vpop.f32.mrb[0].mxu0
        %v707 = vadd.f32 0.0, %v706
        %v708 = vpop.f32.mrb[0].mxu0
        %709 = vmatprep.mubr.bf16.mxu0 0
        %710 = vmatmul.mubr.bf16.gmra.mrb[0].mxu0 %v545
        %v711 = vpop.f32.mrb[0].mxu0
        %v712 = vadd.f32 0.0, %v711
        %v713 = vpop.f32.mrb[0].mxu0
        %v714 = vpop.f32.mrb[0].mxu0
        %v715 = vadd.f32 0.0, %v714
        %v716 = vpop.f32.mrb[0].mxu0
        %717 = vmatprep.mubr.bf16.mxu0 0
        %718 = vmatmul.mubr.bf16.gmra.mrb[0].mxu0 %v548
        %v719 = vpop.f32.mrb[0].mxu0
        %v720 = vadd.f32 0.0, %v719
        %v721 = vpop.f32.mrb[0].mxu0
        %v722 = vpop.f32.mrb[0].mxu0
        %v723 = vadd.f32 0.0, %v722
        %v724 = vpop.f32.mrb[0].mxu0
        %725 = vmatprep.mubr.bf16.mxu0 0
        %726 = vmatmul.mubr.bf16.gmra.mrb[0].mxu0 %v551
        %v727 = vpop.f32.mrb[0].mxu0
        %v728 = vadd.f32 0.0, %v727
        %v729 = vpop.f32.mrb[0].mxu0
        %v730 = vpop.f32.mrb[0].mxu0
        %v731 = vadd.f32 0.0, %v730
        %v732 = vpop.f32.mrb[0].mxu0
        %733 = vmatprep.mubr.bf16.mxu0 0
        %734 = vmatmul.mubr.bf16.gmra.mrb[0].mxu0 %v554
        %v735 = vpop.f32.mrb[0].mxu0
        %v736 = vadd.f32 0.0, %v735
        %v737 = vpop.f32.mrb[0].mxu0
        %v738 = vpop.f32.mrb[0].mxu0
        %v739 = vadd.f32 0.0, %v738
        %v740 = vpop.f32.mrb[0].mxu0
        %741 = vmatprep.mubr.bf16.mxu0 0
        %742 = vmatmul.mubr.bf16.gmra.mrb[0].mxu0 %v557
        %v743 = vpop.f32.mrb[0].mxu0
        %v744 = vadd.f32 0.0, %v743
        %v745 = vpop.f32.mrb[0].mxu0
        %v746 = vpop.f32.mrb[0].mxu0
        %v747 = vadd.f32 0.0, %v746
        %v748 = vpop.f32.mrb[0].mxu0
        %749 = vmatprep.mubr.bf16.mxu0 0
        %750 = vmatmul.mubr.bf16.gmra.mrb[0].mxu0 %v560
        %v751 = vpop.f32.mrb[0].mxu0
        %v752 = vadd.f32 0.0, %v751
        %v753 = vpop.f32.mrb[0].mxu0
        %v754 = vpop.f32.mrb[0].mxu0
        %v755 = vadd.f32 0.0, %v754
        %v756 = vpop.f32.mrb[0].mxu0
        %757 = vmatprep.mubr.bf16.mxu0 0
        %758 = vmatmul.mubr.bf16.gmra.mrb[0].mxu0 %v563
        %v759 = vpop.f32.mrb[0].mxu0
        %v760 = vadd.f32 0.0, %v759
        %v761 = vpop.f32.mrb[0].mxu0
        %v762 = vpop.f32.mrb[0].mxu0
        %v763 = vadd.f32 0.0, %v762
        %v764 = vpop.f32.mrb[0].mxu0
        %765 = vmatprep.mubr.bf16.mxu0 0
        %766 = vmatmul.mubr.bf16.gmra.mrb[0].mxu0 %v566
        %v767 = vpop.f32.mrb[0].mxu0
        %v768 = vadd.f32 0.0, %v767
        %v769 = vpop.f32.mrb[0].mxu0
        %v770 = vpop.f32.mrb[0].mxu0
        %v771 = vadd.f32 0.0, %v770
        %v772 = vpop.f32.mrb[0].mxu0
        %773 = vmatprep.mubr.bf16.mxu0 0
        %774 = vmatmul.mubr.bf16.gmra.mrb[0].mxu0 %v569
        %v775 = vpop.f32.mrb[0].mxu0
        %v776 = vadd.f32 0.0, %v775
        %v777 = vpop.f32.mrb[0].mxu0
        %v778 = vpop.f32.mrb[0].mxu0
        %v779 = vadd.f32 0.0, %v778
        %v780 = vpop.f32.mrb[0].mxu0
        %781 = vmatprep.mubr.bf16.mxu0 0
        %782 = vmatmul.mubr.bf16.gmra.mrb[0].mxu0 %v572
        %v783 = vpop.f32.mrb[0].mxu0
        %v784 = vadd.f32 0.0, %v783
        %v785 = vpop.f32.mrb[0].mxu0
        %v786 = vpop.f32.mrb[0].mxu0
        %v787 = vadd.f32 0.0, %v786
        %v788 = vpop.f32.mrb[0].mxu0
        %789 = vmatprep.mubr.bf16.mxu0 0
        %790 = vmatmul.mubr.bf16.gmra.mrb[0].mxu0 %v575
        %v791 = vpop.f32.mrb[0].mxu0
        %v792 = vadd.f32 0.0, %v791
        %v793 = vpop.f32.mrb[0].mxu0
        %v794 = vpop.f32.mrb[0].mxu0
        %v795 = vadd.f32 0.0, %v794
        %v796 = vpop.f32.mrb[0].mxu0
        %797 = vmatprep.mubr.bf16.mxu0 0
        %798 = vmatmul.mubr.bf16.gmra.mrb[0].mxu0 %v578
        %v799 = vpop.f32.mrb[0].mxu0
        %v800 = vadd.f32 0.0, %v799
        %v801 = vpop.f32.mrb[0].mxu0
        %v802 = vpop.f32.mrb[0].mxu0
        %v803 = vadd.f32 0.0, %v802
        %v804 = vpop.f32.mrb[0].mxu0
        %805 = vmatprep.mubr.bf16.mxu0 0
        %806 = vmatmul.mubr.bf16.gmra.mrb[0].mxu0 %v581
        %v807 = vpop.f32.mrb[0].mxu0
        %v808 = vadd.f32 0.0, %v807
        %v809 = vpop.f32.mrb[0].mxu0
        %v810 = vpop.f32.mrb[0].mxu0
        %v811 = vadd.f32 0.0, %v810
        %v812 = vpop.f32.mrb[0].mxu0
        %813 = vmatprep.mubr.bf16.mxu0 0
        %814 = vmatmul.mubr.bf16.gmra.mrb[0].mxu0 %v584
        %v815 = vpop.f32.mrb[0].mxu0
        %v816 = vadd.f32 0.0, %v815
        %v817 = vpop.f32.mrb[0].mxu0
        %v818 = vpop.f32.mrb[0].mxu0
        %v819 = vadd.f32 0.0, %v818
        %v820 = vpop.f32.mrb[0].mxu0
        %821 = vmatprep.mubr.bf16.mxu0 0
        %822 = vmatmul.mubr.bf16.gmra.mrb[0].mxu0 %v587
        %v823 = vpop.f32.mrb[0].mxu0
        %v824 = vadd.f32 0.0, %v823
        %v825 = vpop.f32.mrb[0].mxu0
        %v826 = vpop.f32.mrb[0].mxu0
        %v827 = vadd.f32 0.0, %v826
        %v828 = vpop.f32.mrb[0].mxu0
        %829 = vmatprep.mubr.bf16.mxu0 0
        %830 = vmatmul.mubr.bf16.gmra.mrb[0].mxu0 %v590
        %v831 = vpop.f32.mrb[0].mxu0
        %v832 = vadd.f32 0.0, %v831
        %v833 = vpop.f32.mrb[0].mxu0
        %v834 = vpop.f32.mrb[0].mxu0
        %v835 = vadd.f32 0.0, %v834
        %v836 = vpop.f32.mrb[0].mxu0
        %837 = vmatprep.mubr.bf16.mxu0 0
        %838 = vmatmul.mubr.bf16.gmra.mrb[0].mxu0 %v593
        %v839 = vpop.f32.mrb[0].mxu0
        %v840 = vadd.f32 0.0, %v839
        %v841 = vpop.f32.mrb[0].mxu0
        %v842 = vpop.f32.mrb[0].mxu0
        %v843 = vadd.f32 0.0, %v842
        %v844 = vpop.f32.mrb[0].mxu0
        %845 = vmatprep.mubr.bf16.mxu0 0
        %846 = vmatmul.mubr.bf16.gmra.mrb[0].mxu0 %v596
        %v847 = vpop.f32.mrb[0].mxu0
        %v848 = vadd.f32 0.0, %v847
        %v849 = vpop.f32.mrb[0].mxu0
        %v850 = vpop.f32.mrb[0].mxu0
        %v851 = vadd.f32 0.0, %v850
        %v852 = vpop.f32.mrb[0].mxu0
        %853 = vmatprep.mubr.bf16.mxu0 0
        %854 = vmatmul.mubr.bf16.gmra.mrb[0].mxu0 %v599
        %v855 = vpop.f32.mrb[0].mxu0
        %v856 = vadd.f32 0.0, %v855
        %v857 = vpop.f32.mrb[0].mxu0
        %v858 = vpop.f32.mrb[0].mxu0
        %v859 = vadd.f32 0.0, %v858
        %v860 = vpop.f32.mrb[0].mxu0
        %861 = vmatprep.mubr.bf16.mxu0 0
        %862 = vmatmul.mubr.bf16.gmra.mrb[0].mxu0 %v602
        %v863 = vpop.f32.mrb[0].mxu0
        %v864 = vadd.f32 0.0, %v863
        %v865 = vpop.f32.mrb[0].mxu0
        %v866 = vpop.f32.mrb[0].mxu0
        %v867 = vadd.f32 0.0, %v866
        %v868 = vpop.f32.mrb[0].mxu0
        %869 = vmatprep.mubr.bf16.mxu0 0
        %870 = vmatmul.mubr.bf16.gmra.mrb[0].mxu0 %v605
        %v871 = vpop.f32.mrb[0].mxu0
        %v872 = vadd.f32 0.0, %v871
        %v873 = vpop.f32.mrb[0].mxu0
        %v874 = vpop.f32.mrb[0].mxu0
        %v875 = vadd.f32 0.0, %v874
        %v876 = vpop.f32.mrb[0].mxu0
        %877 = vmatprep.mubr.bf16.mxu0 0
        %878 = vmatmul.mubr.bf16.gmra.mrb[0].mxu0 %v608
        %v879 = vpop.f32.mrb[0].mxu0
        %v880 = vadd.f32 0.0, %v879
        %v881 = vpop.f32.mrb[0].mxu0
        %v882 = vpop.f32.mrb[0].mxu0
        %v883 = vadd.f32 0.0, %v882
        %v884 = vpop.f32.mrb[0].mxu0
        %885 = vmatprep.mubr.bf16.mxu0 0
        %886 = vmatmul.mubr.bf16.gmra.mrb[0].mxu0 %v611
        %v887 = vpop.f32.mrb[0].mxu0
        %v888 = vadd.f32 0.0, %v887
        %v889 = vpop.f32.mrb[0].mxu0
        %v890 = vpop.f32.mrb[0].mxu0
        %v891 = vadd.f32 0.0, %v890
        %v892 = vpop.f32.mrb[0].mxu0
        %893 = vmatprep.mubr.bf16.mxu0 0
        %894 = vmatmul.mubr.bf16.gmra.mrb[0].mxu0 %v614
        %v895 = vpop.f32.mrb[0].mxu0
        %v896 = vadd.f32 0.0, %v895
        %v897 = vpop.f32.mrb[0].mxu0
        %v898 = vpop.f32.mrb[0].mxu0
        %v899 = vadd.f32 0.0, %v898
        %v900 = vpop.f32.mrb[0].mxu0
        %901 = vmatprep.mubr.bf16.mxu0 0
        %902 = vmatmul.mubr.bf16.gmra.mrb[0].mxu0 %v617
        %v903 = vpop.f32.mrb[0].mxu0
        %v904 = vadd.f32 0.0, %v903
        %v905 = vpop.f32.mrb[0].mxu0
        %v906 = vpop.f32.mrb[0].mxu0
        %v907 = vadd.f32 0.0, %v906
        %v908 = vpop.f32.mrb[0].mxu0
        %909 = vmatprep.mubr.bf16.mxu0 0
        %910 = vmatmul.mubr.bf16.gmra.mrb[0].mxu0 %v620
        %v911 = vpop.f32.mrb[0].mxu0
        %v912 = vadd.f32 0.0, %v911
        %v913 = vpop.f32.mrb[0].mxu0
        %v914 = vpop.f32.mrb[0].mxu0
        %v915 = vadd.f32 0.0, %v914
        %v916 = vpop.f32.mrb[0].mxu0
        %917 = vmatprep.mubr.bf16.mxu0 0
        %918 = vmatmul.mubr.bf16.gmra.mrb[0].mxu0 %v623
        %v919 = vpop.f32.mrb[0].mxu0
        %v920 = vadd.f32 0.0, %v919
        %v921 = vpop.f32.mrb[0].mxu0
        %v922 = vpop.f32.mrb[0].mxu0
        %v923 = vadd.f32 0.0, %v922
        %v924 = vpop.f32.mrb[0].mxu0
        %925 = vmatprep.mubr.bf16.mxu0 0
        %926 = vmatmul.mubr.bf16.gmra.mrb[0].mxu0 %v626
        %v927 = vpop.f32.mrb[0].mxu0
        %v928 = vadd.f32 0.0, %v927
        %v929 = vpop.f32.mrb[0].mxu0
        %v930 = vpop.f32.mrb[0].mxu0
        %v931 = vadd.f32 0.0, %v930
        %v932 = vpop.f32.mrb[0].mxu0
        %933 = vmatprep.mubr.bf16.mxu0 0
        %934 = vmatmul.mubr.bf16.gmra.mrb[0].mxu0 %v629
        %v935 = vpop.f32.mrb[0].mxu0
        %v936 = vadd.f32 0.0, %v935
        %v937 = vpop.f32.mrb[0].mxu0
        %v938 = vpop.f32.mrb[0].mxu0
        %v939 = vadd.f32 0.0, %v938
        %v940 = vpop.f32.mrb[0].mxu0
        %941 = vmatprep.mubr.bf16.mxu0 0
        %942 = vmatmul.mubr.bf16.gmra.mrb[0].mxu0 %v632
        %v943 = vpop.f32.mrb[0].mxu0
        %v944 = vadd.f32 0.0, %v943
        %v945 = vpop.f32.mrb[0].mxu0
        %v946 = vpop.f32.mrb[0].mxu0
        %v947 = vadd.f32 0.0, %v946
        %v948 = vpop.f32.mrb[0].mxu0
        %949 = vmatprep.mubr.bf16.mxu0 0
        %950 = vmatmul.mubr.bf16.gmra.mrb[0].mxu0 %v635
        %v951 = vpop.f32.mrb[0].mxu0
        %v952 = vadd.f32 0.0, %v951
        %v953 = vpop.f32.mrb[0].mxu0
        %v954 = vpop.f32.mrb[0].mxu0
        %v955 = vadd.f32 0.0, %v954
        %v956 = vpop.f32.mrb[0].mxu0
        %957 = vmatprep.mubr.bf16.mxu0 0
        %958 = vmatmul.mubr.bf16.gmra.mrb[0].mxu0 %v638
        %v959 = vpop.f32.mrb[0].mxu0
        %v960 = vadd.f32 0.0, %v959
        %v961 = vpop.f32.mrb[0].mxu0
        %v962 = vpop.f32.mrb[0].mxu0
        %v963 = vadd.f32 0.0, %v962
        %v964 = vpop.f32.mrb[0].mxu0
        %965 = vmatprep.mubr.bf16.mxu0 0
        %966 = vmatmul.mubr.bf16.gmra.mrb[0].mxu0 %v641
        %v967 = vpop.f32.mrb[0].mxu0
        %v968 = vadd.f32 0.0, %v967
        %v969 = vpop.f32.mrb[0].mxu0
        %v970 = vpop.f32.mrb[0].mxu0
        %v971 = vadd.f32 0.0, %v970
        %v972 = vpop.f32.mrb[0].mxu0
        %973 = vmatprep.mubr.bf16.mxu0 0
        %974 = vmatmul.mubr.bf16.gmra.mrb[0].mxu0 %v644
        %v975 = vpop.f32.mrb[0].mxu0
        %v976 = vadd.f32 0.0, %v975
        %v977 = vpop.f32.mrb[0].mxu0
        %v978 = vpop.f32.mrb[0].mxu0
        %v979 = vadd.f32 0.0, %v978
        %v980 = vpop.f32.mrb[0].mxu0
        %981 = vmatprep.mubr.bf16.mxu0 0
        %982 = vmatmul.mubr.bf16.gmra.mrb[0].mxu0 %v647
        %v983 = vpop.f32.mrb[0].mxu0
        %v984 = vpop.f32.mrb[0].mxu0
        %v985 = vpop.f32.mrb[0].mxu0
        %v986 = vpop.f32.mrb[0].mxu0
        %987 = vdwg.mxu0
        %vm988 = vcmp.ge.f32.partialorder %v688, 0.0
        %vm989 = vcmp.ge.f32.partialorder %v691, 0.0
        %vm990 = vcmp.ge.f32.partialorder %v696, 0.0
        %vm991 = vcmp.ge.f32.partialorder %v699, 0.0
        %vm992 = vcmp.ge.f32.partialorder %v704, 0.0
        %vm993 = vcmp.ge.f32.partialorder %v707, 0.0
        %vm994 = vcmp.ge.f32.partialorder %v712, 0.0
        %vm995 = vcmp.ge.f32.partialorder %v715, 0.0
        %vm996 = vcmp.ge.f32.partialorder %v720, 0.0
        %vm997 = vcmp.ge.f32.partialorder %v723, 0.0
        %vm998 = vcmp.ge.f32.partialorder %v728, 0.0
        %vm999 = vcmp.ge.f32.partialorder %v731, 0.0
        %vm1000 = vcmp.ge.f32.partialorder %v736, 0.0
        %vm1001 = vcmp.ge.f32.partialorder %v739, 0.0
        %vm1002 = vcmp.ge.f32.partialorder %v744, 0.0
        %vm1003 = vcmp.ge.f32.partialorder %v747, 0.0
        %vm1004 = vcmp.ge.f32.partialorder %v752, 0.0
        %vm1005 = vcmp.ge.f32.partialorder %v755, 0.0
        %vm1006 = vcmp.ge.f32.partialorder %v760, 0.0
        %vm1007 = vcmp.ge.f32.partialorder %v763, 0.0
        %vm1008 = vcmp.ge.f32.partialorder %v768, 0.0
        %vm1009 = vcmp.ge.f32.partialorder %v771, 0.0
        %vm1010 = vcmp.ge.f32.partialorder %v776, 0.0
        %vm1011 = vcmp.ge.f32.partialorder %v779, 0.0
        %vm1012 = vcmp.ge.f32.partialorder %v784, 0.0
        %vm1013 = vcmp.ge.f32.partialorder %v787, 0.0
        %vm1014 = vcmp.ge.f32.partialorder %v792, 0.0
        %vm1015 = vcmp.ge.f32.partialorder %v795, 0.0
        %vm1016 = vcmp.ge.f32.partialorder %v800, 0.0
        %vm1017 = vcmp.ge.f32.partialorder %v803, 0.0
        %vm1018 = vcmp.ge.f32.partialorder %v808, 0.0
        %vm1019 = vcmp.ge.f32.partialorder %v811, 0.0
        %vm1020 = vcmp.ge.f32.partialorder %v816, 0.0
        %vm1021 = vcmp.ge.f32.partialorder %v819, 0.0
        %vm1022 = vcmp.ge.f32.partialorder %v824, 0.0
        %vm1023 = vcmp.ge.f32.partialorder %v827, 0.0
        %vm1024 = vcmp.ge.f32.partialorder %v832, 0.0
        %vm1025 = vcmp.ge.f32.partialorder %v835, 0.0
        %vm1026 = vcmp.ge.f32.partialorder %v840, 0.0
        %vm1027 = vcmp.ge.f32.partialorder %v843, 0.0
        %vm1028 = vcmp.ge.f32.partialorder %v848, 0.0
        %vm1029 = vcmp.ge.f32.partialorder %v851, 0.0
        %vm1030 = vcmp.ge.f32.partialorder %v856, 0.0
        %vm1031 = vcmp.ge.f32.partialorder %v859, 0.0
        %vm1032 = vcmp.ge.f32.partialorder %v864, 0.0
        %vm1033 = vcmp.ge.f32.partialorder %v867, 0.0
        %vm1034 = vcmp.ge.f32.partialorder %v872, 0.0
        %vm1035 = vcmp.ge.f32.partialorder %v875, 0.0
        %vm1036 = vcmp.ge.f32.partialorder %v880, 0.0
        %vm1037 = vcmp.ge.f32.partialorder %v883, 0.0
        %vm1038 = vcmp.ge.f32.partialorder %v888, 0.0
        %vm1039 = vcmp.ge.f32.partialorder %v891, 0.0
        %vm1040 = vcmp.ge.f32.partialorder %v896, 0.0
        %vm1041 = vcmp.ge.f32.partialorder %v899, 0.0
        %vm1042 = vcmp.ge.f32.partialorder %v904, 0.0
        %vm1043 = vcmp.ge.f32.partialorder %v907, 0.0
        %vm1044 = vcmp.ge.f32.partialorder %v912, 0.0
        %vm1045 = vcmp.ge.f32.partialorder %v915, 0.0
        %vm1046 = vcmp.ge.f32.partialorder %v920, 0.0
        %vm1047 = vcmp.ge.f32.partialorder %v923, 0.0
        %vm1048 = vcmp.ge.f32.partialorder %v928, 0.0
        %vm1049 = vcmp.ge.f32.partialorder %v931, 0.0
        %vm1050 = vcmp.ge.f32.partialorder %v936, 0.0
        %vm1051 = vcmp.ge.f32.partialorder %v939, 0.0
        %vm1052 = vcmp.ge.f32.partialorder %v944, 0.0
        %vm1053 = vcmp.ge.f32.partialorder %v947, 0.0
        %vm1054 = vcmp.ge.f32.partialorder %v952, 0.0
        %vm1055 = vcmp.ge.f32.partialorder %v955, 0.0
        %vm1056 = vcmp.ge.f32.partialorder %v960, 0.0
        %vm1057 = vcmp.ge.f32.partialorder %v963, 0.0
        %vm1058 = vcmp.ge.f32.partialorder %v968, 0.0
        %vm1059 = vcmp.ge.f32.partialorder %v971, 0.0
        %vm1060 = vcmp.ge.f32.partialorder %v976, 0.0
        %vm1061 = vcmp.ge.f32.partialorder %v979, 0.0
        %v1062 = vstv %s265
        %v1063 = vmul.f32 %v1062, %v688
        %v1064 = vmul.f32 %v1062, %v691
        %v1065 = vmul.f32 %v1062, %v696
        %v1066 = vmul.f32 %v1062, %v699
        %v1067 = vmul.f32 %v1062, %v704
        %v1068 = vmul.f32 %v1062, %v707
        %v1069 = vmul.f32 %v1062, %v712
        %v1070 = vmul.f32 %v1062, %v715
        %v1071 = vmul.f32 %v1062, %v720
        %v1072 = vmul.f32 %v1062, %v723
        %v1073 = vmul.f32 %v1062, %v728
        %v1074 = vmul.f32 %v1062, %v731
        %v1075 = vmul.f32 %v1062, %v736
        %v1076 = vmul.f32 %v1062, %v739
        %v1077 = vmul.f32 %v1062, %v744
        %v1078 = vmul.f32 %v1062, %v747
        %v1079 = vmul.f32 %v1062, %v752
        %v1080 = vmul.f32 %v1062, %v755
        %v1081 = vmul.f32 %v1062, %v760
        %v1082 = vmul.f32 %v1062, %v763
        %v1083 = vmul.f32 %v1062, %v768
        %v1084 = vmul.f32 %v1062, %v771
        %v1085 = vmul.f32 %v1062, %v776
        %v1086 = vmul.f32 %v1062, %v779
        %v1087 = vmul.f32 %v1062, %v784
        %v1088 = vmul.f32 %v1062, %v787
        %v1089 = vmul.f32 %v1062, %v792
        %v1090 = vmul.f32 %v1062, %v795
        %v1091 = vmul.f32 %v1062, %v800
        %v1092 = vmul.f32 %v1062, %v803
        %v1093 = vmul.f32 %v1062, %v808
        %v1094 = vmul.f32 %v1062, %v811
        %v1095 = vmul.f32 %v1062, %v816
        %v1096 = vmul.f32 %v1062, %v819
        %v1097 = vmul.f32 %v1062, %v824
        %v1098 = vmul.f32 %v1062, %v827
        %v1099 = vmul.f32 %v1062, %v832
        %v1100 = vmul.f32 %v1062, %v835
        %v1101 = vmul.f32 %v1062, %v840
        %v1102 = vmul.f32 %v1062, %v843
        %v1103 = vmul.f32 %v1062, %v848
        %v1104 = vmul.f32 %v1062, %v851
        %v1105 = vmul.f32 %v1062, %v856
        %v1106 = vmul.f32 %v1062, %v859
        %v1107 = vmul.f32 %v1062, %v864
        %v1108 = vmul.f32 %v1062, %v867
        %v1109 = vmul.f32 %v1062, %v872
        %v1110 = vmul.f32 %v1062, %v875
        %v1111 = vmul.f32 %v1062, %v880
        %v1112 = vmul.f32 %v1062, %v883
        %v1113 = vmul.f32 %v1062, %v888
        %v1114 = vmul.f32 %v1062, %v891
        %v1115 = vmul.f32 %v1062, %v896
        %v1116 = vmul.f32 %v1062, %v899
        %v1117 = vmul.f32 %v1062, %v904
        %v1118 = vmul.f32 %v1062, %v907
        %v1119 = vmul.f32 %v1062, %v912
        %v1120 = vmul.f32 %v1062, %v915
        %v1121 = vmul.f32 %v1062, %v920
        %v1122 = vmul.f32 %v1062, %v923
        %v1123 = vmul.f32 %v1062, %v928
        %v1124 = vmul.f32 %v1062, %v931
        %v1125 = vmul.f32 %v1062, %v936
        %v1126 = vmul.f32 %v1062, %v939
        %v1127 = vmul.f32 %v1062, %v944
        %v1128 = vmul.f32 %v1062, %v947
        %v1129 = vmul.f32 %v1062, %v952
        %v1130 = vmul.f32 %v1062, %v955
        %v1131 = vmul.f32 %v1062, %v960
        %v1132 = vmul.f32 %v1062, %v963
        %v1133 = vmul.f32 %v1062, %v968
        %v1134 = vmul.f32 %v1062, %v971
        %v1135 = vmul.f32 %v1062, %v976
        %v1136 = vmul.f32 %v1062, %v979
        %v1137 = vsel %vm988, %v688, %v1063
        %v1138 = vsel %vm989, %v691, %v1064
        %v1139 = vsel %vm990, %v696, %v1065
        %v1140 = vsel %vm991, %v699, %v1066
        %v1141 = vsel %vm992, %v704, %v1067
        %v1142 = vsel %vm993, %v707, %v1068
        %v1143 = vsel %vm994, %v712, %v1069
        %v1144 = vsel %vm995, %v715, %v1070
        %v1145 = vsel %vm996, %v720, %v1071
        %v1146 = vsel %vm997, %v723, %v1072
        %v1147 = vsel %vm998, %v728, %v1073
        %v1148 = vsel %vm999, %v731, %v1074
        %v1149 = vsel %vm1000, %v736, %v1075
        %v1150 = vsel %vm1001, %v739, %v1076
        %v1151 = vsel %vm1002, %v744, %v1077
        %v1152 = vsel %vm1003, %v747, %v1078
        %v1153 = vsel %vm1004, %v752, %v1079
        %v1154 = vsel %vm1005, %v755, %v1080
        %v1155 = vsel %vm1006, %v760, %v1081
        %v1156 = vsel %vm1007, %v763, %v1082
        %v1157 = vsel %vm1008, %v768, %v1083
        %v1158 = vsel %vm1009, %v771, %v1084
        %v1159 = vsel %vm1010, %v776, %v1085
        %v1160 = vsel %vm1011, %v779, %v1086
        %v1161 = vsel %vm1012, %v784, %v1087
        %v1162 = vsel %vm1013, %v787, %v1088
        %v1163 = vsel %vm1014, %v792, %v1089
        %v1164 = vsel %vm1015, %v795, %v1090
        %v1165 = vsel %vm1016, %v800, %v1091
        %v1166 = vsel %vm1017, %v803, %v1092
        %v1167 = vsel %vm1018, %v808, %v1093
        %v1168 = vsel %vm1019, %v811, %v1094
        %v1169 = vsel %vm1020, %v816, %v1095
        %v1170 = vsel %vm1021, %v819, %v1096
        %v1171 = vsel %vm1022, %v824, %v1097
        %v1172 = vsel %vm1023, %v827, %v1098
        %v1173 = vsel %vm1024, %v832, %v1099
        %v1174 = vsel %vm1025, %v835, %v1100
        %v1175 = vsel %vm1026, %v840, %v1101
        %v1176 = vsel %vm1027, %v843, %v1102
        %v1177 = vsel %vm1028, %v848, %v1103
        %v1178 = vsel %vm1029, %v851, %v1104
        %v1179 = vsel %vm1030, %v856, %v1105
        %v1180 = vsel %vm1031, %v859, %v1106
        %v1181 = vsel %vm1032, %v864, %v1107
        %v1182 = vsel %vm1033, %v867, %v1108
        %v1183 = vsel %vm1034, %v872, %v1109
        %v1184 = vsel %vm1035, %v875, %v1110
        %v1185 = vsel %vm1036, %v880, %v1111
        %v1186 = vsel %vm1037, %v883, %v1112
        %v1187 = vsel %vm1038, %v888, %v1113
        %v1188 = vsel %vm1039, %v891, %v1114
        %v1189 = vsel %vm1040, %v896, %v1115
        %v1190 = vsel %vm1041, %v899, %v1116
        %v1191 = vsel %vm1042, %v904, %v1117
        %v1192 = vsel %vm1043, %v907, %v1118
        %v1193 = vsel %vm1044, %v912, %v1119
        %v1194 = vsel %vm1045, %v915, %v1120
        %v1195 = vsel %vm1046, %v920, %v1121
        %v1196 = vsel %vm1047, %v923, %v1122
        %v1197 = vsel %vm1048, %v928, %v1123
        %v1198 = vsel %vm1049, %v931, %v1124
        %v1199 = vsel %vm1050, %v936, %v1125
        %v1200 = vsel %vm1051, %v939, %v1126
        %v1201 = vsel %vm1052, %v944, %v1127
        %v1202 = vsel %vm1053, %v947, %v1128
        %v1203 = vsel %vm1054, %v952, %v1129
        %v1204 = vsel %vm1055, %v955, %v1130
        %v1205 = vsel %vm1056, %v960, %v1131
        %v1206 = vsel %vm1057, %v963, %v1132
        %v1207 = vsel %vm1058, %v968, %v1133
        %v1208 = vsel %vm1059, %v971, %v1134
        %v1209 = vsel %vm1060, %v976, %v1135
        %v1210 = vsel %vm1061, %v979, %v1136
        %v1211 = vpack.c.bf16 %v1138, %v1137
        %v1212 = vpack.c.bf16 %v1140, %v1139
        %v1213 = vpack.c.bf16 %v1142, %v1141
        %v1214 = vpack.c.bf16 %v1144, %v1143
        %v1215 = vpack.c.bf16 %v1146, %v1145
        %v1216 = vpack.c.bf16 %v1148, %v1147
        %v1217 = vpack.c.bf16 %v1150, %v1149
        %v1218 = vpack.c.bf16 %v1152, %v1151
        %v1219 = vpack.c.bf16 %v1154, %v1153
        %v1220 = vpack.c.bf16 %v1156, %v1155
        %v1221 = vpack.c.bf16 %v1158, %v1157
        %v1222 = vpack.c.bf16 %v1160, %v1159
        %v1223 = vpack.c.bf16 %v1162, %v1161
        %v1224 = vpack.c.bf16 %v1164, %v1163
        %v1225 = vpack.c.bf16 %v1166, %v1165
        %v1226 = vpack.c.bf16 %v1168, %v1167
        %v1227 = vpack.c.bf16 %v1170, %v1169
        %v1228 = vpack.c.bf16 %v1172, %v1171
        %v1229 = vpack.c.bf16 %v1174, %v1173
        %v1230 = vpack.c.bf16 %v1176, %v1175
        %v1231 = vpack.c.bf16 %v1178, %v1177
        %v1232 = vpack.c.bf16 %v1180, %v1179
        %v1233 = vpack.c.bf16 %v1182, %v1181
        %v1234 = vpack.c.bf16 %v1184, %v1183
        %v1235 = vpack.c.bf16 %v1186, %v1185
        %v1236 = vpack.c.bf16 %v1188, %v1187
        %v1237 = vpack.c.bf16 %v1190, %v1189
        %v1238 = vpack.c.bf16 %v1192, %v1191
        %v1239 = vpack.c.bf16 %v1194, %v1193
        %v1240 = vpack.c.bf16 %v1196, %v1195
        %v1241 = vpack.c.bf16 %v1198, %v1197
        %v1242 = vpack.c.bf16 %v1200, %v1199
        %v1243 = vpack.c.bf16 %v1202, %v1201
        %v1244 = vpack.c.bf16 %v1204, %v1203
        %v1245 = vpack.c.bf16 %v1206, %v1205
        %v1246 = vpack.c.bf16 %v1208, %v1207
        %v1247 = vpack.c.bf16 %v1210, %v1209
        %v1248 = vld [vmem:[%s3] sm:$0xf]
        %s1249 = scalar_lea.vmem %s3, 4
        %v1250 = vld [vmem:[%s1249] sm:$0xf]
        %vm1251 = vsmask.f32 7424
        %v1253 = vshrl.u32 %v1211, 16
        %v1255 = vshll.u32 %v1211, 16
        %v1257 = vrot.slane %v1255, 1
        %v1258 = vor.u32 %v1253, %v1257
        %v1260 = vshll.u32 %v1212, 16
        %v1262 = vrot.slane %v1260, 1
        %v1263 = vsel %vm1251, %v1258, %v1262
        %v1264 = vshrl.u32 %v1212, 16
        %v1266 = vor.u32 %v1264, %v1262
        %v1268 = vshll.u32 %v1213, 16
        %v1270 = vrot.slane %v1268, 1
        %v1271 = vsel %vm1251, %v1266, %v1270
        %v1272 = vshrl.u32 %v1213, 16
        %v1274 = vor.u32 %v1272, %v1270
        %v1276 = vshll.u32 %v1214, 16
        %v1278 = vrot.slane %v1276, 1
        %v1279 = vsel %vm1251, %v1274, %v1278
        %v1280 = vshrl.u32 %v1214, 16
        %v1282 = vor.u32 %v1280, %v1278
        %v1284 = vshll.u32 %v1215, 16
        %v1286 = vrot.slane %v1284, 1
        %v1287 = vsel %vm1251, %v1282, %v1286
        %v1288 = vshrl.u32 %v1215, 16
        %v1290 = vor.u32 %v1288, %v1286
        %v1292 = vshll.u32 %v1216, 16
        %v1294 = vrot.slane %v1292, 1
        %v1295 = vsel %vm1251, %v1290, %v1294
        %v1296 = vshrl.u32 %v1216, 16
        %v1298 = vor.u32 %v1296, %v1294
        %v1300 = vshll.u32 %v1217, 16
        %v1302 = vrot.slane %v1300, 1
        %v1303 = vsel %vm1251, %v1298, %v1302
        %v1304 = vshrl.u32 %v1217, 16
        %v1306 = vor.u32 %v1304, %v1302
        %v1308 = vshll.u32 %v1218, 16
        %v1310 = vrot.slane %v1308, 1
        %v1311 = vsel %vm1251, %v1306, %v1310
        %v1312 = vshrl.u32 %v1218, 16
        %v1314 = vor.u32 %v1312, %v1310
        %v1316 = vshll.u32 %v1219, 16
        %v1318 = vrot.slane %v1316, 1
        %v1319 = vsel %vm1251, %v1314, %v1318
        %v1320 = vshrl.u32 %v1219, 16
        %v1322 = vor.u32 %v1320, %v1318
        %v1324 = vshll.u32 %v1220, 16
        %v1326 = vrot.slane %v1324, 1
        %v1327 = vsel %vm1251, %v1322, %v1326
        %v1328 = vshrl.u32 %v1220, 16
        %v1330 = vor.u32 %v1328, %v1326
        %v1332 = vshll.u32 %v1221, 16
        %v1334 = vrot.slane %v1332, 1
        %v1335 = vsel %vm1251, %v1330, %v1334
        %v1336 = vshrl.u32 %v1221, 16
        %v1338 = vor.u32 %v1336, %v1334
        %v1340 = vshll.u32 %v1222, 16
        %v1342 = vrot.slane %v1340, 1
        %v1343 = vsel %vm1251, %v1338, %v1342
        %v1344 = vshrl.u32 %v1222, 16
        %v1346 = vor.u32 %v1344, %v1342
        %v1348 = vshll.u32 %v1223, 16
        %v1350 = vrot.slane %v1348, 1
        %v1351 = vsel %vm1251, %v1346, %v1350
        %v1352 = vshrl.u32 %v1223, 16
        %v1354 = vor.u32 %v1352, %v1350
        %v1356 = vshll.u32 %v1224, 16
        %v1358 = vrot.slane %v1356, 1
        %v1359 = vsel %vm1251, %v1354, %v1358
        %v1360 = vshrl.u32 %v1224, 16
        %v1362 = vor.u32 %v1360, %v1358
        %v1364 = vshll.u32 %v1225, 16
        %v1366 = vrot.slane %v1364, 1
        %v1367 = vsel %vm1251, %v1362, %v1366
        %v1368 = vshrl.u32 %v1225, 16
        %v1370 = vor.u32 %v1368, %v1366
        %v1372 = vshll.u32 %v1226, 16
        %v1374 = vrot.slane %v1372, 1
        %v1375 = vsel %vm1251, %v1370, %v1374
        %v1376 = vshrl.u32 %v1226, 16
        %v1378 = vor.u32 %v1376, %v1374
        %v1380 = vshll.u32 %v1227, 16
        %v1382 = vrot.slane %v1380, 1
        %v1383 = vsel %vm1251, %v1378, %v1382
        %v1384 = vshrl.u32 %v1227, 16
        %v1386 = vor.u32 %v1384, %v1382
        %v1388 = vshll.u32 %v1228, 16
        %v1390 = vrot.slane %v1388, 1
        %v1391 = vsel %vm1251, %v1386, %v1390
        %v1392 = vshrl.u32 %v1228, 16
        %v1394 = vor.u32 %v1392, %v1390
        %v1396 = vshll.u32 %v1229, 16
        %v1398 = vrot.slane %v1396, 1
        %v1399 = vsel %vm1251, %v1394, %v1398
        %v1400 = vshrl.u32 %v1229, 16
        %v1402 = vor.u32 %v1400, %v1398
        %v1404 = vshll.u32 %v1230, 16
        %v1406 = vrot.slane %v1404, 1
        %v1407 = vsel %vm1251, %v1402, %v1406
        %v1408 = vshrl.u32 %v1230, 16
        %v1410 = vor.u32 %v1408, %v1406
        %v1412 = vshll.u32 %v1231, 16
        %v1414 = vrot.slane %v1412, 1
        %v1415 = vsel %vm1251, %v1410, %v1414
        %v1416 = vshrl.u32 %v1231, 16
        %v1418 = vor.u32 %v1416, %v1414
        %v1420 = vshll.u32 %v1232, 16
        %v1422 = vrot.slane %v1420, 1
        %v1423 = vsel %vm1251, %v1418, %v1422
        %v1424 = vshrl.u32 %v1232, 16
        %v1426 = vor.u32 %v1424, %v1422
        %v1428 = vshll.u32 %v1233, 16
        %v1430 = vrot.slane %v1428, 1
        %v1431 = vsel %vm1251, %v1426, %v1430
        %v1432 = vshrl.u32 %v1233, 16
        %v1434 = vor.u32 %v1432, %v1430
        %v1436 = vshll.u32 %v1234, 16
        %v1438 = vrot.slane %v1436, 1
        %v1439 = vsel %vm1251, %v1434, %v1438
        %v1440 = vshrl.u32 %v1234, 16
        %v1442 = vor.u32 %v1440, %v1438
        %v1444 = vshll.u32 %v1235, 16
        %v1446 = vrot.slane %v1444, 1
        %v1447 = vsel %vm1251, %v1442, %v1446
        %v1448 = vshrl.u32 %v1235, 16
        %v1450 = vor.u32 %v1448, %v1446
        %v1452 = vshll.u32 %v1236, 16
        %v1454 = vrot.slane %v1452, 1
        %v1455 = vsel %vm1251, %v1450, %v1454
        %v1456 = vshrl.u32 %v1236, 16
        %v1458 = vor.u32 %v1456, %v1454
        %v1460 = vshll.u32 %v1237, 16
        %v1462 = vrot.slane %v1460, 1
        %v1463 = vsel %vm1251, %v1458, %v1462
        %v1464 = vshrl.u32 %v1237, 16
        %v1466 = vor.u32 %v1464, %v1462
        %v1468 = vshll.u32 %v1238, 16
        %v1470 = vrot.slane %v1468, 1
        %v1471 = vsel %vm1251, %v1466, %v1470
        %v1472 = vshrl.u32 %v1238, 16
        %v1474 = vor.u32 %v1472, %v1470
        %v1476 = vshll.u32 %v1239, 16
        %v1478 = vrot.slane %v1476, 1
        %v1479 = vsel %vm1251, %v1474, %v1478
        %v1480 = vshrl.u32 %v1239, 16
        %v1482 = vor.u32 %v1480, %v1478
        %v1484 = vshll.u32 %v1240, 16
        %v1486 = vrot.slane %v1484, 1
        %v1487 = vsel %vm1251, %v1482, %v1486
        %v1488 = vshrl.u32 %v1240, 16
        %v1490 = vor.u32 %v1488, %v1486
        %v1492 = vshll.u32 %v1241, 16
        %v1494 = vrot.slane %v1492, 1
        %v1495 = vsel %vm1251, %v1490, %v1494
        %v1496 = vshrl.u32 %v1241, 16
        %v1498 = vor.u32 %v1496, %v1494
        %v1500 = vshll.u32 %v1242, 16
        %v1502 = vrot.slane %v1500, 1
        %v1503 = vsel %vm1251, %v1498, %v1502
        %v1504 = vshrl.u32 %v1242, 16
        %v1506 = vor.u32 %v1504, %v1502
        %v1508 = vshll.u32 %v1243, 16
        %v1510 = vrot.slane %v1508, 1
        %v1511 = vsel %vm1251, %v1506, %v1510
        %v1513 = vsel %vm534, %v1263, 0
        %v1516 = vsel %vm534, %v1271, 0
        %v1519 = vsel %vm534, %v1279, 0
        %v1522 = vsel %vm534, %v1287, 0
        %v1525 = vsel %vm534, %v1295, 0
        %v1528 = vsel %vm534, %v1303, 0
        %v1531 = vsel %vm534, %v1311, 0
        %v1534 = vsel %vm534, %v1319, 0
        %v1537 = vsel %vm534, %v1327, 0
        %v1540 = vsel %vm534, %v1335, 0
        %v1543 = vsel %vm534, %v1343, 0
        %v1546 = vsel %vm534, %v1351, 0
        %v1549 = vsel %vm534, %v1359, 0
        %v1552 = vsel %vm534, %v1367, 0
        %v1555 = vsel %vm534, %v1375, 0
        %v1558 = vsel %vm534, %v1383, 0
        %v1561 = vsel %vm534, %v1391, 0
        %v1564 = vsel %vm534, %v1399, 0
        %v1567 = vsel %vm534, %v1407, 0
        %v1570 = vsel %vm534, %v1415, 0
        %v1573 = vsel %vm534, %v1423, 0
        %v1576 = vsel %vm534, %v1431, 0
        %v1579 = vsel %vm534, %v1439, 0
        %v1582 = vsel %vm534, %v1447, 0
        %v1585 = vsel %vm534, %v1455, 0
        %v1588 = vsel %vm534, %v1463, 0
        %v1591 = vsel %vm534, %v1471, 0
        %v1594 = vsel %vm534, %v1479, 0
        %v1597 = vsel %vm534, %v1487, 0
        %v1600 = vsel %vm534, %v1495, 0
        %v1603 = vsel %vm534, %v1503, 0
        %v1606 = vsel %vm534, %v1511, 0
        %v1609 = vsel %vm649, %v1250, 0
        %1611 = vmatprep.subr.bf16.mxu0 0
        %1612 = vmatpush1.bf16.msra.mxu0 %v1609
        %1613 = vmatprep.subr.bf16.mxu0 0
        %1614 = vmatpush1.bf16.msra.mxu0 0
        %1615 = vmatprep.subr.bf16.mxu0 0
        %1616 = vmatpush1.bf16.msra.mxu0 0
        %1617 = vmatprep.subr.bf16.mxu0 0
        %1618 = vmatpush1.bf16.msra.mxu0 0
        %1619 = vmatprep.subr.bf16.mxu0 0
        %1620 = vmatpush1.bf16.msra.mxu0 0
        %1621 = vmatprep.subr.bf16.mxu0 0
        %1622 = vmatpush1.bf16.msra.mxu0 0
        %1623 = vmatprep.subr.bf16.mxu0 0
        %1624 = vmatpush1.bf16.msra.mxu0 0
        %1625 = vmatprep.subr.bf16.mxu0 0
        %1626 = vmatpush1.bf16.msra.mxu0 0
        %1627 = vmatprep.subr.bf16.mxu0 0
        %1628 = vmatpush1.bf16.msra.mxu0 0
        %1629 = vmatprep.subr.bf16.mxu0 0
        %1630 = vmatpush1.bf16.msra.mxu0 0
        %1631 = vmatprep.subr.bf16.mxu0 0
        %1632 = vmatpush1.bf16.msra.mxu0 0
        %1633 = vmatprep.subr.bf16.mxu0 0
        %1634 = vmatpush1.bf16.msra.mxu0 0
        %1635 = vmatprep.subr.bf16.mxu0 0
        %1636 = vmatpush1.bf16.msra.mxu0 0
        %1637 = vmatprep.subr.bf16.mxu0 0
        %1638 = vmatpush1.bf16.msra.mxu0 0
        %1639 = vmatprep.subr.bf16.mxu0 0
        %1640 = vmatpush1.bf16.msra.mxu0 0
        %1641 = vmatprep.subr.bf16.mxu0 0
        %1642 = vmatpush1.bf16.msra.mxu0 0
        %1643 = vmatprep.mubr.bf16.mxu0 0
        %1644 = vmatmul.mubr.bf16.gmra.mrb[0].mxu0 %v1513
        %v1645 = vpop.f32.mrb[0].mxu0
        %v1646 = vadd.f32 0.0, %v1645
        %v1647 = vpop.f32.mrb[0].mxu0
        %v1648 = vpop.f32.mrb[0].mxu0
        %v1649 = vadd.f32 0.0, %v1648
        %v1650 = vpop.f32.mrb[0].mxu0
        %1651 = vmatprep.mubr.bf16.mxu0 0
        %1652 = vmatmul.mubr.bf16.gmra.mrb[0].mxu0 %v1516
        %v1653 = vpop.f32.mrb[0].mxu0
        %v1654 = vpop.f32.mrb[0].mxu0
        %v1655 = vpop.f32.mrb[0].mxu0
        %v1656 = vpop.f32.mrb[0].mxu0
        %1657 = vmatprep.mubr.bf16.mxu0 0
        %1658 = vmatmul.mubr.bf16.gmra.mrb[0].mxu0 %v1519
        %v1659 = vpop.f32.mrb[0].mxu0
        %v1660 = vadd.f32 0.0, %v1659
        %v1661 = vpop.f32.mrb[0].mxu0
        %v1662 = vpop.f32.mrb[0].mxu0
        %v1663 = vadd.f32 0.0, %v1662
        %v1664 = vpop.f32.mrb[0].mxu0
        %1665 = vmatprep.mubr.bf16.mxu0 0
        %1666 = vmatmul.mubr.bf16.gmra.mrb[0].mxu0 %v1522
        %v1667 = vpop.f32.mrb[0].mxu0
        %v1668 = vpop.f32.mrb[0].mxu0
        %v1669 = vpop.f32.mrb[0].mxu0
        %v1670 = vpop.f32.mrb[0].mxu0
        %1671 = vmatprep.mubr.bf16.mxu0 0
        %1672 = vmatmul.mubr.bf16.gmra.mrb[0].mxu0 %v1525
        %v1673 = vpop.f32.mrb[0].mxu0
        %v1674 = vadd.f32 0.0, %v1673
        %v1675 = vpop.f32.mrb[0].mxu0
        %v1676 = vpop.f32.mrb[0].mxu0
        %v1677 = vadd.f32 0.0, %v1676
        %v1678 = vpop.f32.mrb[0].mxu0
        %1679 = vmatprep.mubr.bf16.mxu0 0
        %1680 = vmatmul.mubr.bf16.gmra.mrb[0].mxu0 %v1528
        %v1681 = vpop.f32.mrb[0].mxu0
        %v1682 = vpop.f32.mrb[0].mxu0
        %v1683 = vpop.f32.mrb[0].mxu0
        %v1684 = vpop.f32.mrb[0].mxu0
        %1685 = vmatprep.mubr.bf16.mxu0 0
        %1686 = vmatmul.mubr.bf16.gmra.mrb[0].mxu0 %v1531
        %v1687 = vpop.f32.mrb[0].mxu0
        %v1688 = vadd.f32 0.0, %v1687
        %v1689 = vpop.f32.mrb[0].mxu0
        %v1690 = vpop.f32.mrb[0].mxu0
        %v1691 = vadd.f32 0.0, %v1690
        %v1692 = vpop.f32.mrb[0].mxu0
        %1693 = vmatprep.mubr.bf16.mxu0 0
        %1694 = vmatmul.mubr.bf16.gmra.mrb[0].mxu0 %v1534
        %v1695 = vpop.f32.mrb[0].mxu0
        %v1696 = vpop.f32.mrb[0].mxu0
        %v1697 = vpop.f32.mrb[0].mxu0
        %v1698 = vpop.f32.mrb[0].mxu0
        %1699 = vmatprep.mubr.bf16.mxu0 0
        %1700 = vmatmul.mubr.bf16.gmra.mrb[0].mxu0 %v1537
        %v1701 = vpop.f32.mrb[0].mxu0
        %v1702 = vadd.f32 0.0, %v1701
        %v1703 = vpop.f32.mrb[0].mxu0
        %v1704 = vpop.f32.mrb[0].mxu0
        %v1705 = vadd.f32 0.0, %v1704
        %v1706 = vpop.f32.mrb[0].mxu0
        %1707 = vmatprep.mubr.bf16.mxu0 0
        %1708 = vmatmul.mubr.bf16.gmra.mrb[0].mxu0 %v1540
        %v1709 = vpop.f32.mrb[0].mxu0
        %v1710 = vpop.f32.mrb[0].mxu0
        %v1711 = vpop.f32.mrb[0].mxu0
        %v1712 = vpop.f32.mrb[0].mxu0
        %1713 = vmatprep.mubr.bf16.mxu0 0
        %1714 = vmatmul.mubr.bf16.gmra.mrb[0].mxu0 %v1543
        %v1715 = vpop.f32.mrb[0].mxu0
        %v1716 = vadd.f32 0.0, %v1715
        %v1717 = vpop.f32.mrb[0].mxu0
        %v1718 = vpop.f32.mrb[0].mxu0
        %v1719 = vadd.f32 0.0, %v1718
        %v1720 = vpop.f32.mrb[0].mxu0
        %1721 = vmatprep.mubr.bf16.mxu0 0
        %1722 = vmatmul.mubr.bf16.gmra.mrb[0].mxu0 %v1546
        %v1723 = vpop.f32.mrb[0].mxu0
        %v1724 = vpop.f32.mrb[0].mxu0
        %v1725 = vpop.f32.mrb[0].mxu0
        %v1726 = vpop.f32.mrb[0].mxu0
        %1727 = vmatprep.mubr.bf16.mxu0 0
        %1728 = vmatmul.mubr.bf16.gmra.mrb[0].mxu0 %v1549
        %v1729 = vpop.f32.mrb[0].mxu0
        %v1730 = vadd.f32 0.0, %v1729
        %v1731 = vpop.f32.mrb[0].mxu0
        %v1732 = vpop.f32.mrb[0].mxu0
        %v1733 = vadd.f32 0.0, %v1732
        %v1734 = vpop.f32.mrb[0].mxu0
        %1735 = vmatprep.mubr.bf16.mxu0 0
        %1736 = vmatmul.mubr.bf16.gmra.mrb[0].mxu0 %v1552
        %v1737 = vpop.f32.mrb[0].mxu0
        %v1738 = vpop.f32.mrb[0].mxu0
        %v1739 = vpop.f32.mrb[0].mxu0
        %v1740 = vpop.f32.mrb[0].mxu0
        %1741 = vmatprep.mubr.bf16.mxu0 0
        %1742 = vmatmul.mubr.bf16.gmra.mrb[0].mxu0 %v1555
        %v1743 = vpop.f32.mrb[0].mxu0
        %v1744 = vadd.f32 0.0, %v1743
        %v1745 = vpop.f32.mrb[0].mxu0
        %v1746 = vpop.f32.mrb[0].mxu0
        %v1747 = vadd.f32 0.0, %v1746
        %v1748 = vpop.f32.mrb[0].mxu0
        %1749 = vmatprep.mubr.bf16.mxu0 0
        %1750 = vmatmul.mubr.bf16.gmra.mrb[0].mxu0 %v1558
        %v1751 = vpop.f32.mrb[0].mxu0
        %v1752 = vpop.f32.mrb[0].mxu0
        %v1753 = vpop.f32.mrb[0].mxu0
        %v1754 = vpop.f32.mrb[0].mxu0
        %1755 = vmatprep.mubr.bf16.mxu0 0
        %1756 = vmatmul.mubr.bf16.gmra.mrb[0].mxu0 %v1561
        %v1757 = vpop.f32.mrb[0].mxu0
        %v1758 = vadd.f32 0.0, %v1757
        %v1759 = vpop.f32.mrb[0].mxu0
        %v1760 = vpop.f32.mrb[0].mxu0
        %v1761 = vadd.f32 0.0, %v1760
        %v1762 = vpop.f32.mrb[0].mxu0
        %1763 = vmatprep.mubr.bf16.mxu0 0
        %1764 = vmatmul.mubr.bf16.gmra.mrb[0].mxu0 %v1564
        %v1765 = vpop.f32.mrb[0].mxu0
        %v1766 = vpop.f32.mrb[0].mxu0
        %v1767 = vpop.f32.mrb[0].mxu0
        %v1768 = vpop.f32.mrb[0].mxu0
        %1769 = vmatprep.mubr.bf16.mxu0 0
        %1770 = vmatmul.mubr.bf16.gmra.mrb[0].mxu0 %v1567
        %v1771 = vpop.f32.mrb[0].mxu0
        %v1772 = vadd.f32 0.0, %v1771
        %v1773 = vpop.f32.mrb[0].mxu0
        %v1774 = vpop.f32.mrb[0].mxu0
        %v1775 = vadd.f32 0.0, %v1774
        %v1776 = vpop.f32.mrb[0].mxu0
        %1777 = vmatprep.mubr.bf16.mxu0 0
        %1778 = vmatmul.mubr.bf16.gmra.mrb[0].mxu0 %v1570
        %v1779 = vpop.f32.mrb[0].mxu0
        %v1780 = vpop.f32.mrb[0].mxu0
        %v1781 = vpop.f32.mrb[0].mxu0
        %v1782 = vpop.f32.mrb[0].mxu0
        %1783 = vmatprep.mubr.bf16.mxu0 0
        %1784 = vmatmul.mubr.bf16.gmra.mrb[0].mxu0 %v1573
        %v1785 = vpop.f32.mrb[0].mxu0
        %v1786 = vadd.f32 0.0, %v1785
        %v1787 = vpop.f32.mrb[0].mxu0
        %v1788 = vpop.f32.mrb[0].mxu0
        %v1789 = vadd.f32 0.0, %v1788
        %v1790 = vpop.f32.mrb[0].mxu0
        %1791 = vmatprep.mubr.bf16.mxu0 0
        %1792 = vmatmul.mubr.bf16.gmra.mrb[0].mxu0 %v1576
        %v1793 = vpop.f32.mrb[0].mxu0
        %v1794 = vpop.f32.mrb[0].mxu0
        %v1795 = vpop.f32.mrb[0].mxu0
        %v1796 = vpop.f32.mrb[0].mxu0
        %1797 = vmatprep.mubr.bf16.mxu0 0
        %1798 = vmatmul.mubr.bf16.gmra.mrb[0].mxu0 %v1579
        %v1799 = vpop.f32.mrb[0].mxu0
        %v1800 = vadd.f32 0.0, %v1799
        %v1801 = vpop.f32.mrb[0].mxu0
        %v1802 = vpop.f32.mrb[0].mxu0
        %v1803 = vadd.f32 0.0, %v1802
        %v1804 = vpop.f32.mrb[0].mxu0
        %1805 = vmatprep.mubr.bf16.mxu0 0
        %1806 = vmatmul.mubr.bf16.gmra.mrb[0].mxu0 %v1582
        %v1807 = vpop.f32.mrb[0].mxu0
        %v1808 = vpop.f32.mrb[0].mxu0
        %v1809 = vpop.f32.mrb[0].mxu0
        %v1810 = vpop.f32.mrb[0].mxu0
        %1811 = vmatprep.mubr.bf16.mxu0 0
        %1812 = vmatmul.mubr.bf16.gmra.mrb[0].mxu0 %v1585
        %v1813 = vpop.f32.mrb[0].mxu0
        %v1814 = vadd.f32 0.0, %v1813
        %v1815 = vpop.f32.mrb[0].mxu0
        %v1816 = vpop.f32.mrb[0].mxu0
        %v1817 = vadd.f32 0.0, %v1816
        %v1818 = vpop.f32.mrb[0].mxu0
        %1819 = vmatprep.mubr.bf16.mxu0 0
        %1820 = vmatmul.mubr.bf16.gmra.mrb[0].mxu0 %v1588
        %v1821 = vpop.f32.mrb[0].mxu0
        %v1822 = vpop.f32.mrb[0].mxu0
        %v1823 = vpop.f32.mrb[0].mxu0
        %v1824 = vpop.f32.mrb[0].mxu0
        %1825 = vmatprep.mubr.bf16.mxu0 0
        %1826 = vmatmul.mubr.bf16.gmra.mrb[0].mxu0 %v1591
        %v1827 = vpop.f32.mrb[0].mxu0
        %v1828 = vadd.f32 0.0, %v1827
        %v1829 = vpop.f32.mrb[0].mxu0
        %v1830 = vpop.f32.mrb[0].mxu0
        %v1831 = vadd.f32 0.0, %v1830
        %v1832 = vpop.f32.mrb[0].mxu0
        %1833 = vmatprep.mubr.bf16.mxu0 0
        %1834 = vmatmul.mubr.bf16.gmra.mrb[0].mxu0 %v1594
        %v1835 = vpop.f32.mrb[0].mxu0
        %v1836 = vpop.f32.mrb[0].mxu0
        %v1837 = vpop.f32.mrb[0].mxu0
        %v1838 = vpop.f32.mrb[0].mxu0
        %1839 = vmatprep.mubr.bf16.mxu0 0
        %1840 = vmatmul.mubr.bf16.gmra.mrb[0].mxu0 %v1597
        %v1841 = vpop.f32.mrb[0].mxu0
        %v1842 = vadd.f32 0.0, %v1841
        %v1843 = vpop.f32.mrb[0].mxu0
        %v1844 = vpop.f32.mrb[0].mxu0
        %v1845 = vadd.f32 0.0, %v1844
        %v1846 = vpop.f32.mrb[0].mxu0
        %1847 = vmatprep.mubr.bf16.mxu0 0
        %1848 = vmatmul.mubr.bf16.gmra.mrb[0].mxu0 %v1600
        %v1849 = vpop.f32.mrb[0].mxu0
        %v1850 = vpop.f32.mrb[0].mxu0
        %v1851 = vpop.f32.mrb[0].mxu0
        %v1852 = vpop.f32.mrb[0].mxu0
        %1853 = vmatprep.mubr.bf16.mxu0 0
        %1854 = vmatmul.mubr.bf16.gmra.mrb[0].mxu0 %v1603
        %v1855 = vpop.f32.mrb[0].mxu0
        %v1856 = vadd.f32 0.0, %v1855
        %v1857 = vpop.f32.mrb[0].mxu0
        %v1858 = vpop.f32.mrb[0].mxu0
        %v1859 = vadd.f32 0.0, %v1858
        %v1860 = vpop.f32.mrb[0].mxu0
        %1861 = vmatprep.mubr.bf16.mxu0 0
        %1862 = vmatmul.mubr.bf16.gmra.mrb[0].mxu0 %v1606
        %v1863 = vpop.f32.mrb[0].mxu0
        %v1864 = vpop.f32.mrb[0].mxu0
        %v1865 = vpop.f32.mrb[0].mxu0
        %v1866 = vpop.f32.mrb[0].mxu0
        %1867 = vdwg.mxu0
        %v1868 = vsel %vm534, %v1211, 0
        %v1870 = vsel %vm534, %v1212, 0
        %v1872 = vsel %vm534, %v1213, 0
        %v1874 = vsel %vm534, %v1214, 0
        %v1876 = vsel %vm534, %v1215, 0
        %v1878 = vsel %vm534, %v1216, 0
        %v1880 = vsel %vm534, %v1217, 0
        %v1882 = vsel %vm534, %v1218, 0
        %v1884 = vsel %vm534, %v1219, 0
        %v1886 = vsel %vm534, %v1220, 0
        %v1888 = vsel %vm534, %v1221, 0
        %v1890 = vsel %vm534, %v1222, 0
        %v1892 = vsel %vm534, %v1223, 0
        %v1894 = vsel %vm534, %v1224, 0
        %v1896 = vsel %vm534, %v1225, 0
        %v1898 = vsel %vm534, %v1226, 0
        %v1900 = vsel %vm534, %v1227, 0
        %v1902 = vsel %vm534, %v1228, 0
        %v1904 = vsel %vm534, %v1229, 0
        %v1906 = vsel %vm534, %v1230, 0
        %v1908 = vsel %vm534, %v1231, 0
        %v1910 = vsel %vm534, %v1232, 0
        %v1912 = vsel %vm534, %v1233, 0
        %v1914 = vsel %vm534, %v1234, 0
        %v1916 = vsel %vm534, %v1235, 0
        %v1918 = vsel %vm534, %v1236, 0
        %v1920 = vsel %vm534, %v1237, 0
        %v1922 = vsel %vm534, %v1238, 0
        %v1924 = vsel %vm534, %v1239, 0
        %v1926 = vsel %vm534, %v1240, 0
        %v1928 = vsel %vm534, %v1241, 0
        %v1930 = vsel %vm534, %v1242, 0
        %v1933 = vsel %vm649, %v1248, 0
        %1935 = vmatprep.subr.bf16.mxu0 0
        %1936 = vmatpush1.bf16.msra.mxu0 %v1933
        %1937 = vmatprep.subr.bf16.mxu0 0
        %1938 = vmatpush1.bf16.msra.mxu0 0
        %1939 = vmatprep.subr.bf16.mxu0 0
        %1940 = vmatpush1.bf16.msra.mxu0 0
        %1941 = vmatprep.subr.bf16.mxu0 0
        %1942 = vmatpush1.bf16.msra.mxu0 0
        %1943 = vmatprep.subr.bf16.mxu0 0
        %1944 = vmatpush1.bf16.msra.mxu0 0
        %1945 = vmatprep.subr.bf16.mxu0 0
        %1946 = vmatpush1.bf16.msra.mxu0 0
        %1947 = vmatprep.subr.bf16.mxu0 0
        %1948 = vmatpush1.bf16.msra.mxu0 0
        %1949 = vmatprep.subr.bf16.mxu0 0
        %1950 = vmatpush1.bf16.msra.mxu0 0
        %1951 = vmatprep.subr.bf16.mxu0 0
        %1952 = vmatpush1.bf16.msra.mxu0 0
        %1953 = vmatprep.subr.bf16.mxu0 0
        %1954 = vmatpush1.bf16.msra.mxu0 0
        %1955 = vmatprep.subr.bf16.mxu0 0
        %1956 = vmatpush1.bf16.msra.mxu0 0
        %1957 = vmatprep.subr.bf16.mxu0 0
        %1958 = vmatpush1.bf16.msra.mxu0 0
        %1959 = vmatprep.subr.bf16.mxu0 0
        %1960 = vmatpush1.bf16.msra.mxu0 0
        %1961 = vmatprep.subr.bf16.mxu0 0
        %1962 = vmatpush1.bf16.msra.mxu0 0
        %1963 = vmatprep.subr.bf16.mxu0 0
        %1964 = vmatpush1.bf16.msra.mxu0 0
        %1965 = vmatprep.subr.bf16.mxu0 0
        %1966 = vmatpush1.bf16.msra.mxu0 0
        %1967 = vmatprep.mubr.bf16.mxu0 0
        %1968 = vmatmul.mubr.bf16.gmra.mrb[0].mxu0 %v1868
        %v1969 = vpop.f32.mrb[0].mxu0
        %v1970 = vadd.f32 %v1646, %v1969
        %v1971 = vpop.f32.mrb[0].mxu0
        %v1972 = vpop.f32.mrb[0].mxu0
        %v1973 = vadd.f32 %v1649, %v1972
        %v1974 = vpop.f32.mrb[0].mxu0
        %1975 = vmatprep.mubr.bf16.mxu0 0
        %1976 = vmatmul.mubr.bf16.gmra.mrb[0].mxu0 %v1870
        %v1977 = vpop.f32.mrb[0].mxu0
        %v1978 = vpop.f32.mrb[0].mxu0
        %v1979 = vpop.f32.mrb[0].mxu0
        %v1980 = vpop.f32.mrb[0].mxu0
        %1981 = vmatprep.mubr.bf16.mxu0 0
        %1982 = vmatmul.mubr.bf16.gmra.mrb[0].mxu0 %v1872
        %v1983 = vpop.f32.mrb[0].mxu0
        %v1984 = vadd.f32 %v1660, %v1983
        %v1985 = vpop.f32.mrb[0].mxu0
        %v1986 = vpop.f32.mrb[0].mxu0
        %v1987 = vadd.f32 %v1663, %v1986
        %v1988 = vpop.f32.mrb[0].mxu0
        %1989 = vmatprep.mubr.bf16.mxu0 0
        %1990 = vmatmul.mubr.bf16.gmra.mrb[0].mxu0 %v1874
        %v1991 = vpop.f32.mrb[0].mxu0
        %v1992 = vpop.f32.mrb[0].mxu0
        %v1993 = vpop.f32.mrb[0].mxu0
        %v1994 = vpop.f32.mrb[0].mxu0
        %1995 = vmatprep.mubr.bf16.mxu0 0
        %1996 = vmatmul.mubr.bf16.gmra.mrb[0].mxu0 %v1876
        %v1997 = vpop.f32.mrb[0].mxu0
        %v1998 = vadd.f32 %v1674, %v1997
        %v1999 = vpop.f32.mrb[0].mxu0
        %v2000 = vpop.f32.mrb[0].mxu0
        %v2001 = vadd.f32 %v1677, %v2000
        %v2002 = vpop.f32.mrb[0].mxu0
        %2003 = vmatprep.mubr.bf16.mxu0 0
        %2004 = vmatmul.mubr.bf16.gmra.mrb[0].mxu0 %v1878
        %v2005 = vpop.f32.mrb[0].mxu0
        %v2006 = vpop.f32.mrb[0].mxu0
        %v2007 = vpop.f32.mrb[0].mxu0
        %v2008 = vpop.f32.mrb[0].mxu0
        %2009 = vmatprep.mubr.bf16.mxu0 0
        %2010 = vmatmul.mubr.bf16.gmra.mrb[0].mxu0 %v1880
        %v2011 = vpop.f32.mrb[0].mxu0
        %v2012 = vadd.f32 %v1688, %v2011
        %v2013 = vpop.f32.mrb[0].mxu0
        %v2014 = vpop.f32.mrb[0].mxu0
        %v2015 = vadd.f32 %v1691, %v2014
        %v2016 = vpop.f32.mrb[0].mxu0
        %2017 = vmatprep.mubr.bf16.mxu0 0
        %2018 = vmatmul.mubr.bf16.gmra.mrb[0].mxu0 %v1882
        %v2019 = vpop.f32.mrb[0].mxu0
        %v2020 = vpop.f32.mrb[0].mxu0
        %v2021 = vpop.f32.mrb[0].mxu0
        %v2022 = vpop.f32.mrb[0].mxu0
        %2023 = vmatprep.mubr.bf16.mxu0 0
        %2024 = vmatmul.mubr.bf16.gmra.mrb[0].mxu0 %v1884
        %v2025 = vpop.f32.mrb[0].mxu0
        %v2026 = vadd.f32 %v1702, %v2025
        %v2027 = vpop.f32.mrb[0].mxu0
        %v2028 = vpop.f32.mrb[0].mxu0
        %v2029 = vadd.f32 %v1705, %v2028
        %v2030 = vpop.f32.mrb[0].mxu0
        %2031 = vmatprep.mubr.bf16.mxu0 0
        %2032 = vmatmul.mubr.bf16.gmra.mrb[0].mxu0 %v1886
        %v2033 = vpop.f32.mrb[0].mxu0
        %v2034 = vpop.f32.mrb[0].mxu0
        %v2035 = vpop.f32.mrb[0].mxu0
        %v2036 = vpop.f32.mrb[0].mxu0
        %2037 = vmatprep.mubr.bf16.mxu0 0
        %2038 = vmatmul.mubr.bf16.gmra.mrb[0].mxu0 %v1888
        %v2039 = vpop.f32.mrb[0].mxu0
        %v2040 = vadd.f32 %v1716, %v2039
        %v2041 = vpop.f32.mrb[0].mxu0
        %v2042 = vpop.f32.mrb[0].mxu0
        %v2043 = vadd.f32 %v1719, %v2042
        %v2044 = vpop.f32.mrb[0].mxu0
        %2045 = vmatprep.mubr.bf16.mxu0 0
        %2046 = vmatmul.mubr.bf16.gmra.mrb[0].mxu0 %v1890
        %v2047 = vpop.f32.mrb[0].mxu0
        %v2048 = vpop.f32.mrb[0].mxu0
        %v2049 = vpop.f32.mrb[0].mxu0
        %v2050 = vpop.f32.mrb[0].mxu0
        %2051 = vmatprep.mubr.bf16.mxu0 0
        %2052 = vmatmul.mubr.bf16.gmra.mrb[0].mxu0 %v1892
        %v2053 = vpop.f32.mrb[0].mxu0
        %v2054 = vadd.f32 %v1730, %v2053
        %v2055 = vpop.f32.mrb[0].mxu0
        %v2056 = vpop.f32.mrb[0].mxu0
        %v2057 = vadd.f32 %v1733, %v2056
        %v2058 = vpop.f32.mrb[0].mxu0
        %2059 = vmatprep.mubr.bf16.mxu0 0
        %2060 = vmatmul.mubr.bf16.gmra.mrb[0].mxu0 %v1894
        %v2061 = vpop.f32.mrb[0].mxu0
        %v2062 = vpop.f32.mrb[0].mxu0
        %v2063 = vpop.f32.mrb[0].mxu0
        %v2064 = vpop.f32.mrb[0].mxu0
        %2065 = vmatprep.mubr.bf16.mxu0 0
        %2066 = vmatmul.mubr.bf16.gmra.mrb[0].mxu0 %v1896
        %v2067 = vpop.f32.mrb[0].mxu0
        %v2068 = vadd.f32 %v1744, %v2067
        %v2069 = vpop.f32.mrb[0].mxu0
        %v2070 = vpop.f32.mrb[0].mxu0
        %v2071 = vadd.f32 %v1747, %v2070
        %v2072 = vpop.f32.mrb[0].mxu0
        %2073 = vmatprep.mubr.bf16.mxu0 0
        %2074 = vmatmul.mubr.bf16.gmra.mrb[0].mxu0 %v1898
        %v2075 = vpop.f32.mrb[0].mxu0
        %v2076 = vpop.f32.mrb[0].mxu0
        %v2077 = vpop.f32.mrb[0].mxu0
        %v2078 = vpop.f32.mrb[0].mxu0
        %2079 = vmatprep.mubr.bf16.mxu0 0
        %2080 = vmatmul.mubr.bf16.gmra.mrb[0].mxu0 %v1900
        %v2081 = vpop.f32.mrb[0].mxu0
        %v2082 = vadd.f32 %v1758, %v2081
        %v2083 = vpop.f32.mrb[0].mxu0
        %v2084 = vpop.f32.mrb[0].mxu0
        %v2085 = vadd.f32 %v1761, %v2084
        %v2086 = vpop.f32.mrb[0].mxu0
        %2087 = vmatprep.mubr.bf16.mxu0 0
        %2088 = vmatmul.mubr.bf16.gmra.mrb[0].mxu0 %v1902
        %v2089 = vpop.f32.mrb[0].mxu0
        %v2090 = vpop.f32.mrb[0].mxu0
        %v2091 = vpop.f32.mrb[0].mxu0
        %v2092 = vpop.f32.mrb[0].mxu0
        %2093 = vmatprep.mubr.bf16.mxu0 0
        %2094 = vmatmul.mubr.bf16.gmra.mrb[0].mxu0 %v1904
        %v2095 = vpop.f32.mrb[0].mxu0
        %v2096 = vadd.f32 %v1772, %v2095
        %v2097 = vpop.f32.mrb[0].mxu0
        %v2098 = vpop.f32.mrb[0].mxu0
        %v2099 = vadd.f32 %v1775, %v2098
        %v2100 = vpop.f32.mrb[0].mxu0
        %2101 = vmatprep.mubr.bf16.mxu0 0
        %2102 = vmatmul.mubr.bf16.gmra.mrb[0].mxu0 %v1906
        %v2103 = vpop.f32.mrb[0].mxu0
        %v2104 = vpop.f32.mrb[0].mxu0
        %v2105 = vpop.f32.mrb[0].mxu0
        %v2106 = vpop.f32.mrb[0].mxu0
        %2107 = vmatprep.mubr.bf16.mxu0 0
        %2108 = vmatmul.mubr.bf16.gmra.mrb[0].mxu0 %v1908
        %v2109 = vpop.f32.mrb[0].mxu0
        %v2110 = vadd.f32 %v1786, %v2109
        %v2111 = vpop.f32.mrb[0].mxu0
        %v2112 = vpop.f32.mrb[0].mxu0
        %v2113 = vadd.f32 %v1789, %v2112
        %v2114 = vpop.f32.mrb[0].mxu0
        %2115 = vmatprep.mubr.bf16.mxu0 0
        %2116 = vmatmul.mubr.bf16.gmra.mrb[0].mxu0 %v1910
        %v2117 = vpop.f32.mrb[0].mxu0
        %v2118 = vpop.f32.mrb[0].mxu0
        %v2119 = vpop.f32.mrb[0].mxu0
        %v2120 = vpop.f32.mrb[0].mxu0
        %2121 = vmatprep.mubr.bf16.mxu0 0
        %2122 = vmatmul.mubr.bf16.gmra.mrb[0].mxu0 %v1912
        %v2123 = vpop.f32.mrb[0].mxu0
        %v2124 = vadd.f32 %v1800, %v2123
        %v2125 = vpop.f32.mrb[0].mxu0
        %v2126 = vpop.f32.mrb[0].mxu0
        %v2127 = vadd.f32 %v1803, %v2126
        %v2128 = vpop.f32.mrb[0].mxu0
        %2129 = vmatprep.mubr.bf16.mxu0 0
        %2130 = vmatmul.mubr.bf16.gmra.mrb[0].mxu0 %v1914
        %v2131 = vpop.f32.mrb[0].mxu0
        %v2132 = vpop.f32.mrb[0].mxu0
        %v2133 = vpop.f32.mrb[0].mxu0
        %v2134 = vpop.f32.mrb[0].mxu0
        %2135 = vmatprep.mubr.bf16.mxu0 0
        %2136 = vmatmul.mubr.bf16.gmra.mrb[0].mxu0 %v1916
        %v2137 = vpop.f32.mrb[0].mxu0
        %v2138 = vadd.f32 %v1814, %v2137
        %v2139 = vpop.f32.mrb[0].mxu0
        %v2140 = vpop.f32.mrb[0].mxu0
        %v2141 = vadd.f32 %v1817, %v2140
        %v2142 = vpop.f32.mrb[0].mxu0
        %2143 = vmatprep.mubr.bf16.mxu0 0
        %2144 = vmatmul.mubr.bf16.gmra.mrb[0].mxu0 %v1918
        %v2145 = vpop.f32.mrb[0].mxu0
        %v2146 = vpop.f32.mrb[0].mxu0
        %v2147 = vpop.f32.mrb[0].mxu0
        %v2148 = vpop.f32.mrb[0].mxu0
        %2149 = vmatprep.mubr.bf16.mxu0 0
        %2150 = vmatmul.mubr.bf16.gmra.mrb[0].mxu0 %v1920
        %v2151 = vpop.f32.mrb[0].mxu0
        %v2152 = vadd.f32 %v1828, %v2151
        %v2153 = vpop.f32.mrb[0].mxu0
        %v2154 = vpop.f32.mrb[0].mxu0
        %v2155 = vadd.f32 %v1831, %v2154
        %v2156 = vpop.f32.mrb[0].mxu0
        %2157 = vmatprep.mubr.bf16.mxu0 0
        %2158 = vmatmul.mubr.bf16.gmra.mrb[0].mxu0 %v1922
        %v2159 = vpop.f32.mrb[0].mxu0
        %v2160 = vpop.f32.mrb[0].mxu0
        %v2161 = vpop.f32.mrb[0].mxu0
        %v2162 = vpop.f32.mrb[0].mxu0
        %2163 = vmatprep.mubr.bf16.mxu0 0
        %2164 = vmatmul.mubr.bf16.gmra.mrb[0].mxu0 %v1924
        %v2165 = vpop.f32.mrb[0].mxu0
        %v2166 = vadd.f32 %v1842, %v2165
        %v2167 = vpop.f32.mrb[0].mxu0
        %v2168 = vpop.f32.mrb[0].mxu0
        %v2169 = vadd.f32 %v1845, %v2168
        %v2170 = vpop.f32.mrb[0].mxu0
        %2171 = vmatprep.mubr.bf16.mxu0 0
        %2172 = vmatmul.mubr.bf16.gmra.mrb[0].mxu0 %v1926
        %v2173 = vpop.f32.mrb[0].mxu0
        %v2174 = vpop.f32.mrb[0].mxu0
        %v2175 = vpop.f32.mrb[0].mxu0
        %v2176 = vpop.f32.mrb[0].mxu0
        %2177 = vmatprep.mubr.bf16.mxu0 0
        %2178 = vmatmul.mubr.bf16.gmra.mrb[0].mxu0 %v1928
        %v2179 = vpop.f32.mrb[0].mxu0
        %v2180 = vadd.f32 %v1856, %v2179
        %v2181 = vpop.f32.mrb[0].mxu0
        %v2182 = vpop.f32.mrb[0].mxu0
        %v2183 = vadd.f32 %v1859, %v2182
        %v2184 = vpop.f32.mrb[0].mxu0
        %2185 = vmatprep.mubr.bf16.mxu0 0
        %2186 = vmatmul.mubr.bf16.gmra.mrb[0].mxu0 %v1930
        %v2187 = vpop.f32.mrb[0].mxu0
        %v2188 = vpop.f32.mrb[0].mxu0
        %v2189 = vpop.f32.mrb[0].mxu0
        %v2190 = vpop.f32.mrb[0].mxu0
        %2191 = vdwg.mxu0
        %s2192 = scalar_lea.vmem %s3, 8
        %v2193 = vld [vmem:[%s2192] sm:$0xf]
        %vm2227 = vcmask 1046528
        %v2228 = vrot.slane %v1211, 1
        %v2229 = vrot.slane %v1212, 1
        %v2230 = vsel %vm2227, %v2228, %v2229
        %v2231 = vrot.slane %v1213, 1
        %v2232 = vsel %vm2227, %v2229, %v2231
        %v2233 = vrot.slane %v1214, 1
        %v2234 = vsel %vm2227, %v2231, %v2233
        %v2235 = vrot.slane %v1215, 1
        %v2236 = vsel %vm2227, %v2233, %v2235
        %v2237 = vrot.slane %v1216, 1
        %v2238 = vsel %vm2227, %v2235, %v2237
        %v2239 = vrot.slane %v1217, 1
        %v2240 = vsel %vm2227, %v2237, %v2239
        %v2241 = vrot.slane %v1218, 1
        %v2242 = vsel %vm2227, %v2239, %v2241
        %v2243 = vrot.slane %v1219, 1
        %v2244 = vsel %vm2227, %v2241, %v2243
        %v2245 = vrot.slane %v1220, 1
        %v2246 = vsel %vm2227, %v2243, %v2245
        %v2247 = vrot.slane %v1221, 1
        %v2248 = vsel %vm2227, %v2245, %v2247
        %v2249 = vrot.slane %v1222, 1
        %v2250 = vsel %vm2227, %v2247, %v2249
        %v2251 = vrot.slane %v1223, 1
        %v2252 = vsel %vm2227, %v2249, %v2251
        %v2253 = vrot.slane %v1224, 1
        %v2254 = vsel %vm2227, %v2251, %v2253
        %v2255 = vrot.slane %v1225, 1
        %v2256 = vsel %vm2227, %v2253, %v2255
        %v2257 = vrot.slane %v1226, 1
        %v2258 = vsel %vm2227, %v2255, %v2257
        %v2259 = vrot.slane %v1227, 1
        %v2260 = vsel %vm2227, %v2257, %v2259
        %v2261 = vrot.slane %v1228, 1
        %v2262 = vsel %vm2227, %v2259, %v2261
        %v2263 = vrot.slane %v1229, 1
        %v2264 = vsel %vm2227, %v2261, %v2263
        %v2265 = vrot.slane %v1230, 1
        %v2266 = vsel %vm2227, %v2263, %v2265
        %v2267 = vrot.slane %v1231, 1
        %v2268 = vsel %vm2227, %v2265, %v2267
        %v2269 = vrot.slane %v1232, 1
        %v2270 = vsel %vm2227, %v2267, %v2269
        %v2271 = vrot.slane %v1233, 1
        %v2272 = vsel %vm2227, %v2269, %v2271
        %v2273 = vrot.slane %v1234, 1
        %v2274 = vsel %vm2227, %v2271, %v2273
        %v2275 = vrot.slane %v1235, 1
        %v2276 = vsel %vm2227, %v2273, %v2275
        %v2277 = vrot.slane %v1236, 1
        %v2278 = vsel %vm2227, %v2275, %v2277
        %v2279 = vrot.slane %v1237, 1
        %v2280 = vsel %vm2227, %v2277, %v2279
        %v2281 = vrot.slane %v1238, 1
        %v2282 = vsel %vm2227, %v2279, %v2281
        %v2283 = vrot.slane %v1239, 1
        %v2284 = vsel %vm2227, %v2281, %v2283
        %v2285 = vrot.slane %v1240, 1
        %v2286 = vsel %vm2227, %v2283, %v2285
        %v2287 = vrot.slane %v1241, 1
        %v2288 = vsel %vm2227, %v2285, %v2287
        %v2289 = vrot.slane %v1242, 1
        %v2290 = vsel %vm2227, %v2287, %v2289
        %v2291 = vrot.slane %v1243, 1
        %v2292 = vsel %vm2227, %v2289, %v2291
        %v2294 = vsel %vm534, %v2230, 0
        %v2297 = vsel %vm534, %v2232, 0
        %v2300 = vsel %vm534, %v2234, 0
        %v2303 = vsel %vm534, %v2236, 0
        %v2306 = vsel %vm534, %v2238, 0
        %v2309 = vsel %vm534, %v2240, 0
        %v2312 = vsel %vm534, %v2242, 0
        %v2315 = vsel %vm534, %v2244, 0
        %v2318 = vsel %vm534, %v2246, 0
        %v2321 = vsel %vm534, %v2248, 0
        %v2324 = vsel %vm534, %v2250, 0
        %v2327 = vsel %vm534, %v2252, 0
        %v2330 = vsel %vm534, %v2254, 0
        %v2333 = vsel %vm534, %v2256, 0
        %v2336 = vsel %vm534, %v2258, 0
        %v2339 = vsel %vm534, %v2260, 0
        %v2342 = vsel %vm534, %v2262, 0
        %v2345 = vsel %vm534, %v2264, 0
        %v2348 = vsel %vm534, %v2266, 0
        %v2351 = vsel %vm534, %v2268, 0
        %v2354 = vsel %vm534, %v2270, 0
        %v2357 = vsel %vm534, %v2272, 0
        %v2360 = vsel %vm534, %v2274, 0
        %v2363 = vsel %vm534, %v2276, 0
        %v2366 = vsel %vm534, %v2278, 0
        %v2369 = vsel %vm534, %v2280, 0
        %v2372 = vsel %vm534, %v2282, 0
        %v2375 = vsel %vm534, %v2284, 0
        %v2378 = vsel %vm534, %v2286, 0
        %v2381 = vsel %vm534, %v2288, 0
        %v2384 = vsel %vm534, %v2290, 0
        %v2387 = vsel %vm534, %v2292, 0
        %v2390 = vsel %vm649, %v2193, 0
        %2392 = vmatprep.subr.bf16.mxu0 0
        %2393 = vmatpush1.bf16.msra.mxu0 %v2390
        %2394 = vmatprep.subr.bf16.mxu0 0
        %2395 = vmatpush1.bf16.msra.mxu0 0
        %2396 = vmatprep.subr.bf16.mxu0 0
        %2397 = vmatpush1.bf16.msra.mxu0 0
        %2398 = vmatprep.subr.bf16.mxu0 0
        %2399 = vmatpush1.bf16.msra.mxu0 0
        %2400 = vmatprep.subr.bf16.mxu0 0
        %2401 = vmatpush1.bf16.msra.mxu0 0
        %2402 = vmatprep.subr.bf16.mxu0 0
        %2403 = vmatpush1.bf16.msra.mxu0 0
        %2404 = vmatprep.subr.bf16.mxu0 0
        %2405 = vmatpush1.bf16.msra.mxu0 0
        %2406 = vmatprep.subr.bf16.mxu0 0
        %2407 = vmatpush1.bf16.msra.mxu0 0
        %2408 = vmatprep.subr.bf16.mxu0 0
        %2409 = vmatpush1.bf16.msra.mxu0 0
        %2410 = vmatprep.subr.bf16.mxu0 0
        %2411 = vmatpush1.bf16.msra.mxu0 0
        %2412 = vmatprep.subr.bf16.mxu0 0
        %2413 = vmatpush1.bf16.msra.mxu0 0
        %2414 = vmatprep.subr.bf16.mxu0 0
        %2415 = vmatpush1.bf16.msra.mxu0 0
        %2416 = vmatprep.subr.bf16.mxu0 0
        %2417 = vmatpush1.bf16.msra.mxu0 0
        %2418 = vmatprep.subr.bf16.mxu0 0
        %2419 = vmatpush1.bf16.msra.mxu0 0
        %2420 = vmatprep.subr.bf16.mxu0 0
        %2421 = vmatpush1.bf16.msra.mxu0 0
        %2422 = vmatprep.subr.bf16.mxu0 0
        %2423 = vmatpush1.bf16.msra.mxu0 0
        %2424 = vmatprep.mubr.bf16.mxu0 0
        %2425 = vmatmul.mubr.bf16.gmra.mrb[0].mxu0 %v2294
        %v2426 = vpop.f32.mrb[0].mxu0
        %v2427 = vadd.f32 0.0, %v2426
        %v2428 = vpop.f32.mrb[0].mxu0
        %v2429 = vpop.f32.mrb[0].mxu0
        %v2430 = vadd.f32 0.0, %v2429
        %v2431 = vpop.f32.mrb[0].mxu0
        %2432 = vmatprep.mubr.bf16.mxu0 0
        %2433 = vmatmul.mubr.bf16.gmra.mrb[0].mxu0 %v2297
        %v2434 = vpop.f32.mrb[0].mxu0
        %v2435 = vpop.f32.mrb[0].mxu0
        %v2436 = vpop.f32.mrb[0].mxu0
        %v2437 = vpop.f32.mrb[0].mxu0
        %2438 = vmatprep.mubr.bf16.mxu0 0
        %2439 = vmatmul.mubr.bf16.gmra.mrb[0].mxu0 %v2300
        %v2440 = vpop.f32.mrb[0].mxu0
        %v2441 = vadd.f32 0.0, %v2440
        %v2442 = vpop.f32.mrb[0].mxu0
        %v2443 = vpop.f32.mrb[0].mxu0
        %v2444 = vadd.f32 0.0, %v2443
        %v2445 = vpop.f32.mrb[0].mxu0
        %2446 = vmatprep.mubr.bf16.mxu0 0
        %2447 = vmatmul.mubr.bf16.gmra.mrb[0].mxu0 %v2303
        %v2448 = vpop.f32.mrb[0].mxu0
        %v2449 = vpop.f32.mrb[0].mxu0
        %v2450 = vpop.f32.mrb[0].mxu0
        %v2451 = vpop.f32.mrb[0].mxu0
        %2452 = vmatprep.mubr.bf16.mxu0 0
        %2453 = vmatmul.mubr.bf16.gmra.mrb[0].mxu0 %v2306
        %v2454 = vpop.f32.mrb[0].mxu0
        %v2455 = vadd.f32 0.0, %v2454
        %v2456 = vpop.f32.mrb[0].mxu0
        %v2457 = vpop.f32.mrb[0].mxu0
        %v2458 = vadd.f32 0.0, %v2457
        %v2459 = vpop.f32.mrb[0].mxu0
        %2460 = vmatprep.mubr.bf16.mxu0 0
        %2461 = vmatmul.mubr.bf16.gmra.mrb[0].mxu0 %v2309
        %v2462 = vpop.f32.mrb[0].mxu0
        %v2463 = vpop.f32.mrb[0].mxu0
        %v2464 = vpop.f32.mrb[0].mxu0
        %v2465 = vpop.f32.mrb[0].mxu0
        %2466 = vmatprep.mubr.bf16.mxu0 0
        %2467 = vmatmul.mubr.bf16.gmra.mrb[0].mxu0 %v2312
        %v2468 = vpop.f32.mrb[0].mxu0
        %v2469 = vadd.f32 0.0, %v2468
        %v2470 = vpop.f32.mrb[0].mxu0
        %v2471 = vpop.f32.mrb[0].mxu0
        %v2472 = vadd.f32 0.0, %v2471
        %v2473 = vpop.f32.mrb[0].mxu0
        %2474 = vmatprep.mubr.bf16.mxu0 0
        %2475 = vmatmul.mubr.bf16.gmra.mrb[0].mxu0 %v2315
        %v2476 = vpop.f32.mrb[0].mxu0
        %v2477 = vpop.f32.mrb[0].mxu0
        %v2478 = vpop.f32.mrb[0].mxu0
        %v2479 = vpop.f32.mrb[0].mxu0
        %2480 = vmatprep.mubr.bf16.mxu0 0
        %2481 = vmatmul.mubr.bf16.gmra.mrb[0].mxu0 %v2318
        %v2482 = vpop.f32.mrb[0].mxu0
        %v2483 = vadd.f32 0.0, %v2482
        %v2484 = vpop.f32.mrb[0].mxu0
        %v2485 = vpop.f32.mrb[0].mxu0
        %v2486 = vadd.f32 0.0, %v2485
        %v2487 = vpop.f32.mrb[0].mxu0
        %2488 = vmatprep.mubr.bf16.mxu0 0
        %2489 = vmatmul.mubr.bf16.gmra.mrb[0].mxu0 %v2321
        %v2490 = vpop.f32.mrb[0].mxu0
        %v2491 = vpop.f32.mrb[0].mxu0
        %v2492 = vpop.f32.mrb[0].mxu0
        %v2493 = vpop.f32.mrb[0].mxu0
        %2494 = vmatprep.mubr.bf16.mxu0 0
        %2495 = vmatmul.mubr.bf16.gmra.mrb[0].mxu0 %v2324
        %v2496 = vpop.f32.mrb[0].mxu0
        %v2497 = vadd.f32 0.0, %v2496
        %v2498 = vpop.f32.mrb[0].mxu0
        %v2499 = vpop.f32.mrb[0].mxu0
        %v2500 = vadd.f32 0.0, %v2499
        %v2501 = vpop.f32.mrb[0].mxu0
        %2502 = vmatprep.mubr.bf16.mxu0 0
        %2503 = vmatmul.mubr.bf16.gmra.mrb[0].mxu0 %v2327
        %v2504 = vpop.f32.mrb[0].mxu0
        %v2505 = vpop.f32.mrb[0].mxu0
        %v2506 = vpop.f32.mrb[0].mxu0
        %v2507 = vpop.f32.mrb[0].mxu0
        %2508 = vmatprep.mubr.bf16.mxu0 0
        %2509 = vmatmul.mubr.bf16.gmra.mrb[0].mxu0 %v2330
        %v2510 = vpop.f32.mrb[0].mxu0
        %v2511 = vadd.f32 0.0, %v2510
        %v2512 = vpop.f32.mrb[0].mxu0
        %v2513 = vpop.f32.mrb[0].mxu0
        %v2514 = vadd.f32 0.0, %v2513
        %v2515 = vpop.f32.mrb[0].mxu0
        %2516 = vmatprep.mubr.bf16.mxu0 0
        %2517 = vmatmul.mubr.bf16.gmra.mrb[0].mxu0 %v2333
        %v2518 = vpop.f32.mrb[0].mxu0
        %v2519 = vpop.f32.mrb[0].mxu0
        %v2520 = vpop.f32.mrb[0].mxu0
        %v2521 = vpop.f32.mrb[0].mxu0
        %2522 = vmatprep.mubr.bf16.mxu0 0
        %2523 = vmatmul.mubr.bf16.gmra.mrb[0].mxu0 %v2336
        %v2524 = vpop.f32.mrb[0].mxu0
        %v2525 = vadd.f32 0.0, %v2524
        %v2526 = vpop.f32.mrb[0].mxu0
        %v2527 = vpop.f32.mrb[0].mxu0
        %v2528 = vadd.f32 0.0, %v2527
        %v2529 = vpop.f32.mrb[0].mxu0
        %2530 = vmatprep.mubr.bf16.mxu0 0
        %2531 = vmatmul.mubr.bf16.gmra.mrb[0].mxu0 %v2339
        %v2532 = vpop.f32.mrb[0].mxu0
        %v2533 = vpop.f32.mrb[0].mxu0
        %v2534 = vpop.f32.mrb[0].mxu0
        %v2535 = vpop.f32.mrb[0].mxu0
        %2536 = vmatprep.mubr.bf16.mxu0 0
        %2537 = vmatmul.mubr.bf16.gmra.mrb[0].mxu0 %v2342
        %v2538 = vpop.f32.mrb[0].mxu0
        %v2539 = vadd.f32 0.0, %v2538
        %v2540 = vpop.f32.mrb[0].mxu0
        %v2541 = vpop.f32.mrb[0].mxu0
        %v2542 = vadd.f32 0.0, %v2541
        %v2543 = vpop.f32.mrb[0].mxu0
        %2544 = vmatprep.mubr.bf16.mxu0 0
        %2545 = vmatmul.mubr.bf16.gmra.mrb[0].mxu0 %v2345
        %v2546 = vpop.f32.mrb[0].mxu0
        %v2547 = vpop.f32.mrb[0].mxu0
        %v2548 = vpop.f32.mrb[0].mxu0
        %v2549 = vpop.f32.mrb[0].mxu0
        %2550 = vmatprep.mubr.bf16.mxu0 0
        %2551 = vmatmul.mubr.bf16.gmra.mrb[0].mxu0 %v2348
        %v2552 = vpop.f32.mrb[0].mxu0
        %v2553 = vadd.f32 0.0, %v2552
        %v2554 = vpop.f32.mrb[0].mxu0
        %v2555 = vpop.f32.mrb[0].mxu0
        %v2556 = vadd.f32 0.0, %v2555
        %v2557 = vpop.f32.mrb[0].mxu0
        %2558 = vmatprep.mubr.bf16.mxu0 0
        %2559 = vmatmul.mubr.bf16.gmra.mrb[0].mxu0 %v2351
        %v2560 = vpop.f32.mrb[0].mxu0
        %v2561 = vpop.f32.mrb[0].mxu0
        %v2562 = vpop.f32.mrb[0].mxu0
        %v2563 = vpop.f32.mrb[0].mxu0
        %2564 = vmatprep.mubr.bf16.mxu0 0
        %2565 = vmatmul.mubr.bf16.gmra.mrb[0].mxu0 %v2354
        %v2566 = vpop.f32.mrb[0].mxu0
        %v2567 = vadd.f32 0.0, %v2566
        %v2568 = vpop.f32.mrb[0].mxu0
        %v2569 = vpop.f32.mrb[0].mxu0
        %v2570 = vadd.f32 0.0, %v2569
        %v2571 = vpop.f32.mrb[0].mxu0
        %2572 = vmatprep.mubr.bf16.mxu0 0
        %2573 = vmatmul.mubr.bf16.gmra.mrb[0].mxu0 %v2357
        %v2574 = vpop.f32.mrb[0].mxu0
        %v2575 = vpop.f32.mrb[0].mxu0
        %v2576 = vpop.f32.mrb[0].mxu0
        %v2577 = vpop.f32.mrb[0].mxu0
        %2578 = vmatprep.mubr.bf16.mxu0 0
        %2579 = vmatmul.mubr.bf16.gmra.mrb[0].mxu0 %v2360
        %v2580 = vpop.f32.mrb[0].mxu0
        %v2581 = vadd.f32 0.0, %v2580
        %v2582 = vpop.f32.mrb[0].mxu0
        %v2583 = vpop.f32.mrb[0].mxu0
        %v2584 = vadd.f32 0.0, %v2583
        %v2585 = vpop.f32.mrb[0].mxu0
        %2586 = vmatprep.mubr.bf16.mxu0 0
        %2587 = vmatmul.mubr.bf16.gmra.mrb[0].mxu0 %v2363
        %v2588 = vpop.f32.mrb[0].mxu0
        %v2589 = vpop.f32.mrb[0].mxu0
        %v2590 = vpop.f32.mrb[0].mxu0
        %v2591 = vpop.f32.mrb[0].mxu0
        %2592 = vmatprep.mubr.bf16.mxu0 0
        %2593 = vmatmul.mubr.bf16.gmra.mrb[0].mxu0 %v2366
        %v2594 = vpop.f32.mrb[0].mxu0
        %v2595 = vadd.f32 0.0, %v2594
        %v2596 = vpop.f32.mrb[0].mxu0
        %v2597 = vpop.f32.mrb[0].mxu0
        %v2598 = vadd.f32 0.0, %v2597
        %v2599 = vpop.f32.mrb[0].mxu0
        %2600 = vmatprep.mubr.bf16.mxu0 0
        %2601 = vmatmul.mubr.bf16.gmra.mrb[0].mxu0 %v2369
        %v2602 = vpop.f32.mrb[0].mxu0
        %v2603 = vpop.f32.mrb[0].mxu0
        %v2604 = vpop.f32.mrb[0].mxu0
        %v2605 = vpop.f32.mrb[0].mxu0
        %2606 = vmatprep.mubr.bf16.mxu0 0
        %2607 = vmatmul.mubr.bf16.gmra.mrb[0].mxu0 %v2372
        %v2608 = vpop.f32.mrb[0].mxu0
        %v2609 = vadd.f32 0.0, %v2608
        %v2610 = vpop.f32.mrb[0].mxu0
        %v2611 = vpop.f32.mrb[0].mxu0
        %v2612 = vadd.f32 0.0, %v2611
        %v2613 = vpop.f32.mrb[0].mxu0
        %2614 = vmatprep.mubr.bf16.mxu0 0
        %2615 = vmatmul.mubr.bf16.gmra.mrb[0].mxu0 %v2375
        %v2616 = vpop.f32.mrb[0].mxu0
        %v2617 = vpop.f32.mrb[0].mxu0
        %v2618 = vpop.f32.mrb[0].mxu0
        %v2619 = vpop.f32.mrb[0].mxu0
        %2620 = vmatprep.mubr.bf16.mxu0 0
        %2621 = vmatmul.mubr.bf16.gmra.mrb[0].mxu0 %v2378
        %v2622 = vpop.f32.mrb[0].mxu0
        %v2623 = vadd.f32 0.0, %v2622
        %v2624 = vpop.f32.mrb[0].mxu0
        %v2625 = vpop.f32.mrb[0].mxu0
        %v2626 = vadd.f32 0.0, %v2625
        %v2627 = vpop.f32.mrb[0].mxu0
        %2628 = vmatprep.mubr.bf16.mxu0 0
        %2629 = vmatmul.mubr.bf16.gmra.mrb[0].mxu0 %v2381
        %v2630 = vpop.f32.mrb[0].mxu0
        %v2631 = vpop.f32.mrb[0].mxu0
        %v2632 = vpop.f32.mrb[0].mxu0
        %v2633 = vpop.f32.mrb[0].mxu0
        %2634 = vmatprep.mubr.bf16.mxu0 0
        %2635 = vmatmul.mubr.bf16.gmra.mrb[0].mxu0 %v2384
        %v2636 = vpop.f32.mrb[0].mxu0
        %v2637 = vadd.f32 0.0, %v2636
        %v2638 = vpop.f32.mrb[0].mxu0
        %v2639 = vpop.f32.mrb[0].mxu0
        %v2640 = vadd.f32 0.0, %v2639
        %v2641 = vpop.f32.mrb[0].mxu0
        %2642 = vmatprep.mubr.bf16.mxu0 0
        %2643 = vmatmul.mubr.bf16.gmra.mrb[0].mxu0 %v2387
        %v2644 = vpop.f32.mrb[0].mxu0
        %v2645 = vpop.f32.mrb[0].mxu0
        %v2646 = vpop.f32.mrb[0].mxu0
        %v2647 = vpop.f32.mrb[0].mxu0
        %2648 = vdwg.mxu0
        %v2649 = vadd.f32 %v1970, %v2427
        %v2650 = vadd.f32 %v1973, %v2430
        %v2651 = vadd.f32 %v1984, %v2441
        %v2652 = vadd.f32 %v1987, %v2444
        %v2653 = vadd.f32 %v1998, %v2455
        %v2654 = vadd.f32 %v2001, %v2458
        %v2655 = vadd.f32 %v2012, %v2469
        %v2656 = vadd.f32 %v2015, %v2472
        %v2657 = vadd.f32 %v2026, %v2483
        %v2658 = vadd.f32 %v2029, %v2486
        %v2659 = vadd.f32 %v2040, %v2497
        %v2660 = vadd.f32 %v2043, %v2500
        %v2661 = vadd.f32 %v2054, %v2511
        %v2662 = vadd.f32 %v2057, %v2514
        %v2663 = vadd.f32 %v2068, %v2525
        %v2664 = vadd.f32 %v2071, %v2528
        %v2665 = vadd.f32 %v2082, %v2539
        %v2666 = vadd.f32 %v2085, %v2542
        %v2667 = vadd.f32 %v2096, %v2553
        %v2668 = vadd.f32 %v2099, %v2556
        %v2669 = vadd.f32 %v2110, %v2567
        %v2670 = vadd.f32 %v2113, %v2570
        %v2671 = vadd.f32 %v2124, %v2581
        %v2672 = vadd.f32 %v2127, %v2584
        %v2673 = vadd.f32 %v2138, %v2595
        %v2674 = vadd.f32 %v2141, %v2598
        %v2675 = vadd.f32 %v2152, %v2609
        %v2676 = vadd.f32 %v2155, %v2612
        %v2677 = vadd.f32 %v2166, %v2623
        %v2678 = vadd.f32 %v2169, %v2626
        %v2679 = vadd.f32 %v2180, %v2637
        %v2680 = vadd.f32 %v2183, %v2640
        %s2681 = scalar_lea.vmem %s3, 12
        %v2682 = vld [vmem:[%s2681] sm:$0xf]
        %v2683 = vsel %vm534, %v1243, 0
        %v2686 = vsel %vm534, %v1244, 0
        %v2689 = vsel %vm649, %v2682, 0
        %2691 = vmatprep.subr.bf16.mxu0 0
        %2692 = vmatpush1.bf16.msra.mxu0 %v2689
        %2693 = vmatprep.subr.bf16.mxu0 0
        %2694 = vmatpush1.bf16.msra.mxu0 0
        %2695 = vmatprep.subr.bf16.mxu0 0
        %2696 = vmatpush1.bf16.msra.mxu0 0
        %2697 = vmatprep.subr.bf16.mxu0 0
        %2698 = vmatpush1.bf16.msra.mxu0 0
        %2699 = vmatprep.subr.bf16.mxu0 0
        %2700 = vmatpush1.bf16.msra.mxu0 0
        %2701 = vmatprep.subr.bf16.mxu0 0
        %2702 = vmatpush1.bf16.msra.mxu0 0
        %2703 = vmatprep.subr.bf16.mxu0 0
        %2704 = vmatpush1.bf16.msra.mxu0 0
        %2705 = vmatprep.subr.bf16.mxu0 0
        %2706 = vmatpush1.bf16.msra.mxu0 0
        %2707 = vmatprep.subr.bf16.mxu0 0
        %2708 = vmatpush1.bf16.msra.mxu0 0
        %2709 = vmatprep.subr.bf16.mxu0 0
        %2710 = vmatpush1.bf16.msra.mxu0 0
        %2711 = vmatprep.subr.bf16.mxu0 0
        %2712 = vmatpush1.bf16.msra.mxu0 0
        %2713 = vmatprep.subr.bf16.mxu0 0
        %2714 = vmatpush1.bf16.msra.mxu0 0
        %2715 = vmatprep.subr.bf16.mxu0 0
        %2716 = vmatpush1.bf16.msra.mxu0 0
        %2717 = vmatprep.subr.bf16.mxu0 0
        %2718 = vmatpush1.bf16.msra.mxu0 0
        %2719 = vmatprep.subr.bf16.mxu0 0
        %2720 = vmatpush1.bf16.msra.mxu0 0
        %2721 = vmatprep.subr.bf16.mxu0 0
        %2722 = vmatpush1.bf16.msra.mxu0 0
        %2723 = vmatprep.mubr.bf16.mxu0 0
        %2724 = vmatmul.mubr.bf16.gmra.mrb[0].mxu0 %v1872
        %v2725 = vpop.f32.mrb[0].mxu0
        %v2726 = vadd.f32 0.0, %v2725
        %v2727 = vpop.f32.mrb[0].mxu0
        %v2728 = vpop.f32.mrb[0].mxu0
        %v2729 = vadd.f32 0.0, %v2728
        %v2730 = vpop.f32.mrb[0].mxu0
        %2731 = vmatprep.mubr.bf16.mxu0 0
        %2732 = vmatmul.mubr.bf16.gmra.mrb[0].mxu0 %v1874
        %v2733 = vpop.f32.mrb[0].mxu0
        %v2734 = vpop.f32.mrb[0].mxu0
        %v2735 = vpop.f32.mrb[0].mxu0
        %v2736 = vpop.f32.mrb[0].mxu0
        %2737 = vmatprep.mubr.bf16.mxu0 0
        %2738 = vmatmul.mubr.bf16.gmra.mrb[0].mxu0 %v1876
        %v2739 = vpop.f32.mrb[0].mxu0
        %v2740 = vadd.f32 0.0, %v2739
        %v2741 = vpop.f32.mrb[0].mxu0
        %v2742 = vpop.f32.mrb[0].mxu0
        %v2743 = vadd.f32 0.0, %v2742
        %v2744 = vpop.f32.mrb[0].mxu0
        %2745 = vmatprep.mubr.bf16.mxu0 0
        %2746 = vmatmul.mubr.bf16.gmra.mrb[0].mxu0 %v1878
        %v2747 = vpop.f32.mrb[0].mxu0
        %v2748 = vpop.f32.mrb[0].mxu0
        %v2749 = vpop.f32.mrb[0].mxu0
        %v2750 = vpop.f32.mrb[0].mxu0
        %2751 = vmatprep.mubr.bf16.mxu0 0
        %2752 = vmatmul.mubr.bf16.gmra.mrb[0].mxu0 %v1880
        %v2753 = vpop.f32.mrb[0].mxu0
        %v2754 = vadd.f32 0.0, %v2753
        %v2755 = vpop.f32.mrb[0].mxu0
        %v2756 = vpop.f32.mrb[0].mxu0
        %v2757 = vadd.f32 0.0, %v2756
        %v2758 = vpop.f32.mrb[0].mxu0
        %2759 = vmatprep.mubr.bf16.mxu0 0
        %2760 = vmatmul.mubr.bf16.gmra.mrb[0].mxu0 %v1882
        %v2761 = vpop.f32.mrb[0].mxu0
        %v2762 = vpop.f32.mrb[0].mxu0
        %v2763 = vpop.f32.mrb[0].mxu0
        %v2764 = vpop.f32.mrb[0].mxu0
        %2765 = vmatprep.mubr.bf16.mxu0 0
        %2766 = vmatmul.mubr.bf16.gmra.mrb[0].mxu0 %v1884
        %v2767 = vpop.f32.mrb[0].mxu0
        %v2768 = vadd.f32 0.0, %v2767
        %v2769 = vpop.f32.mrb[0].mxu0
        %v2770 = vpop.f32.mrb[0].mxu0
        %v2771 = vadd.f32 0.0, %v2770
        %v2772 = vpop.f32.mrb[0].mxu0
        %2773 = vmatprep.mubr.bf16.mxu0 0
        %2774 = vmatmul.mubr.bf16.gmra.mrb[0].mxu0 %v1886
        %v2775 = vpop.f32.mrb[0].mxu0
        %v2776 = vpop.f32.mrb[0].mxu0
        %v2777 = vpop.f32.mrb[0].mxu0
        %v2778 = vpop.f32.mrb[0].mxu0
        %2779 = vmatprep.mubr.bf16.mxu0 0
        %2780 = vmatmul.mubr.bf16.gmra.mrb[0].mxu0 %v1888
        %v2781 = vpop.f32.mrb[0].mxu0
        %v2782 = vadd.f32 0.0, %v2781
        %v2783 = vpop.f32.mrb[0].mxu0
        %v2784 = vpop.f32.mrb[0].mxu0
        %v2785 = vadd.f32 0.0, %v2784
        %v2786 = vpop.f32.mrb[0].mxu0
        %2787 = vmatprep.mubr.bf16.mxu0 0
        %2788 = vmatmul.mubr.bf16.gmra.mrb[0].mxu0 %v1890
        %v2789 = vpop.f32.mrb[0].mxu0
        %v2790 = vpop.f32.mrb[0].mxu0
        %v2791 = vpop.f32.mrb[0].mxu0
        %v2792 = vpop.f32.mrb[0].mxu0
        %2793 = vmatprep.mubr.bf16.mxu0 0
        %2794 = vmatmul.mubr.bf16.gmra.mrb[0].mxu0 %v1892
        %v2795 = vpop.f32.mrb[0].mxu0
        %v2796 = vadd.f32 0.0, %v2795
        %v2797 = vpop.f32.mrb[0].mxu0
        %v2798 = vpop.f32.mrb[0].mxu0
        %v2799 = vadd.f32 0.0, %v2798
        %v2800 = vpop.f32.mrb[0].mxu0
        %2801 = vmatprep.mubr.bf16.mxu0 0
        %2802 = vmatmul.mubr.bf16.gmra.mrb[0].mxu0 %v1894
        %v2803 = vpop.f32.mrb[0].mxu0
        %v2804 = vpop.f32.mrb[0].mxu0
        %v2805 = vpop.f32.mrb[0].mxu0
        %v2806 = vpop.f32.mrb[0].mxu0
        %2807 = vmatprep.mubr.bf16.mxu0 0
        %2808 = vmatmul.mubr.bf16.gmra.mrb[0].mxu0 %v1896
        %v2809 = vpop.f32.mrb[0].mxu0
        %v2810 = vadd.f32 0.0, %v2809
        %v2811 = vpop.f32.mrb[0].mxu0
        %v2812 = vpop.f32.mrb[0].mxu0
        %v2813 = vadd.f32 0.0, %v2812
        %v2814 = vpop.f32.mrb[0].mxu0
        %2815 = vmatprep.mubr.bf16.mxu0 0
        %2816 = vmatmul.mubr.bf16.gmra.mrb[0].mxu0 %v1898
        %v2817 = vpop.f32.mrb[0].mxu0
        %v2818 = vpop.f32.mrb[0].mxu0
        %v2819 = vpop.f32.mrb[0].mxu0
        %v2820 = vpop.f32.mrb[0].mxu0
        %2821 = vmatprep.mubr.bf16.mxu0 0
        %2822 = vmatmul.mubr.bf16.gmra.mrb[0].mxu0 %v1900
        %v2823 = vpop.f32.mrb[0].mxu0
        %v2824 = vadd.f32 0.0, %v2823
        %v2825 = vpop.f32.mrb[0].mxu0
        %v2826 = vpop.f32.mrb[0].mxu0
        %v2827 = vadd.f32 0.0, %v2826
        %v2828 = vpop.f32.mrb[0].mxu0
        %2829 = vmatprep.mubr.bf16.mxu0 0
        %2830 = vmatmul.mubr.bf16.gmra.mrb[0].mxu0 %v1902
        %v2831 = vpop.f32.mrb[0].mxu0
        %v2832 = vpop.f32.mrb[0].mxu0
        %v2833 = vpop.f32.mrb[0].mxu0
        %v2834 = vpop.f32.mrb[0].mxu0
        %2835 = vmatprep.mubr.bf16.mxu0 0
        %2836 = vmatmul.mubr.bf16.gmra.mrb[0].mxu0 %v1904
        %v2837 = vpop.f32.mrb[0].mxu0
        %v2838 = vadd.f32 0.0, %v2837
        %v2839 = vpop.f32.mrb[0].mxu0
        %v2840 = vpop.f32.mrb[0].mxu0
        %v2841 = vadd.f32 0.0, %v2840
        %v2842 = vpop.f32.mrb[0].mxu0
        %2843 = vmatprep.mubr.bf16.mxu0 0
        %2844 = vmatmul.mubr.bf16.gmra.mrb[0].mxu0 %v1906
        %v2845 = vpop.f32.mrb[0].mxu0
        %v2846 = vpop.f32.mrb[0].mxu0
        %v2847 = vpop.f32.mrb[0].mxu0
        %v2848 = vpop.f32.mrb[0].mxu0
        %2849 = vmatprep.mubr.bf16.mxu0 0
        %2850 = vmatmul.mubr.bf16.gmra.mrb[0].mxu0 %v1908
        %v2851 = vpop.f32.mrb[0].mxu0
        %v2852 = vadd.f32 0.0, %v2851
        %v2853 = vpop.f32.mrb[0].mxu0
        %v2854 = vpop.f32.mrb[0].mxu0
        %v2855 = vadd.f32 0.0, %v2854
        %v2856 = vpop.f32.mrb[0].mxu0
        %2857 = vmatprep.mubr.bf16.mxu0 0
        %2858 = vmatmul.mubr.bf16.gmra.mrb[0].mxu0 %v1910
        %v2859 = vpop.f32.mrb[0].mxu0
        %v2860 = vpop.f32.mrb[0].mxu0
        %v2861 = vpop.f32.mrb[0].mxu0
        %v2862 = vpop.f32.mrb[0].mxu0
        %2863 = vmatprep.mubr.bf16.mxu0 0
        %2864 = vmatmul.mubr.bf16.gmra.mrb[0].mxu0 %v1912
        %v2865 = vpop.f32.mrb[0].mxu0
        %v2866 = vadd.f32 0.0, %v2865
        %v2867 = vpop.f32.mrb[0].mxu0
        %v2868 = vpop.f32.mrb[0].mxu0
        %v2869 = vadd.f32 0.0, %v2868
        %v2870 = vpop.f32.mrb[0].mxu0
        %2871 = vmatprep.mubr.bf16.mxu0 0
        %2872 = vmatmul.mubr.bf16.gmra.mrb[0].mxu0 %v1914
        %v2873 = vpop.f32.mrb[0].mxu0
        %v2874 = vpop.f32.mrb[0].mxu0
        %v2875 = vpop.f32.mrb[0].mxu0
        %v2876 = vpop.f32.mrb[0].mxu0
        %2877 = vmatprep.mubr.bf16.mxu0 0
        %2878 = vmatmul.mubr.bf16.gmra.mrb[0].mxu0 %v1916
        %v2879 = vpop.f32.mrb[0].mxu0
        %v2880 = vadd.f32 0.0, %v2879
        %v2881 = vpop.f32.mrb[0].mxu0
        %v2882 = vpop.f32.mrb[0].mxu0
        %v2883 = vadd.f32 0.0, %v2882
        %v2884 = vpop.f32.mrb[0].mxu0
        %2885 = vmatprep.mubr.bf16.mxu0 0
        %2886 = vmatmul.mubr.bf16.gmra.mrb[0].mxu0 %v1918
        %v2887 = vpop.f32.mrb[0].mxu0
        %v2888 = vpop.f32.mrb[0].mxu0
        %v2889 = vpop.f32.mrb[0].mxu0
        %v2890 = vpop.f32.mrb[0].mxu0
        %2891 = vmatprep.mubr.bf16.mxu0 0
        %2892 = vmatmul.mubr.bf16.gmra.mrb[0].mxu0 %v1920
        %v2893 = vpop.f32.mrb[0].mxu0
        %v2894 = vadd.f32 0.0, %v2893
        %v2895 = vpop.f32.mrb[0].mxu0
        %v2896 = vpop.f32.mrb[0].mxu0
        %v2897 = vadd.f32 0.0, %v2896
        %v2898 = vpop.f32.mrb[0].mxu0
        %2899 = vmatprep.mubr.bf16.mxu0 0
        %2900 = vmatmul.mubr.bf16.gmra.mrb[0].mxu0 %v1922
        %v2901 = vpop.f32.mrb[0].mxu0
        %v2902 = vpop.f32.mrb[0].mxu0
        %v2903 = vpop.f32.mrb[0].mxu0
        %v2904 = vpop.f32.mrb[0].mxu0
        %2905 = vmatprep.mubr.bf16.mxu0 0
        %2906 = vmatmul.mubr.bf16.gmra.mrb[0].mxu0 %v1924
        %v2907 = vpop.f32.mrb[0].mxu0
        %v2908 = vadd.f32 0.0, %v2907
        %v2909 = vpop.f32.mrb[0].mxu0
        %v2910 = vpop.f32.mrb[0].mxu0
        %v2911 = vadd.f32 0.0, %v2910
        %v2912 = vpop.f32.mrb[0].mxu0
        %2913 = vmatprep.mubr.bf16.mxu0 0
        %2914 = vmatmul.mubr.bf16.gmra.mrb[0].mxu0 %v1926
        %v2915 = vpop.f32.mrb[0].mxu0
        %v2916 = vpop.f32.mrb[0].mxu0
        %v2917 = vpop.f32.mrb[0].mxu0
        %v2918 = vpop.f32.mrb[0].mxu0
        %2919 = vmatprep.mubr.bf16.mxu0 0
        %2920 = vmatmul.mubr.bf16.gmra.mrb[0].mxu0 %v1928
        %v2921 = vpop.f32.mrb[0].mxu0
        %v2922 = vadd.f32 0.0, %v2921
        %v2923 = vpop.f32.mrb[0].mxu0
        %v2924 = vpop.f32.mrb[0].mxu0
        %v2925 = vadd.f32 0.0, %v2924
        %v2926 = vpop.f32.mrb[0].mxu0
        %2927 = vmatprep.mubr.bf16.mxu0 0
        %2928 = vmatmul.mubr.bf16.gmra.mrb[0].mxu0 %v1930
        %v2929 = vpop.f32.mrb[0].mxu0
        %v2930 = vpop.f32.mrb[0].mxu0
        %v2931 = vpop.f32.mrb[0].mxu0
        %v2932 = vpop.f32.mrb[0].mxu0
        %2933 = vmatprep.mubr.bf16.mxu0 0
        %2934 = vmatmul.mubr.bf16.gmra.mrb[0].mxu0 %v2683
        %v2935 = vpop.f32.mrb[0].mxu0
        %v2936 = vadd.f32 0.0, %v2935
        %v2937 = vpop.f32.mrb[0].mxu0
        %v2938 = vpop.f32.mrb[0].mxu0
        %v2939 = vadd.f32 0.0, %v2938
        %v2940 = vpop.f32.mrb[0].mxu0
        %2941 = vmatprep.mubr.bf16.mxu0 0
        %2942 = vmatmul.mubr.bf16.gmra.mrb[0].mxu0 %v2686
        %v2943 = vpop.f32.mrb[0].mxu0
        %v2944 = vpop.f32.mrb[0].mxu0
        %v2945 = vpop.f32.mrb[0].mxu0
        %v2946 = vpop.f32.mrb[0].mxu0
        %2947 = vdwg.mxu0
        %v2948 = vadd.f32 %v2649, %v2726
        %v2949 = vadd.f32 %v2650, %v2729
        %v2950 = vadd.f32 %v2651, %v2740
        %v2951 = vadd.f32 %v2652, %v2743
        %v2952 = vadd.f32 %v2653, %v2754
        %v2953 = vadd.f32 %v2654, %v2757
        %v2954 = vadd.f32 %v2655, %v2768
        %v2955 = vadd.f32 %v2656, %v2771
        %v2956 = vadd.f32 %v2657, %v2782
        %v2957 = vadd.f32 %v2658, %v2785
        %v2958 = vadd.f32 %v2659, %v2796
        %v2959 = vadd.f32 %v2660, %v2799
        %v2960 = vadd.f32 %v2661, %v2810
        %v2961 = vadd.f32 %v2662, %v2813
        %v2962 = vadd.f32 %v2663, %v2824
        %v2963 = vadd.f32 %v2664, %v2827
        %v2964 = vadd.f32 %v2665, %v2838
        %v2965 = vadd.f32 %v2666, %v2841
        %v2966 = vadd.f32 %v2667, %v2852
        %v2967 = vadd.f32 %v2668, %v2855
        %v2968 = vadd.f32 %v2669, %v2866
        %v2969 = vadd.f32 %v2670, %v2869
        %v2970 = vadd.f32 %v2671, %v2880
        %v2971 = vadd.f32 %v2672, %v2883
        %v2972 = vadd.f32 %v2673, %v2894
        %v2973 = vadd.f32 %v2674, %v2897
        %v2974 = vadd.f32 %v2675, %v2908
        %v2975 = vadd.f32 %v2676, %v2911
        %v2976 = vadd.f32 %v2677, %v2922
        %v2977 = vadd.f32 %v2678, %v2925
        %v2978 = vadd.f32 %v2679, %v2936
        %v2979 = vadd.f32 %v2680, %v2939
        %s2980 = scalar_lea.vmem %s3, 16
        %v2981 = vld [vmem:[%s2980] sm:$0xf]
        %v2982 = vshrl.u32 %v1243, 16
        %v2984 = vor.u32 %v2982, %v1510
        %v2985 = vshll.u32 %v1244, 16
        %v2987 = vrot.slane %v2985, 1
        %v2988 = vsel %vm1251, %v2984, %v2987
        %v2989 = vshrl.u32 %v1244, 16
        %v2991 = vor.u32 %v2989, %v2987
        %v2993 = vshll.u32 %v1245, 16
        %v2995 = vrot.slane %v2993, 1
        %v2996 = vsel %vm1251, %v2991, %v2995
        %v2998 = vsel %vm534, %v2988, 0
        %v3001 = vsel %vm534, %v2996, 0
        %v3004 = vsel %vm649, %v2981, 0
        %3006 = vmatprep.subr.bf16.mxu0 0
        %3007 = vmatpush1.bf16.msra.mxu0 %v3004
        %3008 = vmatprep.subr.bf16.mxu0 0
        %3009 = vmatpush1.bf16.msra.mxu0 0
        %3010 = vmatprep.subr.bf16.mxu0 0
        %3011 = vmatpush1.bf16.msra.mxu0 0
        %3012 = vmatprep.subr.bf16.mxu0 0
        %3013 = vmatpush1.bf16.msra.mxu0 0
        %3014 = vmatprep.subr.bf16.mxu0 0
        %3015 = vmatpush1.bf16.msra.mxu0 0
        %3016 = vmatprep.subr.bf16.mxu0 0
        %3017 = vmatpush1.bf16.msra.mxu0 0
        %3018 = vmatprep.subr.bf16.mxu0 0
        %3019 = vmatpush1.bf16.msra.mxu0 0
        %3020 = vmatprep.subr.bf16.mxu0 0
        %3021 = vmatpush1.bf16.msra.mxu0 0
        %3022 = vmatprep.subr.bf16.mxu0 0
        %3023 = vmatpush1.bf16.msra.mxu0 0
        %3024 = vmatprep.subr.bf16.mxu0 0
        %3025 = vmatpush1.bf16.msra.mxu0 0
        %3026 = vmatprep.subr.bf16.mxu0 0
        %3027 = vmatpush1.bf16.msra.mxu0 0
        %3028 = vmatprep.subr.bf16.mxu0 0
        %3029 = vmatpush1.bf16.msra.mxu0 0
        %3030 = vmatprep.subr.bf16.mxu0 0
        %3031 = vmatpush1.bf16.msra.mxu0 0
        %3032 = vmatprep.subr.bf16.mxu0 0
        %3033 = vmatpush1.bf16.msra.mxu0 0
        %3034 = vmatprep.subr.bf16.mxu0 0
        %3035 = vmatpush1.bf16.msra.mxu0 0
        %3036 = vmatprep.subr.bf16.mxu0 0
        %3037 = vmatpush1.bf16.msra.mxu0 0
        %3038 = vmatprep.mubr.bf16.mxu0 0
        %3039 = vmatmul.mubr.bf16.gmra.mrb[0].mxu0 %v1519
        %v3040 = vpop.f32.mrb[0].mxu0
        %v3041 = vadd.f32 0.0, %v3040
        %v3042 = vpop.f32.mrb[0].mxu0
        %v3043 = vpop.f32.mrb[0].mxu0
        %v3044 = vadd.f32 0.0, %v3043
        %v3045 = vpop.f32.mrb[0].mxu0
        %3046 = vmatprep.mubr.bf16.mxu0 0
        %3047 = vmatmul.mubr.bf16.gmra.mrb[0].mxu0 %v1522
        %v3048 = vpop.f32.mrb[0].mxu0
        %v3049 = vpop.f32.mrb[0].mxu0
        %v3050 = vpop.f32.mrb[0].mxu0
        %v3051 = vpop.f32.mrb[0].mxu0
        %3052 = vmatprep.mubr.bf16.mxu0 0
        %3053 = vmatmul.mubr.bf16.gmra.mrb[0].mxu0 %v1525
        %v3054 = vpop.f32.mrb[0].mxu0
        %v3055 = vadd.f32 0.0, %v3054
        %v3056 = vpop.f32.mrb[0].mxu0
        %v3057 = vpop.f32.mrb[0].mxu0
        %v3058 = vadd.f32 0.0, %v3057
        %v3059 = vpop.f32.mrb[0].mxu0
        %3060 = vmatprep.mubr.bf16.mxu0 0
        %3061 = vmatmul.mubr.bf16.gmra.mrb[0].mxu0 %v1528
        %v3062 = vpop.f32.mrb[0].mxu0
        %v3063 = vpop.f32.mrb[0].mxu0
        %v3064 = vpop.f32.mrb[0].mxu0
        %v3065 = vpop.f32.mrb[0].mxu0
        %3066 = vmatprep.mubr.bf16.mxu0 0
        %3067 = vmatmul.mubr.bf16.gmra.mrb[0].mxu0 %v1531
        %v3068 = vpop.f32.mrb[0].mxu0
        %v3069 = vadd.f32 0.0, %v3068
        %v3070 = vpop.f32.mrb[0].mxu0
        %v3071 = vpop.f32.mrb[0].mxu0
        %v3072 = vadd.f32 0.0, %v3071
        %v3073 = vpop.f32.mrb[0].mxu0
        %3074 = vmatprep.mubr.bf16.mxu0 0
        %3075 = vmatmul.mubr.bf16.gmra.mrb[0].mxu0 %v1534
        %v3076 = vpop.f32.mrb[0].mxu0
        %v3077 = vpop.f32.mrb[0].mxu0
        %v3078 = vpop.f32.mrb[0].mxu0
        %v3079 = vpop.f32.mrb[0].mxu0
        %3080 = vmatprep.mubr.bf16.mxu0 0
        %3081 = vmatmul.mubr.bf16.gmra.mrb[0].mxu0 %v1537
        %v3082 = vpop.f32.mrb[0].mxu0
        %v3083 = vadd.f32 0.0, %v3082
        %v3084 = vpop.f32.mrb[0].mxu0
        %v3085 = vpop.f32.mrb[0].mxu0
        %v3086 = vadd.f32 0.0, %v3085
        %v3087 = vpop.f32.mrb[0].mxu0
        %3088 = vmatprep.mubr.bf16.mxu0 0
        %3089 = vmatmul.mubr.bf16.gmra.mrb[0].mxu0 %v1540
        %v3090 = vpop.f32.mrb[0].mxu0
        %v3091 = vpop.f32.mrb[0].mxu0
        %v3092 = vpop.f32.mrb[0].mxu0
        %v3093 = vpop.f32.mrb[0].mxu0
        %3094 = vmatprep.mubr.bf16.mxu0 0
        %3095 = vmatmul.mubr.bf16.gmra.mrb[0].mxu0 %v1543
        %v3096 = vpop.f32.mrb[0].mxu0
        %v3097 = vadd.f32 0.0, %v3096
        %v3098 = vpop.f32.mrb[0].mxu0
        %v3099 = vpop.f32.mrb[0].mxu0
        %v3100 = vadd.f32 0.0, %v3099
        %v3101 = vpop.f32.mrb[0].mxu0
        %3102 = vmatprep.mubr.bf16.mxu0 0
        %3103 = vmatmul.mubr.bf16.gmra.mrb[0].mxu0 %v1546
        %v3104 = vpop.f32.mrb[0].mxu0
        %v3105 = vpop.f32.mrb[0].mxu0
        %v3106 = vpop.f32.mrb[0].mxu0
        %v3107 = vpop.f32.mrb[0].mxu0
        %3108 = vmatprep.mubr.bf16.mxu0 0
        %3109 = vmatmul.mubr.bf16.gmra.mrb[0].mxu0 %v1549
        %v3110 = vpop.f32.mrb[0].mxu0
        %v3111 = vadd.f32 0.0, %v3110
        %v3112 = vpop.f32.mrb[0].mxu0
        %v3113 = vpop.f32.mrb[0].mxu0
        %v3114 = vadd.f32 0.0, %v3113
        %v3115 = vpop.f32.mrb[0].mxu0
        %3116 = vmatprep.mubr.bf16.mxu0 0
        %3117 = vmatmul.mubr.bf16.gmra.mrb[0].mxu0 %v1552
        %v3118 = vpop.f32.mrb[0].mxu0
        %v3119 = vpop.f32.mrb[0].mxu0
        %v3120 = vpop.f32.mrb[0].mxu0
        %v3121 = vpop.f32.mrb[0].mxu0
        %3122 = vmatprep.mubr.bf16.mxu0 0
        %3123 = vmatmul.mubr.bf16.gmra.mrb[0].mxu0 %v1555
        %v3124 = vpop.f32.mrb[0].mxu0
        %v3125 = vadd.f32 0.0, %v3124
        %v3126 = vpop.f32.mrb[0].mxu0
        %v3127 = vpop.f32.mrb[0].mxu0
        %v3128 = vadd.f32 0.0, %v3127
        %v3129 = vpop.f32.mrb[0].mxu0
        %3130 = vmatprep.mubr.bf16.mxu0 0
        %3131 = vmatmul.mubr.bf16.gmra.mrb[0].mxu0 %v1558
        %v3132 = vpop.f32.mrb[0].mxu0
        %v3133 = vpop.f32.mrb[0].mxu0
        %v3134 = vpop.f32.mrb[0].mxu0
        %v3135 = vpop.f32.mrb[0].mxu0
        %3136 = vmatprep.mubr.bf16.mxu0 0
        %3137 = vmatmul.mubr.bf16.gmra.mrb[0].mxu0 %v1561
        %v3138 = vpop.f32.mrb[0].mxu0
        %v3139 = vadd.f32 0.0, %v3138
        %v3140 = vpop.f32.mrb[0].mxu0
        %v3141 = vpop.f32.mrb[0].mxu0
        %v3142 = vadd.f32 0.0, %v3141
        %v3143 = vpop.f32.mrb[0].mxu0
        %3144 = vmatprep.mubr.bf16.mxu0 0
        %3145 = vmatmul.mubr.bf16.gmra.mrb[0].mxu0 %v1564
        %v3146 = vpop.f32.mrb[0].mxu0
        %v3147 = vpop.f32.mrb[0].mxu0
        %v3148 = vpop.f32.mrb[0].mxu0
        %v3149 = vpop.f32.mrb[0].mxu0
        %3150 = vmatprep.mubr.bf16.mxu0 0
        %3151 = vmatmul.mubr.bf16.gmra.mrb[0].mxu0 %v1567
        %v3152 = vpop.f32.mrb[0].mxu0
        %v3153 = vadd.f32 0.0, %v3152
        %v3154 = vpop.f32.mrb[0].mxu0
        %v3155 = vpop.f32.mrb[0].mxu0
        %v3156 = vadd.f32 0.0, %v3155
        %v3157 = vpop.f32.mrb[0].mxu0
        %3158 = vmatprep.mubr.bf16.mxu0 0
        %3159 = vmatmul.mubr.bf16.gmra.mrb[0].mxu0 %v1570
        %v3160 = vpop.f32.mrb[0].mxu0
        %v3161 = vpop.f32.mrb[0].mxu0
        %v3162 = vpop.f32.mrb[0].mxu0
        %v3163 = vpop.f32.mrb[0].mxu0
        %3164 = vmatprep.mubr.bf16.mxu0 0
        %3165 = vmatmul.mubr.bf16.gmra.mrb[0].mxu0 %v1573
        %v3166 = vpop.f32.mrb[0].mxu0
        %v3167 = vadd.f32 0.0, %v3166
        %v3168 = vpop.f32.mrb[0].mxu0
        %v3169 = vpop.f32.mrb[0].mxu0
        %v3170 = vadd.f32 0.0, %v3169
        %v3171 = vpop.f32.mrb[0].mxu0
        %3172 = vmatprep.mubr.bf16.mxu0 0
        %3173 = vmatmul.mubr.bf16.gmra.mrb[0].mxu0 %v1576
        %v3174 = vpop.f32.mrb[0].mxu0
        %v3175 = vpop.f32.mrb[0].mxu0
        %v3176 = vpop.f32.mrb[0].mxu0
        %v3177 = vpop.f32.mrb[0].mxu0
        %3178 = vmatprep.mubr.bf16.mxu0 0
        %3179 = vmatmul.mubr.bf16.gmra.mrb[0].mxu0 %v1579
        %v3180 = vpop.f32.mrb[0].mxu0
        %v3181 = vadd.f32 0.0, %v3180
        %v3182 = vpop.f32.mrb[0].mxu0
        %v3183 = vpop.f32.mrb[0].mxu0
        %v3184 = vadd.f32 0.0, %v3183
        %v3185 = vpop.f32.mrb[0].mxu0
        %3186 = vmatprep.mubr.bf16.mxu0 0
        %3187 = vmatmul.mubr.bf16.gmra.mrb[0].mxu0 %v1582
        %v3188 = vpop.f32.mrb[0].mxu0
        %v3189 = vpop.f32.mrb[0].mxu0
        %v3190 = vpop.f32.mrb[0].mxu0
        %v3191 = vpop.f32.mrb[0].mxu0
        %3192 = vmatprep.mubr.bf16.mxu0 0
        %3193 = vmatmul.mubr.bf16.gmra.mrb[0].mxu0 %v1585
        %v3194 = vpop.f32.mrb[0].mxu0
        %v3195 = vadd.f32 0.0, %v3194
        %v3196 = vpop.f32.mrb[0].mxu0
        %v3197 = vpop.f32.mrb[0].mxu0
        %v3198 = vadd.f32 0.0, %v3197
        %v3199 = vpop.f32.mrb[0].mxu0
        %3200 = vmatprep.mubr.bf16.mxu0 0
        %3201 = vmatmul.mubr.bf16.gmra.mrb[0].mxu0 %v1588
        %v3202 = vpop.f32.mrb[0].mxu0
        %v3203 = vpop.f32.mrb[0].mxu0
        %v3204 = vpop.f32.mrb[0].mxu0
        %v3205 = vpop.f32.mrb[0].mxu0
        %3206 = vmatprep.mubr.bf16.mxu0 0
        %3207 = vmatmul.mubr.bf16.gmra.mrb[0].mxu0 %v1591
        %v3208 = vpop.f32.mrb[0].mxu0
        %v3209 = vadd.f32 0.0, %v3208
        %v3210 = vpop.f32.mrb[0].mxu0
        %v3211 = vpop.f32.mrb[0].mxu0
        %v3212 = vadd.f32 0.0, %v3211
        %v3213 = vpop.f32.mrb[0].mxu0
        %3214 = vmatprep.mubr.bf16.mxu0 0
        %3215 = vmatmul.mubr.bf16.gmra.mrb[0].mxu0 %v1594
        %v3216 = vpop.f32.mrb[0].mxu0
        %v3217 = vpop.f32.mrb[0].mxu0
        %v3218 = vpop.f32.mrb[0].mxu0
        %v3219 = vpop.f32.mrb[0].mxu0
        %3220 = vmatprep.mubr.bf16.mxu0 0
        %3221 = vmatmul.mubr.bf16.gmra.mrb[0].mxu0 %v1597
        %v3222 = vpop.f32.mrb[0].mxu0
        %v3223 = vadd.f32 0.0, %v3222
        %v3224 = vpop.f32.mrb[0].mxu0
        %v3225 = vpop.f32.mrb[0].mxu0
        %v3226 = vadd.f32 0.0, %v3225
        %v3227 = vpop.f32.mrb[0].mxu0
        %3228 = vmatprep.mubr.bf16.mxu0 0
        %3229 = vmatmul.mubr.bf16.gmra.mrb[0].mxu0 %v1600
        %v3230 = vpop.f32.mrb[0].mxu0
        %v3231 = vpop.f32.mrb[0].mxu0
        %v3232 = vpop.f32.mrb[0].mxu0
        %v3233 = vpop.f32.mrb[0].mxu0
        %3234 = vmatprep.mubr.bf16.mxu0 0
        %3235 = vmatmul.mubr.bf16.gmra.mrb[0].mxu0 %v1603
        %v3236 = vpop.f32.mrb[0].mxu0
        %v3237 = vadd.f32 0.0, %v3236
        %v3238 = vpop.f32.mrb[0].mxu0
        %v3239 = vpop.f32.mrb[0].mxu0
        %v3240 = vadd.f32 0.0, %v3239
        %v3241 = vpop.f32.mrb[0].mxu0
        %3242 = vmatprep.mubr.bf16.mxu0 0
        %3243 = vmatmul.mubr.bf16.gmra.mrb[0].mxu0 %v1606
        %v3244 = vpop.f32.mrb[0].mxu0
        %v3245 = vpop.f32.mrb[0].mxu0
        %v3246 = vpop.f32.mrb[0].mxu0
        %v3247 = vpop.f32.mrb[0].mxu0
        %3248 = vmatprep.mubr.bf16.mxu0 0
        %3249 = vmatmul.mubr.bf16.gmra.mrb[0].mxu0 %v2998
        %v3250 = vpop.f32.mrb[0].mxu0
        %v3251 = vadd.f32 0.0, %v3250
        %v3252 = vpop.f32.mrb[0].mxu0
        %v3253 = vpop.f32.mrb[0].mxu0
        %v3254 = vadd.f32 0.0, %v3253
        %v3255 = vpop.f32.mrb[0].mxu0
        %3256 = vmatprep.mubr.bf16.mxu0 0
        %3257 = vmatmul.mubr.bf16.gmra.mrb[0].mxu0 %v3001
        %v3258 = vpop.f32.mrb[0].mxu0
        %v3259 = vpop.f32.mrb[0].mxu0
        %v3260 = vpop.f32.mrb[0].mxu0
        %v3261 = vpop.f32.mrb[0].mxu0
        %3262 = vdwg.mxu0
        %v3263 = vadd.f32 %v2948, %v3041
        %v3264 = vadd.f32 %v2949, %v3044
        %v3265 = vadd.f32 %v2950, %v3055
        %v3266 = vadd.f32 %v2951, %v3058
        %v3267 = vadd.f32 %v2952, %v3069
        %v3268 = vadd.f32 %v2953, %v3072
        %v3269 = vadd.f32 %v2954, %v3083
        %v3270 = vadd.f32 %v2955, %v3086
        %v3271 = vadd.f32 %v2956, %v3097
        %v3272 = vadd.f32 %v2957, %v3100
        %v3273 = vadd.f32 %v2958, %v3111
        %v3274 = vadd.f32 %v2959, %v3114
        %v3275 = vadd.f32 %v2960, %v3125
        %v3276 = vadd.f32 %v2961, %v3128
        %v3277 = vadd.f32 %v2962, %v3139
        %v3278 = vadd.f32 %v2963, %v3142
        %v3279 = vadd.f32 %v2964, %v3153
        %v3280 = vadd.f32 %v2965, %v3156
        %v3281 = vadd.f32 %v2966, %v3167
        %v3282 = vadd.f32 %v2967, %v3170
        %v3283 = vadd.f32 %v2968, %v3181
        %v3284 = vadd.f32 %v2969, %v3184
        %v3285 = vadd.f32 %v2970, %v3195
        %v3286 = vadd.f32 %v2971, %v3198
        %v3287 = vadd.f32 %v2972, %v3209
        %v3288 = vadd.f32 %v2973, %v3212
        %v3289 = vadd.f32 %v2974, %v3223
        %v3290 = vadd.f32 %v2975, %v3226
        %v3291 = vadd.f32 %v2976, %v3237
        %v3292 = vadd.f32 %v2977, %v3240
        %v3293 = vadd.f32 %v2978, %v3251
        %v3294 = vadd.f32 %v2979, %v3254
        %s3295 = scalar_lea.vmem %s3, 20
        %v3296 = vld [vmem:[%s3295] sm:$0xf]
        %v3299 = vrot.slane %v1244, 1
        %v3300 = vsel %vm2227, %v2291, %v3299
        %v3301 = vrot.slane %v1245, 1
        %v3302 = vsel %vm2227, %v3299, %v3301
        %v3304 = vsel %vm534, %v3300, 0
        %v3307 = vsel %vm534, %v3302, 0
        %v3310 = vsel %vm649, %v3296, 0
        %3312 = vmatprep.subr.bf16.mxu0 0
        %3313 = vmatpush1.bf16.msra.mxu0 %v3310
        %3314 = vmatprep.subr.bf16.mxu0 0
        %3315 = vmatpush1.bf16.msra.mxu0 0
        %3316 = vmatprep.subr.bf16.mxu0 0
        %3317 = vmatpush1.bf16.msra.mxu0 0
        %3318 = vmatprep.subr.bf16.mxu0 0
        %3319 = vmatpush1.bf16.msra.mxu0 0
        %3320 = vmatprep.subr.bf16.mxu0 0
        %3321 = vmatpush1.bf16.msra.mxu0 0
        %3322 = vmatprep.subr.bf16.mxu0 0
        %3323 = vmatpush1.bf16.msra.mxu0 0
        %3324 = vmatprep.subr.bf16.mxu0 0
        %3325 = vmatpush1.bf16.msra.mxu0 0
        %3326 = vmatprep.subr.bf16.mxu0 0
        %3327 = vmatpush1.bf16.msra.mxu0 0
        %3328 = vmatprep.subr.bf16.mxu0 0
        %3329 = vmatpush1.bf16.msra.mxu0 0
        %3330 = vmatprep.subr.bf16.mxu0 0
        %3331 = vmatpush1.bf16.msra.mxu0 0
        %3332 = vmatprep.subr.bf16.mxu0 0
        %3333 = vmatpush1.bf16.msra.mxu0 0
        %3334 = vmatprep.subr.bf16.mxu0 0
        %3335 = vmatpush1.bf16.msra.mxu0 0
        %3336 = vmatprep.subr.bf16.mxu0 0
        %3337 = vmatpush1.bf16.msra.mxu0 0
        %3338 = vmatprep.subr.bf16.mxu0 0
        %3339 = vmatpush1.bf16.msra.mxu0 0
        %3340 = vmatprep.subr.bf16.mxu0 0
        %3341 = vmatpush1.bf16.msra.mxu0 0
        %3342 = vmatprep.subr.bf16.mxu0 0
        %3343 = vmatpush1.bf16.msra.mxu0 0
        %3344 = vmatprep.mubr.bf16.mxu0 0
        %3345 = vmatmul.mubr.bf16.gmra.mrb[0].mxu0 %v2300
        %v3346 = vpop.f32.mrb[0].mxu0
        %v3347 = vadd.f32 0.0, %v3346
        %v3348 = vpop.f32.mrb[0].mxu0
        %v3349 = vpop.f32.mrb[0].mxu0
        %v3350 = vadd.f32 0.0, %v3349
        %v3351 = vpop.f32.mrb[0].mxu0
        %3352 = vmatprep.mubr.bf16.mxu0 0
        %3353 = vmatmul.mubr.bf16.gmra.mrb[0].mxu0 %v2303
        %v3354 = vpop.f32.mrb[0].mxu0
        %v3355 = vpop.f32.mrb[0].mxu0
        %v3356 = vpop.f32.mrb[0].mxu0
        %v3357 = vpop.f32.mrb[0].mxu0
        %3358 = vmatprep.mubr.bf16.mxu0 0
        %3359 = vmatmul.mubr.bf16.gmra.mrb[0].mxu0 %v2306
        %v3360 = vpop.f32.mrb[0].mxu0
        %v3361 = vadd.f32 0.0, %v3360
        %v3362 = vpop.f32.mrb[0].mxu0
        %v3363 = vpop.f32.mrb[0].mxu0
        %v3364 = vadd.f32 0.0, %v3363
        %v3365 = vpop.f32.mrb[0].mxu0
        %3366 = vmatprep.mubr.bf16.mxu0 0
        %3367 = vmatmul.mubr.bf16.gmra.mrb[0].mxu0 %v2309
        %v3368 = vpop.f32.mrb[0].mxu0
        %v3369 = vpop.f32.mrb[0].mxu0
        %v3370 = vpop.f32.mrb[0].mxu0
        %v3371 = vpop.f32.mrb[0].mxu0
        %3372 = vmatprep.mubr.bf16.mxu0 0
        %3373 = vmatmul.mubr.bf16.gmra.mrb[0].mxu0 %v2312
        %v3374 = vpop.f32.mrb[0].mxu0
        %v3375 = vadd.f32 0.0, %v3374
        %v3376 = vpop.f32.mrb[0].mxu0
        %v3377 = vpop.f32.mrb[0].mxu0
        %v3378 = vadd.f32 0.0, %v3377
        %v3379 = vpop.f32.mrb[0].mxu0
        %3380 = vmatprep.mubr.bf16.mxu0 0
        %3381 = vmatmul.mubr.bf16.gmra.mrb[0].mxu0 %v2315
        %v3382 = vpop.f32.mrb[0].mxu0
        %v3383 = vpop.f32.mrb[0].mxu0
        %v3384 = vpop.f32.mrb[0].mxu0
        %v3385 = vpop.f32.mrb[0].mxu0
        %3386 = vmatprep.mubr.bf16.mxu0 0
        %3387 = vmatmul.mubr.bf16.gmra.mrb[0].mxu0 %v2318
        %v3388 = vpop.f32.mrb[0].mxu0
        %v3389 = vadd.f32 0.0, %v3388
        %v3390 = vpop.f32.mrb[0].mxu0
        %v3391 = vpop.f32.mrb[0].mxu0
        %v3392 = vadd.f32 0.0, %v3391
        %v3393 = vpop.f32.mrb[0].mxu0
        %3394 = vmatprep.mubr.bf16.mxu0 0
        %3395 = vmatmul.mubr.bf16.gmra.mrb[0].mxu0 %v2321
        %v3396 = vpop.f32.mrb[0].mxu0
        %v3397 = vpop.f32.mrb[0].mxu0
        %v3398 = vpop.f32.mrb[0].mxu0
        %v3399 = vpop.f32.mrb[0].mxu0
        %3400 = vmatprep.mubr.bf16.mxu0 0
        %3401 = vmatmul.mubr.bf16.gmra.mrb[0].mxu0 %v2324
        %v3402 = vpop.f32.mrb[0].mxu0
        %v3403 = vadd.f32 0.0, %v3402
        %v3404 = vpop.f32.mrb[0].mxu0
        %v3405 = vpop.f32.mrb[0].mxu0
        %v3406 = vadd.f32 0.0, %v3405
        %v3407 = vpop.f32.mrb[0].mxu0
        %3408 = vmatprep.mubr.bf16.mxu0 0
        %3409 = vmatmul.mubr.bf16.gmra.mrb[0].mxu0 %v2327
        %v3410 = vpop.f32.mrb[0].mxu0
        %v3411 = vpop.f32.mrb[0].mxu0
        %v3412 = vpop.f32.mrb[0].mxu0
        %v3413 = vpop.f32.mrb[0].mxu0
        %3414 = vmatprep.mubr.bf16.mxu0 0
        %3415 = vmatmul.mubr.bf16.gmra.mrb[0].mxu0 %v2330
        %v3416 = vpop.f32.mrb[0].mxu0
        %v3417 = vadd.f32 0.0, %v3416
        %v3418 = vpop.f32.mrb[0].mxu0
        %v3419 = vpop.f32.mrb[0].mxu0
        %v3420 = vadd.f32 0.0, %v3419
        %v3421 = vpop.f32.mrb[0].mxu0
        %3422 = vmatprep.mubr.bf16.mxu0 0
        %3423 = vmatmul.mubr.bf16.gmra.mrb[0].mxu0 %v2333
        %v3424 = vpop.f32.mrb[0].mxu0
        %v3425 = vpop.f32.mrb[0].mxu0
        %v3426 = vpop.f32.mrb[0].mxu0
        %v3427 = vpop.f32.mrb[0].mxu0
        %3428 = vmatprep.mubr.bf16.mxu0 0
        %3429 = vmatmul.mubr.bf16.gmra.mrb[0].mxu0 %v2336
        %v3430 = vpop.f32.mrb[0].mxu0
        %v3431 = vadd.f32 0.0, %v3430
        %v3432 = vpop.f32.mrb[0].mxu0
        %v3433 = vpop.f32.mrb[0].mxu0
        %v3434 = vadd.f32 0.0, %v3433
        %v3435 = vpop.f32.mrb[0].mxu0
        %3436 = vmatprep.mubr.bf16.mxu0 0
        %3437 = vmatmul.mubr.bf16.gmra.mrb[0].mxu0 %v2339
        %v3438 = vpop.f32.mrb[0].mxu0
        %v3439 = vpop.f32.mrb[0].mxu0
        %v3440 = vpop.f32.mrb[0].mxu0
        %v3441 = vpop.f32.mrb[0].mxu0
        %3442 = vmatprep.mubr.bf16.mxu0 0
        %3443 = vmatmul.mubr.bf16.gmra.mrb[0].mxu0 %v2342
        %v3444 = vpop.f32.mrb[0].mxu0
        %v3445 = vadd.f32 0.0, %v3444
        %v3446 = vpop.f32.mrb[0].mxu0
        %v3447 = vpop.f32.mrb[0].mxu0
        %v3448 = vadd.f32 0.0, %v3447
        %v3449 = vpop.f32.mrb[0].mxu0
        %3450 = vmatprep.mubr.bf16.mxu0 0
        %3451 = vmatmul.mubr.bf16.gmra.mrb[0].mxu0 %v2345
        %v3452 = vpop.f32.mrb[0].mxu0
        %v3453 = vpop.f32.mrb[0].mxu0
        %v3454 = vpop.f32.mrb[0].mxu0
        %v3455 = vpop.f32.mrb[0].mxu0
        %3456 = vmatprep.mubr.bf16.mxu0 0
        %3457 = vmatmul.mubr.bf16.gmra.mrb[0].mxu0 %v2348
        %v3458 = vpop.f32.mrb[0].mxu0
        %v3459 = vadd.f32 0.0, %v3458
        %v3460 = vpop.f32.mrb[0].mxu0
        %v3461 = vpop.f32.mrb[0].mxu0
        %v3462 = vadd.f32 0.0, %v3461
        %v3463 = vpop.f32.mrb[0].mxu0
        %3464 = vmatprep.mubr.bf16.mxu0 0
        %3465 = vmatmul.mubr.bf16.gmra.mrb[0].mxu0 %v2351
        %v3466 = vpop.f32.mrb[0].mxu0
        %v3467 = vpop.f32.mrb[0].mxu0
        %v3468 = vpop.f32.mrb[0].mxu0
        %v3469 = vpop.f32.mrb[0].mxu0
        %3470 = vmatprep.mubr.bf16.mxu0 0
        %3471 = vmatmul.mubr.bf16.gmra.mrb[0].mxu0 %v2354
        %v3472 = vpop.f32.mrb[0].mxu0
        %v3473 = vadd.f32 0.0, %v3472
        %v3474 = vpop.f32.mrb[0].mxu0
        %v3475 = vpop.f32.mrb[0].mxu0
        %v3476 = vadd.f32 0.0, %v3475
        %v3477 = vpop.f32.mrb[0].mxu0
        %3478 = vmatprep.mubr.bf16.mxu0 0
        %3479 = vmatmul.mubr.bf16.gmra.mrb[0].mxu0 %v2357
        %v3480 = vpop.f32.mrb[0].mxu0
        %v3481 = vpop.f32.mrb[0].mxu0
        %v3482 = vpop.f32.mrb[0].mxu0
        %v3483 = vpop.f32.mrb[0].mxu0
        %3484 = vmatprep.mubr.bf16.mxu0 0
        %3485 = vmatmul.mubr.bf16.gmra.mrb[0].mxu0 %v2360
        %v3486 = vpop.f32.mrb[0].mxu0
        %v3487 = vadd.f32 0.0, %v3486
        %v3488 = vpop.f32.mrb[0].mxu0
        %v3489 = vpop.f32.mrb[0].mxu0
        %v3490 = vadd.f32 0.0, %v3489
        %v3491 = vpop.f32.mrb[0].mxu0
        %3492 = vmatprep.mubr.bf16.mxu0 0
        %3493 = vmatmul.mubr.bf16.gmra.mrb[0].mxu0 %v2363
        %v3494 = vpop.f32.mrb[0].mxu0
        %v3495 = vpop.f32.mrb[0].mxu0
        %v3496 = vpop.f32.mrb[0].mxu0
        %v3497 = vpop.f32.mrb[0].mxu0
        %3498 = vmatprep.mubr.bf16.mxu0 0
        %3499 = vmatmul.mubr.bf16.gmra.mrb[0].mxu0 %v2366
        %v3500 = vpop.f32.mrb[0].mxu0
        %v3501 = vadd.f32 0.0, %v3500
        %v3502 = vpop.f32.mrb[0].mxu0
        %v3503 = vpop.f32.mrb[0].mxu0
        %v3504 = vadd.f32 0.0, %v3503
        %v3505 = vpop.f32.mrb[0].mxu0
        %3506 = vmatprep.mubr.bf16.mxu0 0
        %3507 = vmatmul.mubr.bf16.gmra.mrb[0].mxu0 %v2369
        %v3508 = vpop.f32.mrb[0].mxu0
        %v3509 = vpop.f32.mrb[0].mxu0
        %v3510 = vpop.f32.mrb[0].mxu0
        %v3511 = vpop.f32.mrb[0].mxu0
        %3512 = vmatprep.mubr.bf16.mxu0 0
        %3513 = vmatmul.mubr.bf16.gmra.mrb[0].mxu0 %v2372
        %v3514 = vpop.f32.mrb[0].mxu0
        %v3515 = vadd.f32 0.0, %v3514
        %v3516 = vpop.f32.mrb[0].mxu0
        %v3517 = vpop.f32.mrb[0].mxu0
        %v3518 = vadd.f32 0.0, %v3517
        %v3519 = vpop.f32.mrb[0].mxu0
        %3520 = vmatprep.mubr.bf16.mxu0 0
        %3521 = vmatmul.mubr.bf16.gmra.mrb[0].mxu0 %v2375
        %v3522 = vpop.f32.mrb[0].mxu0
        %v3523 = vpop.f32.mrb[0].mxu0
        %v3524 = vpop.f32.mrb[0].mxu0
        %v3525 = vpop.f32.mrb[0].mxu0
        %3526 = vmatprep.mubr.bf16.mxu0 0
        %3527 = vmatmul.mubr.bf16.gmra.mrb[0].mxu0 %v2378
        %v3528 = vpop.f32.mrb[0].mxu0
        %v3529 = vadd.f32 0.0, %v3528
        %v3530 = vpop.f32.mrb[0].mxu0
        %v3531 = vpop.f32.mrb[0].mxu0
        %v3532 = vadd.f32 0.0, %v3531
        %v3533 = vpop.f32.mrb[0].mxu0
        %3534 = vmatprep.mubr.bf16.mxu0 0
        %3535 = vmatmul.mubr.bf16.gmra.mrb[0].mxu0 %v2381
        %v3536 = vpop.f32.mrb[0].mxu0
        %v3537 = vpop.f32.mrb[0].mxu0
        %v3538 = vpop.f32.mrb[0].mxu0
        %v3539 = vpop.f32.mrb[0].mxu0
        %3540 = vmatprep.mubr.bf16.mxu0 0
        %3541 = vmatmul.mubr.bf16.gmra.mrb[0].mxu0 %v2384
        %v3542 = vpop.f32.mrb[0].mxu0
        %v3543 = vadd.f32 0.0, %v3542
        %v3544 = vpop.f32.mrb[0].mxu0
        %v3545 = vpop.f32.mrb[0].mxu0
        %v3546 = vadd.f32 0.0, %v3545
        %v3547 = vpop.f32.mrb[0].mxu0
        %3548 = vmatprep.mubr.bf16.mxu0 0
        %3549 = vmatmul.mubr.bf16.gmra.mrb[0].mxu0 %v2387
        %v3550 = vpop.f32.mrb[0].mxu0
        %v3551 = vpop.f32.mrb[0].mxu0
        %v3552 = vpop.f32.mrb[0].mxu0
        %v3553 = vpop.f32.mrb[0].mxu0
        %3554 = vmatprep.mubr.bf16.mxu0 0
        %3555 = vmatmul.mubr.bf16.gmra.mrb[0].mxu0 %v3304
        %v3556 = vpop.f32.mrb[0].mxu0
        %v3557 = vadd.f32 0.0, %v3556
        %v3558 = vpop.f32.mrb[0].mxu0
        %v3559 = vpop.f32.mrb[0].mxu0
        %v3560 = vadd.f32 0.0, %v3559
        %v3561 = vpop.f32.mrb[0].mxu0
        %3562 = vmatprep.mubr.bf16.mxu0 0
        %3563 = vmatmul.mubr.bf16.gmra.mrb[0].mxu0 %v3307
        %v3564 = vpop.f32.mrb[0].mxu0
        %v3565 = vpop.f32.mrb[0].mxu0
        %v3566 = vpop.f32.mrb[0].mxu0
        %v3567 = vpop.f32.mrb[0].mxu0
        %3568 = vdwg.mxu0
        %v3569 = vadd.f32 %v3263, %v3347
        %v3570 = vadd.f32 %v3264, %v3350
        %v3571 = vadd.f32 %v3265, %v3361
        %v3572 = vadd.f32 %v3266, %v3364
        %v3573 = vadd.f32 %v3267, %v3375
        %v3574 = vadd.f32 %v3268, %v3378
        %v3575 = vadd.f32 %v3269, %v3389
        %v3576 = vadd.f32 %v3270, %v3392
        %v3577 = vadd.f32 %v3271, %v3403
        %v3578 = vadd.f32 %v3272, %v3406
        %v3579 = vadd.f32 %v3273, %v3417
        %v3580 = vadd.f32 %v3274, %v3420
        %v3581 = vadd.f32 %v3275, %v3431
        %v3582 = vadd.f32 %v3276, %v3434
        %v3583 = vadd.f32 %v3277, %v3445
        %v3584 = vadd.f32 %v3278, %v3448
        %v3585 = vadd.f32 %v3279, %v3459
        %v3586 = vadd.f32 %v3280, %v3462
        %v3587 = vadd.f32 %v3281, %v3473
        %v3588 = vadd.f32 %v3282, %v3476
        %v3589 = vadd.f32 %v3283, %v3487
        %v3590 = vadd.f32 %v3284, %v3490
        %v3591 = vadd.f32 %v3285, %v3501
        %v3592 = vadd.f32 %v3286, %v3504
        %v3593 = vadd.f32 %v3287, %v3515
        %v3594 = vadd.f32 %v3288, %v3518
        %v3595 = vadd.f32 %v3289, %v3529
        %v3596 = vadd.f32 %v3290, %v3532
        %v3597 = vadd.f32 %v3291, %v3543
        %v3598 = vadd.f32 %v3292, %v3546
        %v3599 = vadd.f32 %v3293, %v3557
        %v3600 = vadd.f32 %v3294, %v3560
        %s3601 = scalar_lea.vmem %s3, 24
        %v3602 = vld [vmem:[%s3601] sm:$0xf]
        %v3603 = vsel %vm534, %v1245, 0
        %v3606 = vsel %vm534, %v1246, 0
        %v3609 = vsel %vm649, %v3602, 0
        %3611 = vmatprep.subr.bf16.mxu0 0
        %3612 = vmatpush1.bf16.msra.mxu0 %v3609
        %3613 = vmatprep.subr.bf16.mxu0 0
        %3614 = vmatpush1.bf16.msra.mxu0 0
        %3615 = vmatprep.subr.bf16.mxu0 0
        %3616 = vmatpush1.bf16.msra.mxu0 0
        %3617 = vmatprep.subr.bf16.mxu0 0
        %3618 = vmatpush1.bf16.msra.mxu0 0
        %3619 = vmatprep.subr.bf16.mxu0 0
        %3620 = vmatpush1.bf16.msra.mxu0 0
        %3621 = vmatprep.subr.bf16.mxu0 0
        %3622 = vmatpush1.bf16.msra.mxu0 0
        %3623 = vmatprep.subr.bf16.mxu0 0
        %3624 = vmatpush1.bf16.msra.mxu0 0
        %3625 = vmatprep.subr.bf16.mxu0 0
        %3626 = vmatpush1.bf16.msra.mxu0 0
        %3627 = vmatprep.subr.bf16.mxu0 0
        %3628 = vmatpush1.bf16.msra.mxu0 0
        %3629 = vmatprep.subr.bf16.mxu0 0
        %3630 = vmatpush1.bf16.msra.mxu0 0
        %3631 = vmatprep.subr.bf16.mxu0 0
        %3632 = vmatpush1.bf16.msra.mxu0 0
        %3633 = vmatprep.subr.bf16.mxu0 0
        %3634 = vmatpush1.bf16.msra.mxu0 0
        %3635 = vmatprep.subr.bf16.mxu0 0
        %3636 = vmatpush1.bf16.msra.mxu0 0
        %3637 = vmatprep.subr.bf16.mxu0 0
        %3638 = vmatpush1.bf16.msra.mxu0 0
        %3639 = vmatprep.subr.bf16.mxu0 0
        %3640 = vmatpush1.bf16.msra.mxu0 0
        %3641 = vmatprep.subr.bf16.mxu0 0
        %3642 = vmatpush1.bf16.msra.mxu0 0
        %3643 = vmatprep.mubr.bf16.mxu0 0
        %3644 = vmatmul.mubr.bf16.gmra.mrb[0].mxu0 %v1876
        %v3645 = vpop.f32.mrb[0].mxu0
        %v3646 = vadd.f32 0.0, %v3645
        %v3647 = vpop.f32.mrb[0].mxu0
        %v3648 = vpop.f32.mrb[0].mxu0
        %v3649 = vadd.f32 0.0, %v3648
        %v3650 = vpop.f32.mrb[0].mxu0
        %3651 = vmatprep.mubr.bf16.mxu0 0
        %3652 = vmatmul.mubr.bf16.gmra.mrb[0].mxu0 %v1878
        %v3653 = vpop.f32.mrb[0].mxu0
        %v3654 = vpop.f32.mrb[0].mxu0
        %v3655 = vpop.f32.mrb[0].mxu0
        %v3656 = vpop.f32.mrb[0].mxu0
        %3657 = vmatprep.mubr.bf16.mxu0 0
        %3658 = vmatmul.mubr.bf16.gmra.mrb[0].mxu0 %v1880
        %v3659 = vpop.f32.mrb[0].mxu0
        %v3660 = vadd.f32 0.0, %v3659
        %v3661 = vpop.f32.mrb[0].mxu0
        %v3662 = vpop.f32.mrb[0].mxu0
        %v3663 = vadd.f32 0.0, %v3662
        %v3664 = vpop.f32.mrb[0].mxu0
        %3665 = vmatprep.mubr.bf16.mxu0 0
        %3666 = vmatmul.mubr.bf16.gmra.mrb[0].mxu0 %v1882
        %v3667 = vpop.f32.mrb[0].mxu0
        %v3668 = vpop.f32.mrb[0].mxu0
        %v3669 = vpop.f32.mrb[0].mxu0
        %v3670 = vpop.f32.mrb[0].mxu0
        %3671 = vmatprep.mubr.bf16.mxu0 0
        %3672 = vmatmul.mubr.bf16.gmra.mrb[0].mxu0 %v1884
        %v3673 = vpop.f32.mrb[0].mxu0
        %v3674 = vadd.f32 0.0, %v3673
        %v3675 = vpop.f32.mrb[0].mxu0
        %v3676 = vpop.f32.mrb[0].mxu0
        %v3677 = vadd.f32 0.0, %v3676
        %v3678 = vpop.f32.mrb[0].mxu0
        %3679 = vmatprep.mubr.bf16.mxu0 0
        %3680 = vmatmul.mubr.bf16.gmra.mrb[0].mxu0 %v1886
        %v3681 = vpop.f32.mrb[0].mxu0
        %v3682 = vpop.f32.mrb[0].mxu0
        %v3683 = vpop.f32.mrb[0].mxu0
        %v3684 = vpop.f32.mrb[0].mxu0
        %3685 = vmatprep.mubr.bf16.mxu0 0
        %3686 = vmatmul.mubr.bf16.gmra.mrb[0].mxu0 %v1888
        %v3687 = vpop.f32.mrb[0].mxu0
        %v3688 = vadd.f32 0.0, %v3687
        %v3689 = vpop.f32.mrb[0].mxu0
        %v3690 = vpop.f32.mrb[0].mxu0
        %v3691 = vadd.f32 0.0, %v3690
        %v3692 = vpop.f32.mrb[0].mxu0
        %3693 = vmatprep.mubr.bf16.mxu0 0
        %3694 = vmatmul.mubr.bf16.gmra.mrb[0].mxu0 %v1890
        %v3695 = vpop.f32.mrb[0].mxu0
        %v3696 = vpop.f32.mrb[0].mxu0
        %v3697 = vpop.f32.mrb[0].mxu0
        %v3698 = vpop.f32.mrb[0].mxu0
        %3699 = vmatprep.mubr.bf16.mxu0 0
        %3700 = vmatmul.mubr.bf16.gmra.mrb[0].mxu0 %v1892
        %v3701 = vpop.f32.mrb[0].mxu0
        %v3702 = vadd.f32 0.0, %v3701
        %v3703 = vpop.f32.mrb[0].mxu0
        %v3704 = vpop.f32.mrb[0].mxu0
        %v3705 = vadd.f32 0.0, %v3704
        %v3706 = vpop.f32.mrb[0].mxu0
        %3707 = vmatprep.mubr.bf16.mxu0 0
        %3708 = vmatmul.mubr.bf16.gmra.mrb[0].mxu0 %v1894
        %v3709 = vpop.f32.mrb[0].mxu0
        %v3710 = vpop.f32.mrb[0].mxu0
        %v3711 = vpop.f32.mrb[0].mxu0
        %v3712 = vpop.f32.mrb[0].mxu0
        %3713 = vmatprep.mubr.bf16.mxu0 0
        %3714 = vmatmul.mubr.bf16.gmra.mrb[0].mxu0 %v1896
        %v3715 = vpop.f32.mrb[0].mxu0
        %v3716 = vadd.f32 0.0, %v3715
        %v3717 = vpop.f32.mrb[0].mxu0
        %v3718 = vpop.f32.mrb[0].mxu0
        %v3719 = vadd.f32 0.0, %v3718
        %v3720 = vpop.f32.mrb[0].mxu0
        %3721 = vmatprep.mubr.bf16.mxu0 0
        %3722 = vmatmul.mubr.bf16.gmra.mrb[0].mxu0 %v1898
        %v3723 = vpop.f32.mrb[0].mxu0
        %v3724 = vpop.f32.mrb[0].mxu0
        %v3725 = vpop.f32.mrb[0].mxu0
        %v3726 = vpop.f32.mrb[0].mxu0
        %3727 = vmatprep.mubr.bf16.mxu0 0
        %3728 = vmatmul.mubr.bf16.gmra.mrb[0].mxu0 %v1900
        %v3729 = vpop.f32.mrb[0].mxu0
        %v3730 = vadd.f32 0.0, %v3729
        %v3731 = vpop.f32.mrb[0].mxu0
        %v3732 = vpop.f32.mrb[0].mxu0
        %v3733 = vadd.f32 0.0, %v3732
        %v3734 = vpop.f32.mrb[0].mxu0
        %3735 = vmatprep.mubr.bf16.mxu0 0
        %3736 = vmatmul.mubr.bf16.gmra.mrb[0].mxu0 %v1902
        %v3737 = vpop.f32.mrb[0].mxu0
        %v3738 = vpop.f32.mrb[0].mxu0
        %v3739 = vpop.f32.mrb[0].mxu0
        %v3740 = vpop.f32.mrb[0].mxu0
        %3741 = vmatprep.mubr.bf16.mxu0 0
        %3742 = vmatmul.mubr.bf16.gmra.mrb[0].mxu0 %v1904
        %v3743 = vpop.f32.mrb[0].mxu0
        %v3744 = vadd.f32 0.0, %v3743
        %v3745 = vpop.f32.mrb[0].mxu0
        %v3746 = vpop.f32.mrb[0].mxu0
        %v3747 = vadd.f32 0.0, %v3746
        %v3748 = vpop.f32.mrb[0].mxu0
        %3749 = vmatprep.mubr.bf16.mxu0 0
        %3750 = vmatmul.mubr.bf16.gmra.mrb[0].mxu0 %v1906
        %v3751 = vpop.f32.mrb[0].mxu0
        %v3752 = vpop.f32.mrb[0].mxu0
        %v3753 = vpop.f32.mrb[0].mxu0
        %v3754 = vpop.f32.mrb[0].mxu0
        %3755 = vmatprep.mubr.bf16.mxu0 0
        %3756 = vmatmul.mubr.bf16.gmra.mrb[0].mxu0 %v1908
        %v3757 = vpop.f32.mrb[0].mxu0
        %v3758 = vadd.f32 0.0, %v3757
        %v3759 = vpop.f32.mrb[0].mxu0
        %v3760 = vpop.f32.mrb[0].mxu0
        %v3761 = vadd.f32 0.0, %v3760
        %v3762 = vpop.f32.mrb[0].mxu0
        %3763 = vmatprep.mubr.bf16.mxu0 0
        %3764 = vmatmul.mubr.bf16.gmra.mrb[0].mxu0 %v1910
        %v3765 = vpop.f32.mrb[0].mxu0
        %v3766 = vpop.f32.mrb[0].mxu0
        %v3767 = vpop.f32.mrb[0].mxu0
        %v3768 = vpop.f32.mrb[0].mxu0
        %3769 = vmatprep.mubr.bf16.mxu0 0
        %3770 = vmatmul.mubr.bf16.gmra.mrb[0].mxu0 %v1912
        %v3771 = vpop.f32.mrb[0].mxu0
        %v3772 = vadd.f32 0.0, %v3771
        %v3773 = vpop.f32.mrb[0].mxu0
        %v3774 = vpop.f32.mrb[0].mxu0
        %v3775 = vadd.f32 0.0, %v3774
        %v3776 = vpop.f32.mrb[0].mxu0
        %3777 = vmatprep.mubr.bf16.mxu0 0
        %3778 = vmatmul.mubr.bf16.gmra.mrb[0].mxu0 %v1914
        %v3779 = vpop.f32.mrb[0].mxu0
        %v3780 = vpop.f32.mrb[0].mxu0
        %v3781 = vpop.f32.mrb[0].mxu0
        %v3782 = vpop.f32.mrb[0].mxu0
        %3783 = vmatprep.mubr.bf16.mxu0 0
        %3784 = vmatmul.mubr.bf16.gmra.mrb[0].mxu0 %v1916
        %v3785 = vpop.f32.mrb[0].mxu0
        %v3786 = vadd.f32 0.0, %v3785
        %v3787 = vpop.f32.mrb[0].mxu0
        %v3788 = vpop.f32.mrb[0].mxu0
        %v3789 = vadd.f32 0.0, %v3788
        %v3790 = vpop.f32.mrb[0].mxu0
        %3791 = vmatprep.mubr.bf16.mxu0 0
        %3792 = vmatmul.mubr.bf16.gmra.mrb[0].mxu0 %v1918
        %v3793 = vpop.f32.mrb[0].mxu0
        %v3794 = vpop.f32.mrb[0].mxu0
        %v3795 = vpop.f32.mrb[0].mxu0
        %v3796 = vpop.f32.mrb[0].mxu0
        %3797 = vmatprep.mubr.bf16.mxu0 0
        %3798 = vmatmul.mubr.bf16.gmra.mrb[0].mxu0 %v1920
        %v3799 = vpop.f32.mrb[0].mxu0
        %v3800 = vadd.f32 0.0, %v3799
        %v3801 = vpop.f32.mrb[0].mxu0
        %v3802 = vpop.f32.mrb[0].mxu0
        %v3803 = vadd.f32 0.0, %v3802
        %v3804 = vpop.f32.mrb[0].mxu0
        %3805 = vmatprep.mubr.bf16.mxu0 0
        %3806 = vmatmul.mubr.bf16.gmra.mrb[0].mxu0 %v1922
        %v3807 = vpop.f32.mrb[0].mxu0
        %v3808 = vpop.f32.mrb[0].mxu0
        %v3809 = vpop.f32.mrb[0].mxu0
        %v3810 = vpop.f32.mrb[0].mxu0
        %3811 = vmatprep.mubr.bf16.mxu0 0
        %3812 = vmatmul.mubr.bf16.gmra.mrb[0].mxu0 %v1924
        %v3813 = vpop.f32.mrb[0].mxu0
        %v3814 = vadd.f32 0.0, %v3813
        %v3815 = vpop.f32.mrb[0].mxu0
        %v3816 = vpop.f32.mrb[0].mxu0
        %v3817 = vadd.f32 0.0, %v3816
        %v3818 = vpop.f32.mrb[0].mxu0
        %3819 = vmatprep.mubr.bf16.mxu0 0
        %3820 = vmatmul.mubr.bf16.gmra.mrb[0].mxu0 %v1926
        %v3821 = vpop.f32.mrb[0].mxu0
        %v3822 = vpop.f32.mrb[0].mxu0
        %v3823 = vpop.f32.mrb[0].mxu0
        %v3824 = vpop.f32.mrb[0].mxu0
        %3825 = vmatprep.mubr.bf16.mxu0 0
        %3826 = vmatmul.mubr.bf16.gmra.mrb[0].mxu0 %v1928
        %v3827 = vpop.f32.mrb[0].mxu0
        %v3828 = vadd.f32 0.0, %v3827
        %v3829 = vpop.f32.mrb[0].mxu0
        %v3830 = vpop.f32.mrb[0].mxu0
        %v3831 = vadd.f32 0.0, %v3830
        %v3832 = vpop.f32.mrb[0].mxu0
        %3833 = vmatprep.mubr.bf16.mxu0 0
        %3834 = vmatmul.mubr.bf16.gmra.mrb[0].mxu0 %v1930
        %v3835 = vpop.f32.mrb[0].mxu0
        %v3836 = vpop.f32.mrb[0].mxu0
        %v3837 = vpop.f32.mrb[0].mxu0
        %v3838 = vpop.f32.mrb[0].mxu0
        %3839 = vmatprep.mubr.bf16.mxu0 0
        %3840 = vmatmul.mubr.bf16.gmra.mrb[0].mxu0 %v2683
        %v3841 = vpop.f32.mrb[0].mxu0
        %v3842 = vadd.f32 0.0, %v3841
        %v3843 = vpop.f32.mrb[0].mxu0
        %v3844 = vpop.f32.mrb[0].mxu0
        %v3845 = vadd.f32 0.0, %v3844
        %v3846 = vpop.f32.mrb[0].mxu0
        %3847 = vmatprep.mubr.bf16.mxu0 0
        %3848 = vmatmul.mubr.bf16.gmra.mrb[0].mxu0 %v2686
        %v3849 = vpop.f32.mrb[0].mxu0
        %v3850 = vpop.f32.mrb[0].mxu0
        %v3851 = vpop.f32.mrb[0].mxu0
        %v3852 = vpop.f32.mrb[0].mxu0
        %3853 = vmatprep.mubr.bf16.mxu0 0
        %3854 = vmatmul.mubr.bf16.gmra.mrb[0].mxu0 %v3603
        %v3855 = vpop.f32.mrb[0].mxu0
        %v3856 = vadd.f32 0.0, %v3855
        %v3857 = vpop.f32.mrb[0].mxu0
        %v3858 = vpop.f32.mrb[0].mxu0
        %v3859 = vadd.f32 0.0, %v3858
        %v3860 = vpop.f32.mrb[0].mxu0
        %3861 = vmatprep.mubr.bf16.mxu0 0
        %3862 = vmatmul.mubr.bf16.gmra.mrb[0].mxu0 %v3606
        %v3863 = vpop.f32.mrb[0].mxu0
        %v3864 = vpop.f32.mrb[0].mxu0
        %v3865 = vpop.f32.mrb[0].mxu0
        %v3866 = vpop.f32.mrb[0].mxu0
        %3867 = vdwg.mxu0
        %v3868 = vadd.f32 %v3569, %v3646
        %v3869 = vadd.f32 %v3570, %v3649
        %v3870 = vadd.f32 %v3571, %v3660
        %v3871 = vadd.f32 %v3572, %v3663
        %v3872 = vadd.f32 %v3573, %v3674
        %v3873 = vadd.f32 %v3574, %v3677
        %v3874 = vadd.f32 %v3575, %v3688
        %v3875 = vadd.f32 %v3576, %v3691
        %v3876 = vadd.f32 %v3577, %v3702
        %v3877 = vadd.f32 %v3578, %v3705
        %v3878 = vadd.f32 %v3579, %v3716
        %v3879 = vadd.f32 %v3580, %v3719
        %v3880 = vadd.f32 %v3581, %v3730
        %v3881 = vadd.f32 %v3582, %v3733
        %v3882 = vadd.f32 %v3583, %v3744
        %v3883 = vadd.f32 %v3584, %v3747
        %v3884 = vadd.f32 %v3585, %v3758
        %v3885 = vadd.f32 %v3586, %v3761
        %v3886 = vadd.f32 %v3587, %v3772
        %v3887 = vadd.f32 %v3588, %v3775
        %v3888 = vadd.f32 %v3589, %v3786
        %v3889 = vadd.f32 %v3590, %v3789
        %v3890 = vadd.f32 %v3591, %v3800
        %v3891 = vadd.f32 %v3592, %v3803
        %v3892 = vadd.f32 %v3593, %v3814
        %v3893 = vadd.f32 %v3594, %v3817
        %v3894 = vadd.f32 %v3595, %v3828
        %v3895 = vadd.f32 %v3596, %v3831
        %v3896 = vadd.f32 %v3597, %v3842
        %v3897 = vadd.f32 %v3598, %v3845
        %v3898 = vadd.f32 %v3599, %v3856
        %v3899 = vadd.f32 %v3600, %v3859
        %s3900 = scalar_lea.vmem %s3, 28
        %v3901 = vld [vmem:[%s3900] sm:$0xf]
        %v3902 = vshrl.u32 %v1245, 16
        %v3904 = vor.u32 %v3902, %v2995
        %v3905 = vshll.u32 %v1246, 16
        %v3907 = vrot.slane %v3905, 1
        %v3908 = vsel %vm1251, %v3904, %v3907
        %v3909 = vshrl.u32 %v1246, 16
        %v3911 = vor.u32 %v3909, %v3907
        %v3913 = vshll.u32 %v1247, 16
        %v3915 = vrot.slane %v3913, 1
        %v3916 = vsel %vm1251, %v3911, %v3915
        %v3918 = vsel %vm534, %v3908, 0
        %v3921 = vsel %vm534, %v3916, 0
        %v3924 = vsel %vm649, %v3901, 0
        %3926 = vmatprep.subr.bf16.mxu0 0
        %3927 = vmatpush1.bf16.msra.mxu0 %v3924
        %3928 = vmatprep.subr.bf16.mxu0 0
        %3929 = vmatpush1.bf16.msra.mxu0 0
        %3930 = vmatprep.subr.bf16.mxu0 0
        %3931 = vmatpush1.bf16.msra.mxu0 0
        %3932 = vmatprep.subr.bf16.mxu0 0
        %3933 = vmatpush1.bf16.msra.mxu0 0
        %3934 = vmatprep.subr.bf16.mxu0 0
        %3935 = vmatpush1.bf16.msra.mxu0 0
        %3936 = vmatprep.subr.bf16.mxu0 0
        %3937 = vmatpush1.bf16.msra.mxu0 0
        %3938 = vmatprep.subr.bf16.mxu0 0
        %3939 = vmatpush1.bf16.msra.mxu0 0
        %3940 = vmatprep.subr.bf16.mxu0 0
        %3941 = vmatpush1.bf16.msra.mxu0 0
        %3942 = vmatprep.subr.bf16.mxu0 0
        %3943 = vmatpush1.bf16.msra.mxu0 0
        %3944 = vmatprep.subr.bf16.mxu0 0
        %3945 = vmatpush1.bf16.msra.mxu0 0
        %3946 = vmatprep.subr.bf16.mxu0 0
        %3947 = vmatpush1.bf16.msra.mxu0 0
        %3948 = vmatprep.subr.bf16.mxu0 0
        %3949 = vmatpush1.bf16.msra.mxu0 0
        %3950 = vmatprep.subr.bf16.mxu0 0
        %3951 = vmatpush1.bf16.msra.mxu0 0
        %3952 = vmatprep.subr.bf16.mxu0 0
        %3953 = vmatpush1.bf16.msra.mxu0 0
        %3954 = vmatprep.subr.bf16.mxu0 0
        %3955 = vmatpush1.bf16.msra.mxu0 0
        %3956 = vmatprep.subr.bf16.mxu0 0
        %3957 = vmatpush1.bf16.msra.mxu0 0
        %3958 = vmatprep.mubr.bf16.mxu0 0
        %3959 = vmatmul.mubr.bf16.gmra.mrb[0].mxu0 %v1525
        %v3960 = vpop.f32.mrb[0].mxu0
        %v3961 = vadd.f32 0.0, %v3960
        %v3962 = vpop.f32.mrb[0].mxu0
        %v3963 = vpop.f32.mrb[0].mxu0
        %v3964 = vadd.f32 0.0, %v3963
        %v3965 = vpop.f32.mrb[0].mxu0
        %3966 = vmatprep.mubr.bf16.mxu0 0
        %3967 = vmatmul.mubr.bf16.gmra.mrb[0].mxu0 %v1528
        %v3968 = vpop.f32.mrb[0].mxu0
        %v3969 = vpop.f32.mrb[0].mxu0
        %v3970 = vpop.f32.mrb[0].mxu0
        %v3971 = vpop.f32.mrb[0].mxu0
        %3972 = vmatprep.mubr.bf16.mxu0 0
        %3973 = vmatmul.mubr.bf16.gmra.mrb[0].mxu0 %v1531
        %v3974 = vpop.f32.mrb[0].mxu0
        %v3975 = vadd.f32 0.0, %v3974
        %v3976 = vpop.f32.mrb[0].mxu0
        %v3977 = vpop.f32.mrb[0].mxu0
        %v3978 = vadd.f32 0.0, %v3977
        %v3979 = vpop.f32.mrb[0].mxu0
        %3980 = vmatprep.mubr.bf16.mxu0 0
        %3981 = vmatmul.mubr.bf16.gmra.mrb[0].mxu0 %v1534
        %v3982 = vpop.f32.mrb[0].mxu0
        %v3983 = vpop.f32.mrb[0].mxu0
        %v3984 = vpop.f32.mrb[0].mxu0
        %v3985 = vpop.f32.mrb[0].mxu0
        %3986 = vmatprep.mubr.bf16.mxu0 0
        %3987 = vmatmul.mubr.bf16.gmra.mrb[0].mxu0 %v1537
        %v3988 = vpop.f32.mrb[0].mxu0
        %v3989 = vadd.f32 0.0, %v3988
        %v3990 = vpop.f32.mrb[0].mxu0
        %v3991 = vpop.f32.mrb[0].mxu0
        %v3992 = vadd.f32 0.0, %v3991
        %v3993 = vpop.f32.mrb[0].mxu0
        %3994 = vmatprep.mubr.bf16.mxu0 0
        %3995 = vmatmul.mubr.bf16.gmra.mrb[0].mxu0 %v1540
        %v3996 = vpop.f32.mrb[0].mxu0
        %v3997 = vpop.f32.mrb[0].mxu0
        %v3998 = vpop.f32.mrb[0].mxu0
        %v3999 = vpop.f32.mrb[0].mxu0
        %4000 = vmatprep.mubr.bf16.mxu0 0
        %4001 = vmatmul.mubr.bf16.gmra.mrb[0].mxu0 %v1543
        %v4002 = vpop.f32.mrb[0].mxu0
        %v4003 = vadd.f32 0.0, %v4002
        %v4004 = vpop.f32.mrb[0].mxu0
        %v4005 = vpop.f32.mrb[0].mxu0
        %v4006 = vadd.f32 0.0, %v4005
        %v4007 = vpop.f32.mrb[0].mxu0
        %4008 = vmatprep.mubr.bf16.mxu0 0
        %4009 = vmatmul.mubr.bf16.gmra.mrb[0].mxu0 %v1546
        %v4010 = vpop.f32.mrb[0].mxu0
        %v4011 = vpop.f32.mrb[0].mxu0
        %v4012 = vpop.f32.mrb[0].mxu0
        %v4013 = vpop.f32.mrb[0].mxu0
        %4014 = vmatprep.mubr.bf16.mxu0 0
        %4015 = vmatmul.mubr.bf16.gmra.mrb[0].mxu0 %v1549
        %v4016 = vpop.f32.mrb[0].mxu0
        %v4017 = vadd.f32 0.0, %v4016
        %v4018 = vpop.f32.mrb[0].mxu0
        %v4019 = vpop.f32.mrb[0].mxu0
        %v4020 = vadd.f32 0.0, %v4019
        %v4021 = vpop.f32.mrb[0].mxu0
        %4022 = vmatprep.mubr.bf16.mxu0 0
        %4023 = vmatmul.mubr.bf16.gmra.mrb[0].mxu0 %v1552
        %v4024 = vpop.f32.mrb[0].mxu0
        %v4025 = vpop.f32.mrb[0].mxu0
        %v4026 = vpop.f32.mrb[0].mxu0
        %v4027 = vpop.f32.mrb[0].mxu0
        %4028 = vmatprep.mubr.bf16.mxu0 0
        %4029 = vmatmul.mubr.bf16.gmra.mrb[0].mxu0 %v1555
        %v4030 = vpop.f32.mrb[0].mxu0
        %v4031 = vadd.f32 0.0, %v4030
        %v4032 = vpop.f32.mrb[0].mxu0
        %v4033 = vpop.f32.mrb[0].mxu0
        %v4034 = vadd.f32 0.0, %v4033
        %v4035 = vpop.f32.mrb[0].mxu0
        %4036 = vmatprep.mubr.bf16.mxu0 0
        %4037 = vmatmul.mubr.bf16.gmra.mrb[0].mxu0 %v1558
        %v4038 = vpop.f32.mrb[0].mxu0
        %v4039 = vpop.f32.mrb[0].mxu0
        %v4040 = vpop.f32.mrb[0].mxu0
        %v4041 = vpop.f32.mrb[0].mxu0
        %4042 = vmatprep.mubr.bf16.mxu0 0
        %4043 = vmatmul.mubr.bf16.gmra.mrb[0].mxu0 %v1561
        %v4044 = vpop.f32.mrb[0].mxu0
        %v4045 = vadd.f32 0.0, %v4044
        %v4046 = vpop.f32.mrb[0].mxu0
        %v4047 = vpop.f32.mrb[0].mxu0
        %v4048 = vadd.f32 0.0, %v4047
        %v4049 = vpop.f32.mrb[0].mxu0
        %4050 = vmatprep.mubr.bf16.mxu0 0
        %4051 = vmatmul.mubr.bf16.gmra.mrb[0].mxu0 %v1564
        %v4052 = vpop.f32.mrb[0].mxu0
        %v4053 = vpop.f32.mrb[0].mxu0
        %v4054 = vpop.f32.mrb[0].mxu0
        %v4055 = vpop.f32.mrb[0].mxu0
        %4056 = vmatprep.mubr.bf16.mxu0 0
        %4057 = vmatmul.mubr.bf16.gmra.mrb[0].mxu0 %v1567
        %v4058 = vpop.f32.mrb[0].mxu0
        %v4059 = vadd.f32 0.0, %v4058
        %v4060 = vpop.f32.mrb[0].mxu0
        %v4061 = vpop.f32.mrb[0].mxu0
        %v4062 = vadd.f32 0.0, %v4061
        %v4063 = vpop.f32.mrb[0].mxu0
        %4064 = vmatprep.mubr.bf16.mxu0 0
        %4065 = vmatmul.mubr.bf16.gmra.mrb[0].mxu0 %v1570
        %v4066 = vpop.f32.mrb[0].mxu0
        %v4067 = vpop.f32.mrb[0].mxu0
        %v4068 = vpop.f32.mrb[0].mxu0
        %v4069 = vpop.f32.mrb[0].mxu0
        %4070 = vmatprep.mubr.bf16.mxu0 0
        %4071 = vmatmul.mubr.bf16.gmra.mrb[0].mxu0 %v1573
        %v4072 = vpop.f32.mrb[0].mxu0
        %v4073 = vadd.f32 0.0, %v4072
        %v4074 = vpop.f32.mrb[0].mxu0
        %v4075 = vpop.f32.mrb[0].mxu0
        %v4076 = vadd.f32 0.0, %v4075
        %v4077 = vpop.f32.mrb[0].mxu0
        %4078 = vmatprep.mubr.bf16.mxu0 0
        %4079 = vmatmul.mubr.bf16.gmra.mrb[0].mxu0 %v1576
        %v4080 = vpop.f32.mrb[0].mxu0
        %v4081 = vpop.f32.mrb[0].mxu0
        %v4082 = vpop.f32.mrb[0].mxu0
        %v4083 = vpop.f32.mrb[0].mxu0
        %4084 = vmatprep.mubr.bf16.mxu0 0
        %4085 = vmatmul.mubr.bf16.gmra.mrb[0].mxu0 %v1579
        %v4086 = vpop.f32.mrb[0].mxu0
        %v4087 = vadd.f32 0.0, %v4086
        %v4088 = vpop.f32.mrb[0].mxu0
        %v4089 = vpop.f32.mrb[0].mxu0
        %v4090 = vadd.f32 0.0, %v4089
        %v4091 = vpop.f32.mrb[0].mxu0
        %4092 = vmatprep.mubr.bf16.mxu0 0
        %4093 = vmatmul.mubr.bf16.gmra.mrb[0].mxu0 %v1582
        %v4094 = vpop.f32.mrb[0].mxu0
        %v4095 = vpop.f32.mrb[0].mxu0
        %v4096 = vpop.f32.mrb[0].mxu0
        %v4097 = vpop.f32.mrb[0].mxu0
        %4098 = vmatprep.mubr.bf16.mxu0 0
        %4099 = vmatmul.mubr.bf16.gmra.mrb[0].mxu0 %v1585
        %v4100 = vpop.f32.mrb[0].mxu0
        %v4101 = vadd.f32 0.0, %v4100
        %v4102 = vpop.f32.mrb[0].mxu0
        %v4103 = vpop.f32.mrb[0].mxu0
        %v4104 = vadd.f32 0.0, %v4103
        %v4105 = vpop.f32.mrb[0].mxu0
        %4106 = vmatprep.mubr.bf16.mxu0 0
        %4107 = vmatmul.mubr.bf16.gmra.mrb[0].mxu0 %v1588
        %v4108 = vpop.f32.mrb[0].mxu0
        %v4109 = vpop.f32.mrb[0].mxu0
        %v4110 = vpop.f32.mrb[0].mxu0
        %v4111 = vpop.f32.mrb[0].mxu0
        %4112 = vmatprep.mubr.bf16.mxu0 0
        %4113 = vmatmul.mubr.bf16.gmra.mrb[0].mxu0 %v1591
        %v4114 = vpop.f32.mrb[0].mxu0
        %v4115 = vadd.f32 0.0, %v4114
        %v4116 = vpop.f32.mrb[0].mxu0
        %v4117 = vpop.f32.mrb[0].mxu0
        %v4118 = vadd.f32 0.0, %v4117
        %v4119 = vpop.f32.mrb[0].mxu0
        %4120 = vmatprep.mubr.bf16.mxu0 0
        %4121 = vmatmul.mubr.bf16.gmra.mrb[0].mxu0 %v1594
        %v4122 = vpop.f32.mrb[0].mxu0
        %v4123 = vpop.f32.mrb[0].mxu0
        %v4124 = vpop.f32.mrb[0].mxu0
        %v4125 = vpop.f32.mrb[0].mxu0
        %4126 = vmatprep.mubr.bf16.mxu0 0
        %4127 = vmatmul.mubr.bf16.gmra.mrb[0].mxu0 %v1597
        %v4128 = vpop.f32.mrb[0].mxu0
        %v4129 = vadd.f32 0.0, %v4128
        %v4130 = vpop.f32.mrb[0].mxu0
        %v4131 = vpop.f32.mrb[0].mxu0
        %v4132 = vadd.f32 0.0, %v4131
        %v4133 = vpop.f32.mrb[0].mxu0
        %4134 = vmatprep.mubr.bf16.mxu0 0
        %4135 = vmatmul.mubr.bf16.gmra.mrb[0].mxu0 %v1600
        %v4136 = vpop.f32.mrb[0].mxu0
        %v4137 = vpop.f32.mrb[0].mxu0
        %v4138 = vpop.f32.mrb[0].mxu0
        %v4139 = vpop.f32.mrb[0].mxu0
        %4140 = vmatprep.mubr.bf16.mxu0 0
        %4141 = vmatmul.mubr.bf16.gmra.mrb[0].mxu0 %v1603
        %v4142 = vpop.f32.mrb[0].mxu0
        %v4143 = vadd.f32 0.0, %v4142
        %v4144 = vpop.f32.mrb[0].mxu0
        %v4145 = vpop.f32.mrb[0].mxu0
        %v4146 = vadd.f32 0.0, %v4145
        %v4147 = vpop.f32.mrb[0].mxu0
        %4148 = vmatprep.mubr.bf16.mxu0 0
        %4149 = vmatmul.mubr.bf16.gmra.mrb[0].mxu0 %v1606
        %v4150 = vpop.f32.mrb[0].mxu0
        %v4151 = vpop.f32.mrb[0].mxu0
        %v4152 = vpop.f32.mrb[0].mxu0
        %v4153 = vpop.f32.mrb[0].mxu0
        %4154 = vmatprep.mubr.bf16.mxu0 0
        %4155 = vmatmul.mubr.bf16.gmra.mrb[0].mxu0 %v2998
        %v4156 = vpop.f32.mrb[0].mxu0
        %v4157 = vadd.f32 0.0, %v4156
        %v4158 = vpop.f32.mrb[0].mxu0
        %v4159 = vpop.f32.mrb[0].mxu0
        %v4160 = vadd.f32 0.0, %v4159
        %v4161 = vpop.f32.mrb[0].mxu0
        %4162 = vmatprep.mubr.bf16.mxu0 0
        %4163 = vmatmul.mubr.bf16.gmra.mrb[0].mxu0 %v3001
        %v4164 = vpop.f32.mrb[0].mxu0
        %v4165 = vpop.f32.mrb[0].mxu0
        %v4166 = vpop.f32.mrb[0].mxu0
        %v4167 = vpop.f32.mrb[0].mxu0
        %4168 = vmatprep.mubr.bf16.mxu0 0
        %4169 = vmatmul.mubr.bf16.gmra.mrb[0].mxu0 %v3918
        %v4170 = vpop.f32.mrb[0].mxu0
        %v4171 = vadd.f32 0.0, %v4170
        %v4172 = vpop.f32.mrb[0].mxu0
        %v4173 = vpop.f32.mrb[0].mxu0
        %v4174 = vadd.f32 0.0, %v4173
        %v4175 = vpop.f32.mrb[0].mxu0
        %4176 = vmatprep.mubr.bf16.mxu0 0
        %4177 = vmatmul.mubr.bf16.gmra.mrb[0].mxu0 %v3921
        %v4178 = vpop.f32.mrb[0].mxu0
        %v4179 = vpop.f32.mrb[0].mxu0
        %v4180 = vpop.f32.mrb[0].mxu0
        %v4181 = vpop.f32.mrb[0].mxu0
        %4182 = vdwg.mxu0
        %v4183 = vadd.f32 %v3868, %v3961
        %v4184 = vadd.f32 %v3869, %v3964
        %v4185 = vadd.f32 %v3870, %v3975
        %v4186 = vadd.f32 %v3871, %v3978
        %v4187 = vadd.f32 %v3872, %v3989
        %v4188 = vadd.f32 %v3873, %v3992
        %v4189 = vadd.f32 %v3874, %v4003
        %v4190 = vadd.f32 %v3875, %v4006
        %v4191 = vadd.f32 %v3876, %v4017
        %v4192 = vadd.f32 %v3877, %v4020
        %v4193 = vadd.f32 %v3878, %v4031
        %v4194 = vadd.f32 %v3879, %v4034
        %v4195 = vadd.f32 %v3880, %v4045
        %v4196 = vadd.f32 %v3881, %v4048
        %v4197 = vadd.f32 %v3882, %v4059
        %v4198 = vadd.f32 %v3883, %v4062
        %v4199 = vadd.f32 %v3884, %v4073
        %v4200 = vadd.f32 %v3885, %v4076
        %v4201 = vadd.f32 %v3886, %v4087
        %v4202 = vadd.f32 %v3887, %v4090
        %v4203 = vadd.f32 %v3888, %v4101
        %v4204 = vadd.f32 %v3889, %v4104
        %v4205 = vadd.f32 %v3890, %v4115
        %v4206 = vadd.f32 %v3891, %v4118
        %v4207 = vadd.f32 %v3892, %v4129
        %v4208 = vadd.f32 %v3893, %v4132
        %v4209 = vadd.f32 %v3894, %v4143
        %v4210 = vadd.f32 %v3895, %v4146
        %v4211 = vadd.f32 %v3896, %v4157
        %v4212 = vadd.f32 %v3897, %v4160
        %v4213 = vadd.f32 %v3898, %v4171
        %v4214 = vadd.f32 %v3899, %v4174
        %s4215 = scalar_lea.vmem %s3, 32
        %v4216 = vld [vmem:[%s4215] sm:$0xf]
        %v4219 = vrot.slane %v1246, 1
        %v4220 = vsel %vm2227, %v3301, %v4219
        %v4221 = vrot.slane %v1247, 1
        %v4222 = vsel %vm2227, %v4219, %v4221
        %v4224 = vsel %vm534, %v4220, 0
        %v4227 = vsel %vm534, %v4222, 0
        %v4230 = vsel %vm649, %v4216, 0
        %4232 = vmatprep.subr.bf16.mxu0 0
        %4233 = vmatpush1.bf16.msra.mxu0 %v4230
        %4234 = vmatprep.subr.bf16.mxu0 0
        %4235 = vmatpush1.bf16.msra.mxu0 0
        %4236 = vmatprep.subr.bf16.mxu0 0
        %4237 = vmatpush1.bf16.msra.mxu0 0
        %4238 = vmatprep.subr.bf16.mxu0 0
        %4239 = vmatpush1.bf16.msra.mxu0 0
        %4240 = vmatprep.subr.bf16.mxu0 0
        %4241 = vmatpush1.bf16.msra.mxu0 0
        %4242 = vmatprep.subr.bf16.mxu0 0
        %4243 = vmatpush1.bf16.msra.mxu0 0
        %4244 = vmatprep.subr.bf16.mxu0 0
        %4245 = vmatpush1.bf16.msra.mxu0 0
        %4246 = vmatprep.subr.bf16.mxu0 0
        %4247 = vmatpush1.bf16.msra.mxu0 0
        %4248 = vmatprep.subr.bf16.mxu0 0
        %4249 = vmatpush1.bf16.msra.mxu0 0
        %4250 = vmatprep.subr.bf16.mxu0 0
        %4251 = vmatpush1.bf16.msra.mxu0 0
        %4252 = vmatprep.subr.bf16.mxu0 0
        %4253 = vmatpush1.bf16.msra.mxu0 0
        %4254 = vmatprep.subr.bf16.mxu0 0
        %4255 = vmatpush1.bf16.msra.mxu0 0
        %4256 = vmatprep.subr.bf16.mxu0 0
        %4257 = vmatpush1.bf16.msra.mxu0 0
        %4258 = vmatprep.subr.bf16.mxu0 0
        %4259 = vmatpush1.bf16.msra.mxu0 0
        %4260 = vmatprep.subr.bf16.mxu0 0
        %4261 = vmatpush1.bf16.msra.mxu0 0
        %4262 = vmatprep.subr.bf16.mxu0 0
        %4263 = vmatpush1.bf16.msra.mxu0 0
        %4264 = vmatprep.mubr.bf16.mxu0 0
        %4265 = vmatmul.mubr.bf16.gmra.mrb[0].mxu0 %v2306
        %v4266 = vpop.f32.mrb[0].mxu0
        %v4267 = vadd.f32 0.0, %v4266
        %v4268 = vpop.f32.mrb[0].mxu0
        %v4269 = vpop.f32.mrb[0].mxu0
        %v4270 = vadd.f32 0.0, %v4269
        %v4271 = vpop.f32.mrb[0].mxu0
        %4272 = vmatprep.mubr.bf16.mxu0 0
        %4273 = vmatmul.mubr.bf16.gmra.mrb[0].mxu0 %v2309
        %v4274 = vpop.f32.mrb[0].mxu0
        %v4275 = vpop.f32.mrb[0].mxu0
        %v4276 = vpop.f32.mrb[0].mxu0
        %v4277 = vpop.f32.mrb[0].mxu0
        %4278 = vmatprep.mubr.bf16.mxu0 0
        %4279 = vmatmul.mubr.bf16.gmra.mrb[0].mxu0 %v2312
        %v4280 = vpop.f32.mrb[0].mxu0
        %v4281 = vadd.f32 0.0, %v4280
        %v4282 = vpop.f32.mrb[0].mxu0
        %v4283 = vpop.f32.mrb[0].mxu0
        %v4284 = vadd.f32 0.0, %v4283
        %v4285 = vpop.f32.mrb[0].mxu0
        %4286 = vmatprep.mubr.bf16.mxu0 0
        %4287 = vmatmul.mubr.bf16.gmra.mrb[0].mxu0 %v2315
        %v4288 = vpop.f32.mrb[0].mxu0
        %v4289 = vpop.f32.mrb[0].mxu0
        %v4290 = vpop.f32.mrb[0].mxu0
        %v4291 = vpop.f32.mrb[0].mxu0
        %4292 = vmatprep.mubr.bf16.mxu0 0
        %4293 = vmatmul.mubr.bf16.gmra.mrb[0].mxu0 %v2318
        %v4294 = vpop.f32.mrb[0].mxu0
        %v4295 = vadd.f32 0.0, %v4294
        %v4296 = vpop.f32.mrb[0].mxu0
        %v4297 = vpop.f32.mrb[0].mxu0
        %v4298 = vadd.f32 0.0, %v4297
        %v4299 = vpop.f32.mrb[0].mxu0
        %4300 = vmatprep.mubr.bf16.mxu0 0
        %4301 = vmatmul.mubr.bf16.gmra.mrb[0].mxu0 %v2321
        %v4302 = vpop.f32.mrb[0].mxu0
        %v4303 = vpop.f32.mrb[0].mxu0
        %v4304 = vpop.f32.mrb[0].mxu0
        %v4305 = vpop.f32.mrb[0].mxu0
        %4306 = vmatprep.mubr.bf16.mxu0 0
        %4307 = vmatmul.mubr.bf16.gmra.mrb[0].mxu0 %v2324
        %v4308 = vpop.f32.mrb[0].mxu0
        %v4309 = vadd.f32 0.0, %v4308
        %v4310 = vpop.f32.mrb[0].mxu0
        %v4311 = vpop.f32.mrb[0].mxu0
        %v4312 = vadd.f32 0.0, %v4311
        %v4313 = vpop.f32.mrb[0].mxu0
        %4314 = vmatprep.mubr.bf16.mxu0 0
        %4315 = vmatmul.mubr.bf16.gmra.mrb[0].mxu0 %v2327
        %v4316 = vpop.f32.mrb[0].mxu0
        %v4317 = vpop.f32.mrb[0].mxu0
        %v4318 = vpop.f32.mrb[0].mxu0
        %v4319 = vpop.f32.mrb[0].mxu0
        %4320 = vmatprep.mubr.bf16.mxu0 0
        %4321 = vmatmul.mubr.bf16.gmra.mrb[0].mxu0 %v2330
        %v4322 = vpop.f32.mrb[0].mxu0
        %v4323 = vadd.f32 0.0, %v4322
        %v4324 = vpop.f32.mrb[0].mxu0
        %v4325 = vpop.f32.mrb[0].mxu0
        %v4326 = vadd.f32 0.0, %v4325
        %v4327 = vpop.f32.mrb[0].mxu0
        %4328 = vmatprep.mubr.bf16.mxu0 0
        %4329 = vmatmul.mubr.bf16.gmra.mrb[0].mxu0 %v2333
        %v4330 = vpop.f32.mrb[0].mxu0
        %v4331 = vpop.f32.mrb[0].mxu0
        %v4332 = vpop.f32.mrb[0].mxu0
        %v4333 = vpop.f32.mrb[0].mxu0
        %4334 = vmatprep.mubr.bf16.mxu0 0
        %4335 = vmatmul.mubr.bf16.gmra.mrb[0].mxu0 %v2336
        %v4336 = vpop.f32.mrb[0].mxu0
        %v4337 = vadd.f32 0.0, %v4336
        %v4338 = vpop.f32.mrb[0].mxu0
        %v4339 = vpop.f32.mrb[0].mxu0
        %v4340 = vadd.f32 0.0, %v4339
        %v4341 = vpop.f32.mrb[0].mxu0
        %4342 = vmatprep.mubr.bf16.mxu0 0
        %4343 = vmatmul.mubr.bf16.gmra.mrb[0].mxu0 %v2339
        %v4344 = vpop.f32.mrb[0].mxu0
        %v4345 = vpop.f32.mrb[0].mxu0
        %v4346 = vpop.f32.mrb[0].mxu0
        %v4347 = vpop.f32.mrb[0].mxu0
        %4348 = vmatprep.mubr.bf16.mxu0 0
        %4349 = vmatmul.mubr.bf16.gmra.mrb[0].mxu0 %v2342
        %v4350 = vpop.f32.mrb[0].mxu0
        %v4351 = vadd.f32 0.0, %v4350
        %v4352 = vpop.f32.mrb[0].mxu0
        %v4353 = vpop.f32.mrb[0].mxu0
        %v4354 = vadd.f32 0.0, %v4353
        %v4355 = vpop.f32.mrb[0].mxu0
        %4356 = vmatprep.mubr.bf16.mxu0 0
        %4357 = vmatmul.mubr.bf16.gmra.mrb[0].mxu0 %v2345
        %v4358 = vpop.f32.mrb[0].mxu0
        %v4359 = vpop.f32.mrb[0].mxu0
        %v4360 = vpop.f32.mrb[0].mxu0
        %v4361 = vpop.f32.mrb[0].mxu0
        %4362 = vmatprep.mubr.bf16.mxu0 0
        %4363 = vmatmul.mubr.bf16.gmra.mrb[0].mxu0 %v2348
        %v4364 = vpop.f32.mrb[0].mxu0
        %v4365 = vadd.f32 0.0, %v4364
        %v4366 = vpop.f32.mrb[0].mxu0
        %v4367 = vpop.f32.mrb[0].mxu0
        %v4368 = vadd.f32 0.0, %v4367
        %v4369 = vpop.f32.mrb[0].mxu0
        %4370 = vmatprep.mubr.bf16.mxu0 0
        %4371 = vmatmul.mubr.bf16.gmra.mrb[0].mxu0 %v2351
        %v4372 = vpop.f32.mrb[0].mxu0
        %v4373 = vpop.f32.mrb[0].mxu0
        %v4374 = vpop.f32.mrb[0].mxu0
        %v4375 = vpop.f32.mrb[0].mxu0
        %4376 = vmatprep.mubr.bf16.mxu0 0
        %4377 = vmatmul.mubr.bf16.gmra.mrb[0].mxu0 %v2354
        %v4378 = vpop.f32.mrb[0].mxu0
        %v4379 = vadd.f32 0.0, %v4378
        %v4380 = vpop.f32.mrb[0].mxu0
        %v4381 = vpop.f32.mrb[0].mxu0
        %v4382 = vadd.f32 0.0, %v4381
        %v4383 = vpop.f32.mrb[0].mxu0
        %4384 = vmatprep.mubr.bf16.mxu0 0
        %4385 = vmatmul.mubr.bf16.gmra.mrb[0].mxu0 %v2357
        %v4386 = vpop.f32.mrb[0].mxu0
        %v4387 = vpop.f32.mrb[0].mxu0
        %v4388 = vpop.f32.mrb[0].mxu0
        %v4389 = vpop.f32.mrb[0].mxu0
        %4390 = vmatprep.mubr.bf16.mxu0 0
        %4391 = vmatmul.mubr.bf16.gmra.mrb[0].mxu0 %v2360
        %v4392 = vpop.f32.mrb[0].mxu0
        %v4393 = vadd.f32 0.0, %v4392
        %v4394 = vpop.f32.mrb[0].mxu0
        %v4395 = vpop.f32.mrb[0].mxu0
        %v4396 = vadd.f32 0.0, %v4395
        %v4397 = vpop.f32.mrb[0].mxu0
        %4398 = vmatprep.mubr.bf16.mxu0 0
        %4399 = vmatmul.mubr.bf16.gmra.mrb[0].mxu0 %v2363
        %v4400 = vpop.f32.mrb[0].mxu0
        %v4401 = vpop.f32.mrb[0].mxu0
        %v4402 = vpop.f32.mrb[0].mxu0
        %v4403 = vpop.f32.mrb[0].mxu0
        %4404 = vmatprep.mubr.bf16.mxu0 0
        %4405 = vmatmul.mubr.bf16.gmra.mrb[0].mxu0 %v2366
        %v4406 = vpop.f32.mrb[0].mxu0
        %v4407 = vadd.f32 0.0, %v4406
        %v4408 = vpop.f32.mrb[0].mxu0
        %v4409 = vpop.f32.mrb[0].mxu0
        %v4410 = vadd.f32 0.0, %v4409
        %v4411 = vpop.f32.mrb[0].mxu0
        %4412 = vmatprep.mubr.bf16.mxu0 0
        %4413 = vmatmul.mubr.bf16.gmra.mrb[0].mxu0 %v2369
        %v4414 = vpop.f32.mrb[0].mxu0
        %v4415 = vpop.f32.mrb[0].mxu0
        %v4416 = vpop.f32.mrb[0].mxu0
        %v4417 = vpop.f32.mrb[0].mxu0
        %4418 = vmatprep.mubr.bf16.mxu0 0
        %4419 = vmatmul.mubr.bf16.gmra.mrb[0].mxu0 %v2372
        %v4420 = vpop.f32.mrb[0].mxu0
        %v4421 = vadd.f32 0.0, %v4420
        %v4422 = vpop.f32.mrb[0].mxu0
        %v4423 = vpop.f32.mrb[0].mxu0
        %v4424 = vadd.f32 0.0, %v4423
        %v4425 = vpop.f32.mrb[0].mxu0
        %4426 = vmatprep.mubr.bf16.mxu0 0
        %4427 = vmatmul.mubr.bf16.gmra.mrb[0].mxu0 %v2375
        %v4428 = vpop.f32.mrb[0].mxu0
        %v4429 = vpop.f32.mrb[0].mxu0
        %v4430 = vpop.f32.mrb[0].mxu0
        %v4431 = vpop.f32.mrb[0].mxu0
        %4432 = vmatprep.mubr.bf16.mxu0 0
        %4433 = vmatmul.mubr.bf16.gmra.mrb[0].mxu0 %v2378
        %v4434 = vpop.f32.mrb[0].mxu0
        %v4435 = vadd.f32 0.0, %v4434
        %v4436 = vpop.f32.mrb[0].mxu0
        %v4437 = vpop.f32.mrb[0].mxu0
        %v4438 = vadd.f32 0.0, %v4437
        %v4439 = vpop.f32.mrb[0].mxu0
        %4440 = vmatprep.mubr.bf16.mxu0 0
        %4441 = vmatmul.mubr.bf16.gmra.mrb[0].mxu0 %v2381
        %v4442 = vpop.f32.mrb[0].mxu0
        %v4443 = vpop.f32.mrb[0].mxu0
        %v4444 = vpop.f32.mrb[0].mxu0
        %v4445 = vpop.f32.mrb[0].mxu0
        %4446 = vmatprep.mubr.bf16.mxu0 0
        %4447 = vmatmul.mubr.bf16.gmra.mrb[0].mxu0 %v2384
        %v4448 = vpop.f32.mrb[0].mxu0
        %v4449 = vadd.f32 0.0, %v4448
        %v4450 = vpop.f32.mrb[0].mxu0
        %v4451 = vpop.f32.mrb[0].mxu0
        %v4452 = vadd.f32 0.0, %v4451
        %v4453 = vpop.f32.mrb[0].mxu0
        %4454 = vmatprep.mubr.bf16.mxu0 0
        %4455 = vmatmul.mubr.bf16.gmra.mrb[0].mxu0 %v2387
        %v4456 = vpop.f32.mrb[0].mxu0
        %v4457 = vpop.f32.mrb[0].mxu0
        %v4458 = vpop.f32.mrb[0].mxu0
        %v4459 = vpop.f32.mrb[0].mxu0
        %4460 = vmatprep.mubr.bf16.mxu0 0
        %4461 = vmatmul.mubr.bf16.gmra.mrb[0].mxu0 %v3304
        %v4462 = vpop.f32.mrb[0].mxu0
        %v4463 = vadd.f32 0.0, %v4462
        %v4464 = vpop.f32.mrb[0].mxu0
        %v4465 = vpop.f32.mrb[0].mxu0
        %v4466 = vadd.f32 0.0, %v4465
        %v4467 = vpop.f32.mrb[0].mxu0
        %4468 = vmatprep.mubr.bf16.mxu0 0
        %4469 = vmatmul.mubr.bf16.gmra.mrb[0].mxu0 %v3307
        %v4470 = vpop.f32.mrb[0].mxu0
        %v4471 = vpop.f32.mrb[0].mxu0
        %v4472 = vpop.f32.mrb[0].mxu0
        %v4473 = vpop.f32.mrb[0].mxu0
        %4474 = vmatprep.mubr.bf16.mxu0 0
        %4475 = vmatmul.mubr.bf16.gmra.mrb[0].mxu0 %v4224
        %v4476 = vpop.f32.mrb[0].mxu0
        %v4477 = vadd.f32 0.0, %v4476
        %v4478 = vpop.f32.mrb[0].mxu0
        %v4479 = vpop.f32.mrb[0].mxu0
        %v4480 = vadd.f32 0.0, %v4479
        %v4481 = vpop.f32.mrb[0].mxu0
        %4482 = vmatprep.mubr.bf16.mxu0 0
        %4483 = vmatmul.mubr.bf16.gmra.mrb[0].mxu0 %v4227
        %v4484 = vpop.f32.mrb[0].mxu0
        %v4485 = vpop.f32.mrb[0].mxu0
        %v4486 = vpop.f32.mrb[0].mxu0
        %v4487 = vpop.f32.mrb[0].mxu0
        %4488 = vdwg.mxu0
        %v4489 = vadd.f32 %v4183, %v4267
        %v4490 = vadd.f32 %v4184, %v4270
        %v4491 = vadd.f32 %v4185, %v4281
        %v4492 = vadd.f32 %v4186, %v4284
        %v4493 = vadd.f32 %v4187, %v4295
        %v4494 = vadd.f32 %v4188, %v4298
        %v4495 = vadd.f32 %v4189, %v4309
        %v4496 = vadd.f32 %v4190, %v4312
        %v4497 = vadd.f32 %v4191, %v4323
        %v4498 = vadd.f32 %v4192, %v4326
        %v4499 = vadd.f32 %v4193, %v4337
        %v4500 = vadd.f32 %v4194, %v4340
        %v4501 = vadd.f32 %v4195, %v4351
        %v4502 = vadd.f32 %v4196, %v4354
        %v4503 = vadd.f32 %v4197, %v4365
        %v4504 = vadd.f32 %v4198, %v4368
        %v4505 = vadd.f32 %v4199, %v4379
        %v4506 = vadd.f32 %v4200, %v4382
        %v4507 = vadd.f32 %v4201, %v4393
        %v4508 = vadd.f32 %v4202, %v4396
        %v4509 = vadd.f32 %v4203, %v4407
        %v4510 = vadd.f32 %v4204, %v4410
        %v4511 = vadd.f32 %v4205, %v4421
        %v4512 = vadd.f32 %v4206, %v4424
        %v4513 = vadd.f32 %v4207, %v4435
        %v4514 = vadd.f32 %v4208, %v4438
        %v4515 = vadd.f32 %v4209, %v4449
        %v4516 = vadd.f32 %v4210, %v4452
        %v4517 = vadd.f32 %v4211, %v4463
        %v4518 = vadd.f32 %v4212, %v4466
        %v4519 = vadd.f32 %v4213, %v4477
        %v4520 = vadd.f32 %v4214, %v4480
        %vm4521 = vcmp.ge.f32.partialorder %v4489, 0.0
        %vm4522 = vcmp.ge.f32.partialorder %v4490, 0.0
        %vm4523 = vcmp.ge.f32.partialorder %v4491, 0.0
        %vm4524 = vcmp.ge.f32.partialorder %v4492, 0.0
        %vm4525 = vcmp.ge.f32.partialorder %v4493, 0.0
        %vm4526 = vcmp.ge.f32.partialorder %v4494, 0.0
        %vm4527 = vcmp.ge.f32.partialorder %v4495, 0.0
        %vm4528 = vcmp.ge.f32.partialorder %v4496, 0.0
        %vm4529 = vcmp.ge.f32.partialorder %v4497, 0.0
        %vm4530 = vcmp.ge.f32.partialorder %v4498, 0.0
        %vm4531 = vcmp.ge.f32.partialorder %v4499, 0.0
        %vm4532 = vcmp.ge.f32.partialorder %v4500, 0.0
        %vm4533 = vcmp.ge.f32.partialorder %v4501, 0.0
        %vm4534 = vcmp.ge.f32.partialorder %v4502, 0.0
        %vm4535 = vcmp.ge.f32.partialorder %v4503, 0.0
        %vm4536 = vcmp.ge.f32.partialorder %v4504, 0.0
        %vm4537 = vcmp.ge.f32.partialorder %v4505, 0.0
        %vm4538 = vcmp.ge.f32.partialorder %v4506, 0.0
        %vm4539 = vcmp.ge.f32.partialorder %v4507, 0.0
        %vm4540 = vcmp.ge.f32.partialorder %v4508, 0.0
        %vm4541 = vcmp.ge.f32.partialorder %v4509, 0.0
        %vm4542 = vcmp.ge.f32.partialorder %v4510, 0.0
        %vm4543 = vcmp.ge.f32.partialorder %v4511, 0.0
        %vm4544 = vcmp.ge.f32.partialorder %v4512, 0.0
        %vm4545 = vcmp.ge.f32.partialorder %v4513, 0.0
        %vm4546 = vcmp.ge.f32.partialorder %v4514, 0.0
        %vm4547 = vcmp.ge.f32.partialorder %v4515, 0.0
        %vm4548 = vcmp.ge.f32.partialorder %v4516, 0.0
        %vm4549 = vcmp.ge.f32.partialorder %v4517, 0.0
        %vm4550 = vcmp.ge.f32.partialorder %v4518, 0.0
        %vm4551 = vcmp.ge.f32.partialorder %v4519, 0.0
        %vm4552 = vcmp.ge.f32.partialorder %v4520, 0.0
        %v4553 = vstv %s266
        %v4554 = vmul.f32 %v4553, %v4489
        %v4555 = vmul.f32 %v4553, %v4490
        %v4556 = vmul.f32 %v4553, %v4491
        %v4557 = vmul.f32 %v4553, %v4492
        %v4558 = vmul.f32 %v4553, %v4493
        %v4559 = vmul.f32 %v4553, %v4494
        %v4560 = vmul.f32 %v4553, %v4495
        %v4561 = vmul.f32 %v4553, %v4496
        %v4562 = vmul.f32 %v4553, %v4497
        %v4563 = vmul.f32 %v4553, %v4498
        %v4564 = vmul.f32 %v4553, %v4499
        %v4565 = vmul.f32 %v4553, %v4500
        %v4566 = vmul.f32 %v4553, %v4501
        %v4567 = vmul.f32 %v4553, %v4502
        %v4568 = vmul.f32 %v4553, %v4503
        %v4569 = vmul.f32 %v4553, %v4504
        %v4570 = vmul.f32 %v4553, %v4505
        %v4571 = vmul.f32 %v4553, %v4506
        %v4572 = vmul.f32 %v4553, %v4507
        %v4573 = vmul.f32 %v4553, %v4508
        %v4574 = vmul.f32 %v4553, %v4509
        %v4575 = vmul.f32 %v4553, %v4510
        %v4576 = vmul.f32 %v4553, %v4511
        %v4577 = vmul.f32 %v4553, %v4512
        %v4578 = vmul.f32 %v4553, %v4513
        %v4579 = vmul.f32 %v4553, %v4514
        %v4580 = vmul.f32 %v4553, %v4515
        %v4581 = vmul.f32 %v4553, %v4516
        %v4582 = vmul.f32 %v4553, %v4517
        %v4583 = vmul.f32 %v4553, %v4518
        %v4584 = vmul.f32 %v4553, %v4519
        %v4585 = vmul.f32 %v4553, %v4520
        %v4586 = vsel %vm4521, %v4489, %v4554
        %v4587 = vsel %vm4522, %v4490, %v4555
        %v4588 = vsel %vm4523, %v4491, %v4556
        %v4589 = vsel %vm4524, %v4492, %v4557
        %v4590 = vsel %vm4525, %v4493, %v4558
        %v4591 = vsel %vm4526, %v4494, %v4559
        %v4592 = vsel %vm4527, %v4495, %v4560
        %v4593 = vsel %vm4528, %v4496, %v4561
        %v4594 = vsel %vm4529, %v4497, %v4562
        %v4595 = vsel %vm4530, %v4498, %v4563
        %v4596 = vsel %vm4531, %v4499, %v4564
        %v4597 = vsel %vm4532, %v4500, %v4565
        %v4598 = vsel %vm4533, %v4501, %v4566
        %v4599 = vsel %vm4534, %v4502, %v4567
        %v4600 = vsel %vm4535, %v4503, %v4568
        %v4601 = vsel %vm4536, %v4504, %v4569
        %v4602 = vsel %vm4537, %v4505, %v4570
        %v4603 = vsel %vm4538, %v4506, %v4571
        %v4604 = vsel %vm4539, %v4507, %v4572
        %v4605 = vsel %vm4540, %v4508, %v4573
        %v4606 = vsel %vm4541, %v4509, %v4574
        %v4607 = vsel %vm4542, %v4510, %v4575
        %v4608 = vsel %vm4543, %v4511, %v4576
        %v4609 = vsel %vm4544, %v4512, %v4577
        %v4610 = vsel %vm4545, %v4513, %v4578
        %v4611 = vsel %vm4546, %v4514, %v4579
        %v4612 = vsel %vm4547, %v4515, %v4580
        %v4613 = vsel %vm4548, %v4516, %v4581
        %v4614 = vsel %vm4549, %v4517, %v4582
        %v4615 = vsel %vm4550, %v4518, %v4583
        %v4616 = vsel %vm4551, %v4519, %v4584
        %v4617 = vsel %vm4552, %v4520, %v4585
        %4618 = vst.msk [vmem:[#allocation2 + $0x1] sm:$0xff] %vm534, %v4588
        %4619 = vst.msk [vmem:[#allocation2 + $0x9] sm:$0xff] %vm534, %v4589
        %4620 = vst.msk [vmem:[#allocation2 + $0x19] sm:$0xff] %vm534, %v4586
        %4621 = vst.msk [vmem:[#allocation2 + $0x21] sm:$0xff] %vm534, %v4587
        %4622 = vst.msk [vmem:[#allocation2 + $0x31] sm:$0xff] %vm534, %v4588
        %4623 = vst.msk [vmem:[#allocation2 + $0x39] sm:$0xff] %vm534, %v4589
        %4624 = vst.msk [vmem:[#allocation2 + $0x49] sm:$0xff] %vm534, %v4590
        %4625 = vst.msk [vmem:[#allocation2 + $0x51] sm:$0xff] %vm534, %v4591
        %4626 = vst.msk [vmem:[#allocation2 + $0x61] sm:$0xff] %vm534, %v4592
        %4627 = vst.msk [vmem:[#allocation2 + $0x69] sm:$0xff] %vm534, %v4593
        %4628 = vst.msk [vmem:[#allocation2 + $0x79] sm:$0xff] %vm534, %v4594
        %4629 = vst.msk [vmem:[#allocation2 + $0x81] sm:$0xff] %vm534, %v4595
        %4630 = vst.msk [vmem:[#allocation2 + $0x91] sm:$0xff] %vm534, %v4596
        %4631 = vst.msk [vmem:[#allocation2 + $0x99] sm:$0xff] %vm534, %v4597
        %4632 = vst.msk [vmem:[#allocation2 + $0xa9] sm:$0xff] %vm534, %v4598
        %4633 = vst.msk [vmem:[#allocation2 + $0xb1] sm:$0xff] %vm534, %v4599
        %4634 = vst.msk [vmem:[#allocation2 + $0xc1] sm:$0xff] %vm534, %v4600
        %4635 = vst.msk [vmem:[#allocation2 + $0xc9] sm:$0xff] %vm534, %v4601
        %4636 = vst.msk [vmem:[#allocation2 + $0xd9] sm:$0xff] %vm534, %v4602
        %4637 = vst.msk [vmem:[#allocation2 + $0xe1] sm:$0xff] %vm534, %v4603
        %4638 = vst.msk [vmem:[#allocation2 + $0xf1] sm:$0xff] %vm534, %v4604
        %4639 = vst.msk [vmem:[#allocation2 + $0xf9] sm:$0xff] %vm534, %v4605
        %4640 = vst.msk [vmem:[#allocation2 + $0x109] sm:$0xff] %vm534, %v4606
        %4641 = vst.msk [vmem:[#allocation2 + $0x111] sm:$0xff] %vm534, %v4607
        %4642 = vst.msk [vmem:[#allocation2 + $0x121] sm:$0xff] %vm534, %v4608
        %4643 = vst.msk [vmem:[#allocation2 + $0x129] sm:$0xff] %vm534, %v4609
        %4644 = vst.msk [vmem:[#allocation2 + $0x139] sm:$0xff] %vm534, %v4610
        %4645 = vst.msk [vmem:[#allocation2 + $0x141] sm:$0xff] %vm534, %v4611
        %4646 = vst.msk [vmem:[#allocation2 + $0x151] sm:$0xff] %vm534, %v4612
        %4647 = vst.msk [vmem:[#allocation2 + $0x159] sm:$0xff] %vm534, %v4613
        %4648 = vst.msk [vmem:[#allocation2 + $0x169] sm:$0xff] %vm534, %v4614
        %4649 = vst.msk [vmem:[#allocation2 + $0x171] sm:$0xff] %vm534, %v4615
        %4650 = vst.msk [vmem:[#allocation2 + $0x181] sm:$0xff] %vm534, %v4616
        %4651 = vst.msk [vmem:[#allocation2 + $0x189] sm:$0xff] %vm534, %v4617
        %4652 = vst.msk [vmem:[#allocation2 + $0x199] sm:$0xff] %vm534, %v4614
        %4653 = vst.msk [vmem:[#allocation2 + $0x1a1] sm:$0xff] %vm534, %v4615
        %vm4654 = vcmask 58369
        %4655 = vst.msk [vmem:[#allocation2 - $0x1] sm:$0x2] %vm4654, %v4588
        %4656 = vst.msk [vmem:[#allocation2 + $0x17] sm:$0x2] %vm4654, %v4586
        %4657 = vst.msk [vmem:[#allocation2 + $0x2f] sm:$0x2] %vm4654, %v4588
        %4658 = vst.msk [vmem:[#allocation2 + $0x47] sm:$0x2] %vm4654, %v4590
        %4659 = vst.msk [vmem:[#allocation2 + $0x5f] sm:$0x2] %vm4654, %v4592
        %4660 = vst.msk [vmem:[#allocation2 + $0x77] sm:$0x2] %vm4654, %v4594
        %4661 = vst.msk [vmem:[#allocation2 + $0x8f] sm:$0x2] %vm4654, %v4596
        %4662 = vst.msk [vmem:[#allocation2 + $0xa7] sm:$0x2] %vm4654, %v4598
        %4663 = vst.msk [vmem:[#allocation2 + $0xbf] sm:$0x2] %vm4654, %v4600
        %4664 = vst.msk [vmem:[#allocation2 + $0xd7] sm:$0x2] %vm4654, %v4602
        %4665 = vst.msk [vmem:[#allocation2 + $0xef] sm:$0x2] %vm4654, %v4604
        %4666 = vst.msk [vmem:[#allocation2 + $0x107] sm:$0x2] %vm4654, %v4606
        %4667 = vst.msk [vmem:[#allocation2 + $0x11f] sm:$0x2] %vm4654, %v4608
        %4668 = vst.msk [vmem:[#allocation2 + $0x137] sm:$0x2] %vm4654, %v4610
        %4669 = vst.msk [vmem:[#allocation2 + $0x14f] sm:$0x2] %vm4654, %v4612
        %4670 = vst.msk [vmem:[#allocation2 + $0x167] sm:$0x2] %vm4654, %v4614
        %4671 = vst.msk [vmem:[#allocation2 + $0x17f] sm:$0x2] %vm4654, %v4616
        %4672 = vst.msk [vmem:[#allocation2 + $0x197] sm:$0x2] %vm4654, %v4614
        %vm4673 = vcmask 63494
        %4674 = vst.msk [vmem:[#allocation2 + $0xb] sm:$0x40] %vm4673, %v4589
        %4675 = vst.msk [vmem:[#allocation2 + $0x23] sm:$0x40] %vm4673, %v4587
        %4676 = vst.msk [vmem:[#allocation2 + $0x3b] sm:$0x40] %vm4673, %v4589
        %4677 = vst.msk [vmem:[#allocation2 + $0x53] sm:$0x40] %vm4673, %v4591
        %4678 = vst.msk [vmem:[#allocation2 + $0x6b] sm:$0x40] %vm4673, %v4593
        %4679 = vst.msk [vmem:[#allocation2 + $0x83] sm:$0x40] %vm4673, %v4595
        %4680 = vst.msk [vmem:[#allocation2 + $0x9b] sm:$0x40] %vm4673, %v4597
        %4681 = vst.msk [vmem:[#allocation2 + $0xb3] sm:$0x40] %vm4673, %v4599
        %4682 = vst.msk [vmem:[#allocation2 + $0xcb] sm:$0x40] %vm4673, %v4601
        %4683 = vst.msk [vmem:[#allocation2 + $0xe3] sm:$0x40] %vm4673, %v4603
        %4684 = vst.msk [vmem:[#allocation2 + $0xfb] sm:$0x40] %vm4673, %v4605
        %4685 = vst.msk [vmem:[#allocation2 + $0x113] sm:$0x40] %vm4673, %v4607
        %4686 = vst.msk [vmem:[#allocation2 + $0x12b] sm:$0x40] %vm4673, %v4609
        %4687 = vst.msk [vmem:[#allocation2 + $0x143] sm:$0x40] %vm4673, %v4611
        %4688 = vst.msk [vmem:[#allocation2 + $0x15b] sm:$0x40] %vm4673, %v4613
        %4689 = vst.msk [vmem:[#allocation2 + $0x173] sm:$0x40] %vm4673, %v4615
        %4690 = vst.msk [vmem:[#allocation2 + $0x18b] sm:$0x40] %vm4673, %v4617
        %4691 = vst.msk [vmem:[#allocation2 + $0x1a3] sm:$0x40] %vm4673, %v4615
        %v4692 = vld [vmem:[#allocation2] ss:$2 sm:$0xff]
        %s4693 = scalar_lea.vmem [#allocation2], 48
        %v4694 = vld [vmem:[%s4693] ss:$2 sm:$0xff]
        %s4695 = scalar_lea.vmem [#allocation2], 96
        %v4696 = vld [vmem:[%s4695] ss:$2 sm:$0xff]
        %s4697 = scalar_lea.vmem [#allocation2], 144
        %v4698 = vld [vmem:[%s4697] ss:$2 sm:$0xff]
        %s4699 = scalar_lea.vmem [#allocation2], 192
        %v4700 = vld [vmem:[%s4699] ss:$2 sm:$0xff]
        %s4701 = scalar_lea.vmem [#allocation2], 240
        %v4702 = vld [vmem:[%s4701] ss:$2 sm:$0xff]
        %s4703 = scalar_lea.vmem [#allocation2], 288
        %v4704 = vld [vmem:[%s4703] ss:$2 sm:$0xff]
        %s4705 = scalar_lea.vmem [#allocation2], 336
        %v4706 = vld [vmem:[%s4705] ss:$2 sm:$0xff]
        %v4707 = vmul.f32 %v4692, 0.0625
        %v4708 = vmul.f32 %v4694, 0.0625
        %v4709 = vmul.f32 %v4696, 0.0625
        %v4710 = vmul.f32 %v4698, 0.0625
        %v4711 = vmul.f32 %v4700, 0.0625
        %v4712 = vmul.f32 %v4702, 0.0625
        %v4713 = vmul.f32 %v4704, 0.0625
        %v4714 = vmul.f32 %v4706, 0.0625
        %s4715 = scalar_lea.vmem [#allocation2], 1
        %v4716 = vld [vmem:[%s4715] ss:$2 sm:$0xff]
        %s4717 = scalar_lea.vmem [#allocation2], 49
        %v4718 = vld [vmem:[%s4717] ss:$2 sm:$0xff]
        %s4719 = scalar_lea.vmem [#allocation2], 97
        %v4720 = vld [vmem:[%s4719] ss:$2 sm:$0xff]
        %s4721 = scalar_lea.vmem [#allocation2], 145
        %v4722 = vld [vmem:[%s4721] ss:$2 sm:$0xff]
        %s4723 = scalar_lea.vmem [#allocation2], 193
        %v4724 = vld [vmem:[%s4723] ss:$2 sm:$0xff]
        %s4725 = scalar_lea.vmem [#allocation2], 241
        %v4726 = vld [vmem:[%s4725] ss:$2 sm:$0xff]
        %s4727 = scalar_lea.vmem [#allocation2], 289
        %v4728 = vld [vmem:[%s4727] ss:$2 sm:$0xff]
        %s4729 = scalar_lea.vmem [#allocation2], 337
        %v4730 = vld [vmem:[%s4729] ss:$2 sm:$0xff]
        %v4731 = vmul.f32 %v4716, 0.125
        %v4732 = vmul.f32 %v4718, 0.125
        %v4733 = vmul.f32 %v4720, 0.125
        %v4734 = vmul.f32 %v4722, 0.125
        %v4735 = vmul.f32 %v4724, 0.125
        %v4736 = vmul.f32 %v4726, 0.125
        %v4737 = vmul.f32 %v4728, 0.125
        %v4738 = vmul.f32 %v4730, 0.125
        %v4739 = vadd.f32 %v4707, %v4731
        %v4740 = vadd.f32 %v4708, %v4732
        %v4741 = vadd.f32 %v4709, %v4733
        %v4742 = vadd.f32 %v4710, %v4734
        %v4743 = vadd.f32 %v4711, %v4735
        %v4744 = vadd.f32 %v4712, %v4736
        %v4745 = vadd.f32 %v4713, %v4737
        %v4746 = vadd.f32 %v4714, %v4738
        %s4747 = scalar_lea.vmem [#allocation2], 2
        %v4748 = vld [vmem:[%s4747] ss:$2 sm:$0xff]
        %s4749 = scalar_lea.vmem [#allocation2], 50
        %v4750 = vld [vmem:[%s4749] ss:$2 sm:$0xff]
        %s4751 = scalar_lea.vmem [#allocation2], 98
        %v4752 = vld [vmem:[%s4751] ss:$2 sm:$0xff]
        %s4753 = scalar_lea.vmem [#allocation2], 146
        %v4754 = vld [vmem:[%s4753] ss:$2 sm:$0xff]
        %s4755 = scalar_lea.vmem [#allocation2], 194
        %v4756 = vld [vmem:[%s4755] ss:$2 sm:$0xff]
        %s4757 = scalar_lea.vmem [#allocation2], 242
        %v4758 = vld [vmem:[%s4757] ss:$2 sm:$0xff]
        %s4759 = scalar_lea.vmem [#allocation2], 290
        %v4760 = vld [vmem:[%s4759] ss:$2 sm:$0xff]
        %s4761 = scalar_lea.vmem [#allocation2], 338
        %v4762 = vld [vmem:[%s4761] ss:$2 sm:$0xff]
        %v4763 = vmul.f32 %v4748, 0.0625
        %v4764 = vmul.f32 %v4750, 0.0625
        %v4765 = vmul.f32 %v4752, 0.0625
        %v4766 = vmul.f32 %v4754, 0.0625
        %v4767 = vmul.f32 %v4756, 0.0625
        %v4768 = vmul.f32 %v4758, 0.0625
        %v4769 = vmul.f32 %v4760, 0.0625
        %v4770 = vmul.f32 %v4762, 0.0625
        %v4771 = vadd.f32 %v4739, %v4763
        %v4772 = vadd.f32 %v4740, %v4764
        %v4773 = vadd.f32 %v4741, %v4765
        %v4774 = vadd.f32 %v4742, %v4766
        %v4775 = vadd.f32 %v4743, %v4767
        %v4776 = vadd.f32 %v4744, %v4768
        %v4777 = vadd.f32 %v4745, %v4769
        %v4778 = vadd.f32 %v4746, %v4770
        %s4779 = scalar_lea.vmem [#allocation2], 24
        %v4780 = vld [vmem:[%s4779] ss:$2 sm:$0xff]
        %s4781 = scalar_lea.vmem %s4779, 48 [#allocation2]
        %v4782 = vld [vmem:[%s4781] ss:$2 sm:$0xff]
        %s4783 = scalar_lea.vmem %s4779, 96 [#allocation2]
        %v4784 = vld [vmem:[%s4783] ss:$2 sm:$0xff]
        %s4785 = scalar_lea.vmem %s4779, 144 [#allocation2]
        %v4786 = vld [vmem:[%s4785] ss:$2 sm:$0xff]
        %s4787 = scalar_lea.vmem %s4779, 192 [#allocation2]
        %v4788 = vld [vmem:[%s4787] ss:$2 sm:$0xff]
        %s4789 = scalar_lea.vmem %s4779, 240 [#allocation2]
        %v4790 = vld [vmem:[%s4789] ss:$2 sm:$0xff]
        %s4791 = scalar_lea.vmem %s4779, 288 [#allocation2]
        %v4792 = vld [vmem:[%s4791] ss:$2 sm:$0xff]
        %s4793 = scalar_lea.vmem %s4779, 336 [#allocation2]
        %v4794 = vld [vmem:[%s4793] ss:$2 sm:$0xff]
        %v4795 = vmul.f32 %v4780, 0.125
        %v4796 = vmul.f32 %v4782, 0.125
        %v4797 = vmul.f32 %v4784, 0.125
        %v4798 = vmul.f32 %v4786, 0.125
        %v4799 = vmul.f32 %v4788, 0.125
        %v4800 = vmul.f32 %v4790, 0.125
        %v4801 = vmul.f32 %v4792, 0.125
        %v4802 = vmul.f32 %v4794, 0.125
        %v4803 = vadd.f32 %v4771, %v4795
        %v4804 = vadd.f32 %v4772, %v4796
        %v4805 = vadd.f32 %v4773, %v4797
        %v4806 = vadd.f32 %v4774, %v4798
        %v4807 = vadd.f32 %v4775, %v4799
        %v4808 = vadd.f32 %v4776, %v4800
        %v4809 = vadd.f32 %v4777, %v4801
        %v4810 = vadd.f32 %v4778, %v4802
        %s4811 = scalar_lea.vmem %s4779, 1 [#allocation2]
        %v4812 = vld [vmem:[%s4811] ss:$2 sm:$0xff]
        %s4813 = scalar_lea.vmem %s4779, 49 [#allocation2]
        %v4814 = vld [vmem:[%s4813] ss:$2 sm:$0xff]
        %s4815 = scalar_lea.vmem %s4779, 97 [#allocation2]
        %v4816 = vld [vmem:[%s4815] ss:$2 sm:$0xff]
        %s4817 = scalar_lea.vmem %s4779, 145 [#allocation2]
        %v4818 = vld [vmem:[%s4817] ss:$2 sm:$0xff]
        %s4819 = scalar_lea.vmem %s4779, 193 [#allocation2]
        %v4820 = vld [vmem:[%s4819] ss:$2 sm:$0xff]
        %s4821 = scalar_lea.vmem %s4779, 241 [#allocation2]
        %v4822 = vld [vmem:[%s4821] ss:$2 sm:$0xff]
        %s4823 = scalar_lea.vmem %s4779, 289 [#allocation2]
        %v4824 = vld [vmem:[%s4823] ss:$2 sm:$0xff]
        %s4825 = scalar_lea.vmem %s4779, 337 [#allocation2]
        %v4826 = vld [vmem:[%s4825] ss:$2 sm:$0xff]
        %v4827 = vmul.f32 %v4812, 0.25
        %v4828 = vmul.f32 %v4814, 0.25
        %v4829 = vmul.f32 %v4816, 0.25
        %v4830 = vmul.f32 %v4818, 0.25
        %v4831 = vmul.f32 %v4820, 0.25
        %v4832 = vmul.f32 %v4822, 0.25
        %v4833 = vmul.f32 %v4824, 0.25
        %v4834 = vmul.f32 %v4826, 0.25
        %v4835 = vadd.f32 %v4803, %v4827
        %v4836 = vadd.f32 %v4804, %v4828
        %v4837 = vadd.f32 %v4805, %v4829
        %v4838 = vadd.f32 %v4806, %v4830
        %v4839 = vadd.f32 %v4807, %v4831
        %v4840 = vadd.f32 %v4808, %v4832
        %v4841 = vadd.f32 %v4809, %v4833
        %v4842 = vadd.f32 %v4810, %v4834
        %s4843 = scalar_lea.vmem %s4779, 2 [#allocation2]
        %v4844 = vld [vmem:[%s4843] ss:$2 sm:$0xff]
        %s4845 = scalar_lea.vmem %s4779, 50 [#allocation2]
        %v4846 = vld [vmem:[%s4845] ss:$2 sm:$0xff]
        %s4847 = scalar_lea.vmem %s4779, 98 [#allocation2]
        %v4848 = vld [vmem:[%s4847] ss:$2 sm:$0xff]
        %s4849 = scalar_lea.vmem %s4779, 146 [#allocation2]
        %v4850 = vld [vmem:[%s4849] ss:$2 sm:$0xff]
        %s4851 = scalar_lea.vmem %s4779, 194 [#allocation2]
        %v4852 = vld [vmem:[%s4851] ss:$2 sm:$0xff]
        %s4853 = scalar_lea.vmem %s4779, 242 [#allocation2]
        %v4854 = vld [vmem:[%s4853] ss:$2 sm:$0xff]
        %s4855 = scalar_lea.vmem %s4779, 290 [#allocation2]
        %v4856 = vld [vmem:[%s4855] ss:$2 sm:$0xff]
        %s4857 = scalar_lea.vmem %s4779, 338 [#allocation2]
        %v4858 = vld [vmem:[%s4857] ss:$2 sm:$0xff]
        %v4859 = vmul.f32 %v4844, 0.125
        %v4860 = vmul.f32 %v4846, 0.125
        %v4861 = vmul.f32 %v4848, 0.125
        %v4862 = vmul.f32 %v4850, 0.125
        %v4863 = vmul.f32 %v4852, 0.125
        %v4864 = vmul.f32 %v4854, 0.125
        %v4865 = vmul.f32 %v4856, 0.125
        %v4866 = vmul.f32 %v4858, 0.125
        %v4867 = vadd.f32 %v4835, %v4859
        %v4868 = vadd.f32 %v4836, %v4860
        %v4869 = vadd.f32 %v4837, %v4861
        %v4870 = vadd.f32 %v4838, %v4862
        %v4871 = vadd.f32 %v4839, %v4863
        %v4872 = vadd.f32 %v4840, %v4864
        %v4873 = vadd.f32 %v4841, %v4865
        %v4874 = vadd.f32 %v4842, %v4866
        %s4875 = scalar_lea.vmem [#allocation2], 48
        %v4876 = vld [vmem:[%s4875] ss:$2 sm:$0xff]
        %s4877 = scalar_lea.vmem %s4875, 48 [#allocation2]
        %v4878 = vld [vmem:[%s4877] ss:$2 sm:$0xff]
        %s4879 = scalar_lea.vmem %s4875, 96 [#allocation2]
        %v4880 = vld [vmem:[%s4879] ss:$2 sm:$0xff]
        %s4881 = scalar_lea.vmem %s4875, 144 [#allocation2]
        %v4882 = vld [vmem:[%s4881] ss:$2 sm:$0xff]
        %s4883 = scalar_lea.vmem %s4875, 192 [#allocation2]
        %v4884 = vld [vmem:[%s4883] ss:$2 sm:$0xff]
        %s4885 = scalar_lea.vmem %s4875, 240 [#allocation2]
        %v4886 = vld [vmem:[%s4885] ss:$2 sm:$0xff]
        %s4887 = scalar_lea.vmem %s4875, 288 [#allocation2]
        %v4888 = vld [vmem:[%s4887] ss:$2 sm:$0xff]
        %s4889 = scalar_lea.vmem %s4875, 336 [#allocation2]
        %v4890 = vld [vmem:[%s4889] ss:$2 sm:$0xff]
        %v4891 = vmul.f32 %v4876, 0.0625
        %v4892 = vmul.f32 %v4878, 0.0625
        %v4893 = vmul.f32 %v4880, 0.0625
        %v4894 = vmul.f32 %v4882, 0.0625
        %v4895 = vmul.f32 %v4884, 0.0625
        %v4896 = vmul.f32 %v4886, 0.0625
        %v4897 = vmul.f32 %v4888, 0.0625
        %v4898 = vmul.f32 %v4890, 0.0625
        %v4899 = vadd.f32 %v4867, %v4891
        %v4900 = vadd.f32 %v4868, %v4892
        %v4901 = vadd.f32 %v4869, %v4893
        %v4902 = vadd.f32 %v4870, %v4894
        %v4903 = vadd.f32 %v4871, %v4895
        %v4904 = vadd.f32 %v4872, %v4896
        %v4905 = vadd.f32 %v4873, %v4897
        %v4906 = vadd.f32 %v4874, %v4898
        %s4907 = scalar_lea.vmem %s4875, 1 [#allocation2]
        %v4908 = vld [vmem:[%s4907] ss:$2 sm:$0xff]
        %s4909 = scalar_lea.vmem %s4875, 49 [#allocation2]
        %v4910 = vld [vmem:[%s4909] ss:$2 sm:$0xff]
        %s4911 = scalar_lea.vmem %s4875, 97 [#allocation2]
        %v4912 = vld [vmem:[%s4911] ss:$2 sm:$0xff]
        %s4913 = scalar_lea.vmem %s4875, 145 [#allocation2]
        %v4914 = vld [vmem:[%s4913] ss:$2 sm:$0xff]
        %s4915 = scalar_lea.vmem %s4875, 193 [#allocation2]
        %v4916 = vld [vmem:[%s4915] ss:$2 sm:$0xff]
        %s4917 = scalar_lea.vmem %s4875, 241 [#allocation2]
        %v4918 = vld [vmem:[%s4917] ss:$2 sm:$0xff]
        %s4919 = scalar_lea.vmem %s4875, 289 [#allocation2]
        %v4920 = vld [vmem:[%s4919] ss:$2 sm:$0xff]
        %s4921 = scalar_lea.vmem %s4875, 337 [#allocation2]
        %v4922 = vld [vmem:[%s4921] ss:$2 sm:$0xff]
        %v4923 = vmul.f32 %v4908, 0.125
        %v4924 = vmul.f32 %v4910, 0.125
        %v4925 = vmul.f32 %v4912, 0.125
        %v4926 = vmul.f32 %v4914, 0.125
        %v4927 = vmul.f32 %v4916, 0.125
        %v4928 = vmul.f32 %v4918, 0.125
        %v4929 = vmul.f32 %v4920, 0.125
        %v4930 = vmul.f32 %v4922, 0.125
        %v4931 = vadd.f32 %v4899, %v4923
        %v4932 = vadd.f32 %v4900, %v4924
        %v4933 = vadd.f32 %v4901, %v4925
        %v4934 = vadd.f32 %v4902, %v4926
        %v4935 = vadd.f32 %v4903, %v4927
        %v4936 = vadd.f32 %v4904, %v4928
        %v4937 = vadd.f32 %v4905, %v4929
        %v4938 = vadd.f32 %v4906, %v4930
        %s4939 = scalar_lea.vmem %s4875, 2 [#allocation2]
        %v4940 = vld [vmem:[%s4939] ss:$2 sm:$0xff]
        %s4941 = scalar_lea.vmem %s4875, 50 [#allocation2]
        %v4942 = vld [vmem:[%s4941] ss:$2 sm:$0xff]
        %s4943 = scalar_lea.vmem %s4875, 98 [#allocation2]
        %v4944 = vld [vmem:[%s4943] ss:$2 sm:$0xff]
        %s4945 = scalar_lea.vmem %s4875, 146 [#allocation2]
        %v4946 = vld [vmem:[%s4945] ss:$2 sm:$0xff]
        %s4947 = scalar_lea.vmem %s4875, 194 [#allocation2]
        %v4948 = vld [vmem:[%s4947] ss:$2 sm:$0xff]
        %s4949 = scalar_lea.vmem %s4875, 242 [#allocation2]
        %v4950 = vld [vmem:[%s4949] ss:$2 sm:$0xff]
        %s4951 = scalar_lea.vmem %s4875, 290 [#allocation2]
        %v4952 = vld [vmem:[%s4951] ss:$2 sm:$0xff]
        %s4953 = scalar_lea.vmem %s4875, 338 [#allocation2]
        %v4954 = vld [vmem:[%s4953] ss:$2 sm:$0xff]
        %v4955 = vmul.f32 %v4940, 0.0625
        %v4956 = vmul.f32 %v4942, 0.0625
        %v4957 = vmul.f32 %v4944, 0.0625
        %v4958 = vmul.f32 %v4946, 0.0625
        %v4959 = vmul.f32 %v4948, 0.0625
        %v4960 = vmul.f32 %v4950, 0.0625
        %v4961 = vmul.f32 %v4952, 0.0625
        %v4962 = vmul.f32 %v4954, 0.0625
        %v4963 = vadd.f32 %v4931, %v4955
        %v4964 = vadd.f32 %v4932, %v4956
        %v4965 = vadd.f32 %v4933, %v4957
        %v4966 = vadd.f32 %v4934, %v4958
        %v4967 = vadd.f32 %v4935, %v4959
        %v4968 = vadd.f32 %v4936, %v4960
        %v4969 = vadd.f32 %v4937, %v4961
        %v4970 = vadd.f32 %v4938, %v4962
        %v4971 = vpack.c.bf16 %v4964, %v4963
        %v4972 = vpack.c.bf16 %v4966, %v4965
        %v4973 = vpack.c.bf16 %v4968, %v4967
        %v4974 = vpack.c.bf16 %v4970, %v4969
        %v4975 = vunpack.c.l.bf16 %v275
        %v4976 = vunpack.c.l.bf16 %v276
        %v4977 = vunpack.c.l.bf16 %v277
        %v4978 = vunpack.c.l.bf16 %v271
        %v4979 = vunpack.c.l.bf16 %v272
        %v4980 = vunpack.c.l.bf16 %v273
        %v4981 = vunpack.c.l.bf16 %v279
        %v4982 = vunpack.c.l.bf16 %v280
        %v4983 = vunpack.c.l.bf16 %v281
        %v4984 = vunpack.c.l.bf16 %v283
        %v4985 = vunpack.c.l.bf16 %v284
        %v4986 = vunpack.c.l.bf16 %v285
        %v4987 = vunpack.c.l.bf16 %v287
        %v4988 = vunpack.c.l.bf16 %v288
        %v4989 = vunpack.c.l.bf16 %v289
        %v4990 = vunpack.c.l.bf16 %v291
        %v4991 = vunpack.c.l.bf16 %v292
        %v4992 = vunpack.c.l.bf16 %v293
        %v4993 = vunpack.c.l.bf16 %v295
        %v4994 = vunpack.c.l.bf16 %v296
        %v4995 = vunpack.c.l.bf16 %v297
        %v4996 = vunpack.c.l.bf16 %v299
        %v4997 = vunpack.c.l.bf16 %v300
        %v4998 = vunpack.c.l.bf16 %v301
        %v4999 = vunpack.c.l.bf16 %v303
        %v5000 = vunpack.c.l.bf16 %v304
        %v5001 = vunpack.c.l.bf16 %v305
        %v5002 = vunpack.c.l.bf16 %v307
        %v5003 = vunpack.c.l.bf16 %v308
        %v5004 = vunpack.c.l.bf16 %v309
        %v5005 = vunpack.c.l.bf16 %v311
        %v5006 = vunpack.c.l.bf16 %v312
        %v5007 = vunpack.c.l.bf16 %v313
        %v5008 = vunpack.c.l.bf16 %v315
        %v5009 = vunpack.c.l.bf16 %v316
        %v5010 = vunpack.c.l.bf16 %v317
        %v5011 = vunpack.c.l.bf16 %v319
        %v5012 = vunpack.c.l.bf16 %v320
        %v5013 = vunpack.c.l.bf16 %v321
        %v5014 = vunpack.c.l.bf16 %v323
        %v5015 = vunpack.c.l.bf16 %v324
        %v5016 = vunpack.c.l.bf16 %v325
        %v5017 = vunpack.c.l.bf16 %v327
        %v5018 = vunpack.c.l.bf16 %v328
        %v5019 = vunpack.c.l.bf16 %v329
        %v5020 = vunpack.c.l.bf16 %v331
        %v5021 = vunpack.c.l.bf16 %v332
        %v5022 = vunpack.c.l.bf16 %v333
        %vm5023 = vcmask 64513
        %5024 = vst.msk [vmem:[#allocation2] sm:$0xfe] %vm5023, %v4975
        %5025 = vst.msk [vmem:[#allocation2 + $0x8] sm:$0xff] %vm534, %v4976
        %vm5026 = vcmask 57344
        %5027 = vst.msk [vmem:[#allocation2 + $0x10] sm:$0x1] %vm5026, %v4977
        %5028 = vst.msk [vmem:[#allocation2 + $0x18] sm:$0xfe] %vm5023, %v4978
        %5029 = vst.msk [vmem:[#allocation2 + $0x20] sm:$0xff] %vm534, %v4979
        %5030 = vst.msk [vmem:[#allocation2 + $0x28] sm:$0x1] %vm5026, %v4980
        %5031 = vst.msk [vmem:[#allocation2 + $0x30] sm:$0xfe] %vm5023, %v4975
        %5032 = vst.msk [vmem:[#allocation2 + $0x38] sm:$0xff] %vm534, %v4976
        %5033 = vst.msk [vmem:[#allocation2 + $0x40] sm:$0x1] %vm5026, %v4977
        %5034 = vst.msk [vmem:[#allocation2 + $0x48] sm:$0xfe] %vm5023, %v4981
        %5035 = vst.msk [vmem:[#allocation2 + $0x50] sm:$0xff] %vm534, %v4982
        %5036 = vst.msk [vmem:[#allocation2 + $0x58] sm:$0x1] %vm5026, %v4983
        %5037 = vst.msk [vmem:[#allocation2 + $0x60] sm:$0xfe] %vm5023, %v4984
        %5038 = vst.msk [vmem:[#allocation2 + $0x68] sm:$0xff] %vm534, %v4985
        %5039 = vst.msk [vmem:[#allocation2 + $0x70] sm:$0x1] %vm5026, %v4986
        %5040 = vst.msk [vmem:[#allocation2 + $0x78] sm:$0xfe] %vm5023, %v4987
        %5041 = vst.msk [vmem:[#allocation2 + $0x80] sm:$0xff] %vm534, %v4988
        %5042 = vst.msk [vmem:[#allocation2 + $0x88] sm:$0x1] %vm5026, %v4989
        %5043 = vst.msk [vmem:[#allocation2 + $0x90] sm:$0xfe] %vm5023, %v4990
        %5044 = vst.msk [vmem:[#allocation2 + $0x98] sm:$0xff] %vm534, %v4991
        %5045 = vst.msk [vmem:[#allocation2 + $0xa0] sm:$0x1] %vm5026, %v4992
        %5046 = vst.msk [vmem:[#allocation2 + $0xa8] sm:$0xfe] %vm5023, %v4993
        %5047 = vst.msk [vmem:[#allocation2 + $0xb0] sm:$0xff] %vm534, %v4994
        %5048 = vst.msk [vmem:[#allocation2 + $0xb8] sm:$0x1] %vm5026, %v4995
        %5049 = vst.msk [vmem:[#allocation2 + $0xc0] sm:$0xfe] %vm5023, %v4996
        %5050 = vst.msk [vmem:[#allocation2 + $0xc8] sm:$0xff] %vm534, %v4997
        %5051 = vst.msk [vmem:[#allocation2 + $0xd0] sm:$0x1] %vm5026, %v4998
        %5052 = vst.msk [vmem:[#allocation2 + $0xd8] sm:$0xfe] %vm5023, %v4999
        %5053 = vst.msk [vmem:[#allocation2 + $0xe0] sm:$0xff] %vm534, %v5000
        %5054 = vst.msk [vmem:[#allocation2 + $0xe8] sm:$0x1] %vm5026, %v5001
        %5055 = vst.msk [vmem:[#allocation2 + $0xf0] sm:$0xfe] %vm5023, %v5002
        %5056 = vst.msk [vmem:[#allocation2 + $0xf8] sm:$0xff] %vm534, %v5003
        %5057 = vst.msk [vmem:[#allocation2 + $0x100] sm:$0x1] %vm5026, %v5004
        %5058 = vst.msk [vmem:[#allocation2 + $0x108] sm:$0xfe] %vm5023, %v5005
        %5059 = vst.msk [vmem:[#allocation2 + $0x110] sm:$0xff] %vm534, %v5006
        %5060 = vst.msk [vmem:[#allocation2 + $0x118] sm:$0x1] %vm5026, %v5007
        %5061 = vst.msk [vmem:[#allocation2 + $0x120] sm:$0xfe] %vm5023, %v5008
        %5062 = vst.msk [vmem:[#allocation2 + $0x128] sm:$0xff] %vm534, %v5009
        %5063 = vst.msk [vmem:[#allocation2 + $0x130] sm:$0x1] %vm5026, %v5010
        %5064 = vst.msk [vmem:[#allocation2 + $0x138] sm:$0xfe] %vm5023, %v5011
        %5065 = vst.msk [vmem:[#allocation2 + $0x140] sm:$0xff] %vm534, %v5012
        %5066 = vst.msk [vmem:[#allocation2 + $0x148] sm:$0x1] %vm5026, %v5013
        %5067 = vst.msk [vmem:[#allocation2 + $0x150] sm:$0xfe] %vm5023, %v5014
        %5068 = vst.msk [vmem:[#allocation2 + $0x158] sm:$0xff] %vm534, %v5015
        %5069 = vst.msk [vmem:[#allocation2 + $0x160] sm:$0x1] %vm5026, %v5016
        %5070 = vst.msk [vmem:[#allocation2 + $0x168] sm:$0xfe] %vm5023, %v5017
        %5071 = vst.msk [vmem:[#allocation2 + $0x170] sm:$0xff] %vm534, %v5018
        %5072 = vst.msk [vmem:[#allocation2 + $0x178] sm:$0x1] %vm5026, %v5019
        %5073 = vst.msk [vmem:[#allocation2 + $0x180] sm:$0xfe] %vm5023, %v5020
        %5074 = vst.msk [vmem:[#allocation2 + $0x188] sm:$0xff] %vm534, %v5021
        %5075 = vst.msk [vmem:[#allocation2 + $0x190] sm:$0x1] %vm5026, %v5022
        %5076 = vst.msk [vmem:[#allocation2 + $0x198] sm:$0xfe] %vm5023, %v5017
        %5077 = vst.msk [vmem:[#allocation2 + $0x1a0] sm:$0xff] %vm534, %v5018
        %5078 = vst.msk [vmem:[#allocation2 + $0x1a8] sm:$0x1] %vm5026, %v5019
        %vm5079 = vcmask 59394
        %5080 = vst.msk [vmem:[#allocation2 - $0x2] sm:$0x4] %vm5079, %v4975
        %5081 = vst.msk [vmem:[#allocation2 + $0x16] sm:$0x4] %vm5079, %v4978
        %5082 = vst.msk [vmem:[#allocation2 + $0x2e] sm:$0x4] %vm5079, %v4975
        %5083 = vst.msk [vmem:[#allocation2 + $0x46] sm:$0x4] %vm5079, %v4981
        %5084 = vst.msk [vmem:[#allocation2 + $0x5e] sm:$0x4] %vm5079, %v4984
        %5085 = vst.msk [vmem:[#allocation2 + $0x76] sm:$0x4] %vm5079, %v4987
        %5086 = vst.msk [vmem:[#allocation2 + $0x8e] sm:$0x4] %vm5079, %v4990
        %5087 = vst.msk [vmem:[#allocation2 + $0xa6] sm:$0x4] %vm5079, %v4993
        %5088 = vst.msk [vmem:[#allocation2 + $0xbe] sm:$0x4] %vm5079, %v4996
        %5089 = vst.msk [vmem:[#allocation2 + $0xd6] sm:$0x4] %vm5079, %v4999
        %5090 = vst.msk [vmem:[#allocation2 + $0xee] sm:$0x4] %vm5079, %v5002
        %5091 = vst.msk [vmem:[#allocation2 + $0x106] sm:$0x4] %vm5079, %v5005
        %5092 = vst.msk [vmem:[#allocation2 + $0x11e] sm:$0x4] %vm5079, %v5008
        %5093 = vst.msk [vmem:[#allocation2 + $0x136] sm:$0x4] %vm5079, %v5011
        %5094 = vst.msk [vmem:[#allocation2 + $0x14e] sm:$0x4] %vm5079, %v5014
        %5095 = vst.msk [vmem:[#allocation2 + $0x166] sm:$0x4] %vm5079, %v5017
        %5096 = vst.msk [vmem:[#allocation2 + $0x17e] sm:$0x4] %vm5079, %v5020
        %5097 = vst.msk [vmem:[#allocation2 + $0x196] sm:$0x4] %vm5079, %v5017
        %vm5098 = vcmask 64519
        %5099 = vst.msk [vmem:[#allocation2 + $0xa] sm:$0x80] %vm5098, %v4976
        %5100 = vst.msk [vmem:[#allocation2 + $0x22] sm:$0x80] %vm5098, %v4979
        %5101 = vst.msk [vmem:[#allocation2 + $0x3a] sm:$0x80] %vm5098, %v4976
        %5102 = vst.msk [vmem:[#allocation2 + $0x52] sm:$0x80] %vm5098, %v4982
        %5103 = vst.msk [vmem:[#allocation2 + $0x6a] sm:$0x80] %vm5098, %v4985
        %5104 = vst.msk [vmem:[#allocation2 + $0x82] sm:$0x80] %vm5098, %v4988
        %5105 = vst.msk [vmem:[#allocation2 + $0x9a] sm:$0x80] %vm5098, %v4991
        %5106 = vst.msk [vmem:[#allocation2 + $0xb2] sm:$0x80] %vm5098, %v4994
        %5107 = vst.msk [vmem:[#allocation2 + $0xca] sm:$0x80] %vm5098, %v4997
        %5108 = vst.msk [vmem:[#allocation2 + $0xe2] sm:$0x80] %vm5098, %v5000
        %5109 = vst.msk [vmem:[#allocation2 + $0xfa] sm:$0x80] %vm5098, %v5003
        %5110 = vst.msk [vmem:[#allocation2 + $0x112] sm:$0x80] %vm5098, %v5006
        %5111 = vst.msk [vmem:[#allocation2 + $0x12a] sm:$0x80] %vm5098, %v5009
        %5112 = vst.msk [vmem:[#allocation2 + $0x142] sm:$0x80] %vm5098, %v5012
        %5113 = vst.msk [vmem:[#allocation2 + $0x15a] sm:$0x80] %vm5098, %v5015
        %5114 = vst.msk [vmem:[#allocation2 + $0x172] sm:$0x80] %vm5098, %v5018
        %5115 = vst.msk [vmem:[#allocation2 + $0x18a] sm:$0x80] %vm5098, %v5021
        %5116 = vst.msk [vmem:[#allocation2 + $0x1a2] sm:$0x80] %vm5098, %v5018
        %v5117 = vld [vmem:[#allocation2] ss:$2 sm:$0xff]
        %v5118 = vld [vmem:[%s4693] ss:$2 sm:$0xff]
        %v5119 = vld [vmem:[%s4695] ss:$2 sm:$0xff]
        %v5120 = vld [vmem:[%s4697] ss:$2 sm:$0xff]
        %v5121 = vld [vmem:[%s4699] ss:$2 sm:$0xff]
        %v5122 = vld [vmem:[%s4701] ss:$2 sm:$0xff]
        %v5123 = vld [vmem:[%s4703] ss:$2 sm:$0xff]
        %v5124 = vld [vmem:[%s4705] ss:$2 sm:$0xff]
        %v5125 = vmul.f32 %v5117, 0.0625
        %v5126 = vmul.f32 %v5118, 0.0625
        %v5127 = vmul.f32 %v5119, 0.0625
        %v5128 = vmul.f32 %v5120, 0.0625
        %v5129 = vmul.f32 %v5121, 0.0625
        %v5130 = vmul.f32 %v5122, 0.0625
        %v5131 = vmul.f32 %v5123, 0.0625
        %v5132 = vmul.f32 %v5124, 0.0625
        %v5133 = vld [vmem:[%s4715] ss:$2 sm:$0xff]
        %v5134 = vld [vmem:[%s4717] ss:$2 sm:$0xff]
        %v5135 = vld [vmem:[%s4719] ss:$2 sm:$0xff]
        %v5136 = vld [vmem:[%s4721] ss:$2 sm:$0xff]
        %v5137 = vld [vmem:[%s4723] ss:$2 sm:$0xff]
        %v5138 = vld [vmem:[%s4725] ss:$2 sm:$0xff]
        %v5139 = vld [vmem:[%s4727] ss:$2 sm:$0xff]
        %v5140 = vld [vmem:[%s4729] ss:$2 sm:$0xff]
        %v5141 = vmul.f32 %v5133, 0.125
        %v5142 = vmul.f32 %v5134, 0.125
        %v5143 = vmul.f32 %v5135, 0.125
        %v5144 = vmul.f32 %v5136, 0.125
        %v5145 = vmul.f32 %v5137, 0.125
        %v5146 = vmul.f32 %v5138, 0.125
        %v5147 = vmul.f32 %v5139, 0.125
        %v5148 = vmul.f32 %v5140, 0.125
        %v5149 = vadd.f32 %v5125, %v5141
        %v5150 = vadd.f32 %v5126, %v5142
        %v5151 = vadd.f32 %v5127, %v5143
        %v5152 = vadd.f32 %v5128, %v5144
        %v5153 = vadd.f32 %v5129, %v5145
        %v5154 = vadd.f32 %v5130, %v5146
        %v5155 = vadd.f32 %v5131, %v5147
        %v5156 = vadd.f32 %v5132, %v5148
        %v5157 = vld [vmem:[%s4747] ss:$2 sm:$0xff]
        %v5158 = vld [vmem:[%s4749] ss:$2 sm:$0xff]
        %v5159 = vld [vmem:[%s4751] ss:$2 sm:$0xff]
        %v5160 = vld [vmem:[%s4753] ss:$2 sm:$0xff]
        %v5161 = vld [vmem:[%s4755] ss:$2 sm:$0xff]
        %v5162 = vld [vmem:[%s4757] ss:$2 sm:$0xff]
        %v5163 = vld [vmem:[%s4759] ss:$2 sm:$0xff]
        %v5164 = vld [vmem:[%s4761] ss:$2 sm:$0xff]
        %v5165 = vmul.f32 %v5157, 0.0625
        %v5166 = vmul.f32 %v5158, 0.0625
        %v5167 = vmul.f32 %v5159, 0.0625
        %v5168 = vmul.f32 %v5160, 0.0625
        %v5169 = vmul.f32 %v5161, 0.0625
        %v5170 = vmul.f32 %v5162, 0.0625
        %v5171 = vmul.f32 %v5163, 0.0625
        %v5172 = vmul.f32 %v5164, 0.0625
        %v5173 = vadd.f32 %v5149, %v5165
        %v5174 = vadd.f32 %v5150, %v5166
        %v5175 = vadd.f32 %v5151, %v5167
        %v5176 = vadd.f32 %v5152, %v5168
        %v5177 = vadd.f32 %v5153, %v5169
        %v5178 = vadd.f32 %v5154, %v5170
        %v5179 = vadd.f32 %v5155, %v5171
        %v5180 = vadd.f32 %v5156, %v5172
        %v5181 = vld [vmem:[%s4779] ss:$2 sm:$0xff]
        %v5182 = vld [vmem:[%s4781] ss:$2 sm:$0xff]
        %v5183 = vld [vmem:[%s4783] ss:$2 sm:$0xff]
        %v5184 = vld [vmem:[%s4785] ss:$2 sm:$0xff]
        %v5185 = vld [vmem:[%s4787] ss:$2 sm:$0xff]
        %v5186 = vld [vmem:[%s4789] ss:$2 sm:$0xff]
        %v5187 = vld [vmem:[%s4791] ss:$2 sm:$0xff]
        %v5188 = vld [vmem:[%s4793] ss:$2 sm:$0xff]
        %v5189 = vmul.f32 %v5181, 0.125
        %v5190 = vmul.f32 %v5182, 0.125
        %v5191 = vmul.f32 %v5183, 0.125
        %v5192 = vmul.f32 %v5184, 0.125
        %v5193 = vmul.f32 %v5185, 0.125
        %v5194 = vmul.f32 %v5186, 0.125
        %v5195 = vmul.f32 %v5187, 0.125
        %v5196 = vmul.f32 %v5188, 0.125
        %v5197 = vadd.f32 %v5173, %v5189
        %v5198 = vadd.f32 %v5174, %v5190
        %v5199 = vadd.f32 %v5175, %v5191
        %v5200 = vadd.f32 %v5176, %v5192
        %v5201 = vadd.f32 %v5177, %v5193
        %v5202 = vadd.f32 %v5178, %v5194
        %v5203 = vadd.f32 %v5179, %v5195
        %v5204 = vadd.f32 %v5180, %v5196
        %v5205 = vld [vmem:[%s4811] ss:$2 sm:$0xff]
        %v5206 = vld [vmem:[%s4813] ss:$2 sm:$0xff]
        %v5207 = vld [vmem:[%s4815] ss:$2 sm:$0xff]
        %v5208 = vld [vmem:[%s4817] ss:$2 sm:$0xff]
        %v5209 = vld [vmem:[%s4819] ss:$2 sm:$0xff]
        %v5210 = vld [vmem:[%s4821] ss:$2 sm:$0xff]
        %v5211 = vld [vmem:[%s4823] ss:$2 sm:$0xff]
        %v5212 = vld [vmem:[%s4825] ss:$2 sm:$0xff]
        %v5213 = vmul.f32 %v5205, 0.25
        %v5214 = vmul.f32 %v5206, 0.25
        %v5215 = vmul.f32 %v5207, 0.25
        %v5216 = vmul.f32 %v5208, 0.25
        %v5217 = vmul.f32 %v5209, 0.25
        %v5218 = vmul.f32 %v5210, 0.25
        %v5219 = vmul.f32 %v5211, 0.25
        %v5220 = vmul.f32 %v5212, 0.25
        %v5221 = vadd.f32 %v5197, %v5213
        %v5222 = vadd.f32 %v5198, %v5214
        %v5223 = vadd.f32 %v5199, %v5215
        %v5224 = vadd.f32 %v5200, %v5216
        %v5225 = vadd.f32 %v5201, %v5217
        %v5226 = vadd.f32 %v5202, %v5218
        %v5227 = vadd.f32 %v5203, %v5219
        %v5228 = vadd.f32 %v5204, %v5220
        %v5229 = vld [vmem:[%s4843] ss:$2 sm:$0xff]
        %v5230 = vld [vmem:[%s4845] ss:$2 sm:$0xff]
        %v5231 = vld [vmem:[%s4847] ss:$2 sm:$0xff]
        %v5232 = vld [vmem:[%s4849] ss:$2 sm:$0xff]
        %v5233 = vld [vmem:[%s4851] ss:$2 sm:$0xff]
        %v5234 = vld [vmem:[%s4853] ss:$2 sm:$0xff]
        %v5235 = vld [vmem:[%s4855] ss:$2 sm:$0xff]
        %v5236 = vld [vmem:[%s4857] ss:$2 sm:$0xff]
        %v5237 = vmul.f32 %v5229, 0.125
        %v5238 = vmul.f32 %v5230, 0.125
        %v5239 = vmul.f32 %v5231, 0.125
        %v5240 = vmul.f32 %v5232, 0.125
        %v5241 = vmul.f32 %v5233, 0.125
        %v5242 = vmul.f32 %v5234, 0.125
        %v5243 = vmul.f32 %v5235, 0.125
        %v5244 = vmul.f32 %v5236, 0.125
        %v5245 = vadd.f32 %v5221, %v5237
        %v5246 = vadd.f32 %v5222, %v5238
        %v5247 = vadd.f32 %v5223, %v5239
        %v5248 = vadd.f32 %v5224, %v5240
        %v5249 = vadd.f32 %v5225, %v5241
        %v5250 = vadd.f32 %v5226, %v5242
        %v5251 = vadd.f32 %v5227, %v5243
        %v5252 = vadd.f32 %v5228, %v5244
        %v5253 = vld [vmem:[%s4875] ss:$2 sm:$0xff]
        %v5254 = vld [vmem:[%s4877] ss:$2 sm:$0xff]
        %v5255 = vld [vmem:[%s4879] ss:$2 sm:$0xff]
        %v5256 = vld [vmem:[%s4881] ss:$2 sm:$0xff]
        %v5257 = vld [vmem:[%s4883] ss:$2 sm:$0xff]
        %v5258 = vld [vmem:[%s4885] ss:$2 sm:$0xff]
        %v5259 = vld [vmem:[%s4887] ss:$2 sm:$0xff]
        %v5260 = vld [vmem:[%s4889] ss:$2 sm:$0xff]
        %v5261 = vmul.f32 %v5253, 0.0625
        %v5262 = vmul.f32 %v5254, 0.0625
        %v5263 = vmul.f32 %v5255, 0.0625
        %v5264 = vmul.f32 %v5256, 0.0625
        %v5265 = vmul.f32 %v5257, 0.0625
        %v5266 = vmul.f32 %v5258, 0.0625
        %v5267 = vmul.f32 %v5259, 0.0625
        %v5268 = vmul.f32 %v5260, 0.0625
        %v5269 = vadd.f32 %v5245, %v5261
        %v5270 = vadd.f32 %v5246, %v5262
        %v5271 = vadd.f32 %v5247, %v5263
        %v5272 = vadd.f32 %v5248, %v5264
        %v5273 = vadd.f32 %v5249, %v5265
        %v5274 = vadd.f32 %v5250, %v5266
        %v5275 = vadd.f32 %v5251, %v5267
        %v5276 = vadd.f32 %v5252, %v5268
        %v5277 = vld [vmem:[%s4907] ss:$2 sm:$0xff]
        %v5278 = vld [vmem:[%s4909] ss:$2 sm:$0xff]
        %v5279 = vld [vmem:[%s4911] ss:$2 sm:$0xff]
        %v5280 = vld [vmem:[%s4913] ss:$2 sm:$0xff]
        %v5281 = vld [vmem:[%s4915] ss:$2 sm:$0xff]
        %v5282 = vld [vmem:[%s4917] ss:$2 sm:$0xff]
        %v5283 = vld [vmem:[%s4919] ss:$2 sm:$0xff]
        %v5284 = vld [vmem:[%s4921] ss:$2 sm:$0xff]
        %v5285 = vmul.f32 %v5277, 0.125
        %v5286 = vmul.f32 %v5278, 0.125
        %v5287 = vmul.f32 %v5279, 0.125
        %v5288 = vmul.f32 %v5280, 0.125
        %v5289 = vmul.f32 %v5281, 0.125
        %v5290 = vmul.f32 %v5282, 0.125
        %v5291 = vmul.f32 %v5283, 0.125
        %v5292 = vmul.f32 %v5284, 0.125
        %v5293 = vadd.f32 %v5269, %v5285
        %v5294 = vadd.f32 %v5270, %v5286
        %v5295 = vadd.f32 %v5271, %v5287
        %v5296 = vadd.f32 %v5272, %v5288
        %v5297 = vadd.f32 %v5273, %v5289
        %v5298 = vadd.f32 %v5274, %v5290
        %v5299 = vadd.f32 %v5275, %v5291
        %v5300 = vadd.f32 %v5276, %v5292
        %v5301 = vld [vmem:[%s4939] ss:$2 sm:$0xff]
        %v5302 = vld [vmem:[%s4941] ss:$2 sm:$0xff]
        %v5303 = vld [vmem:[%s4943] ss:$2 sm:$0xff]
        %v5304 = vld [vmem:[%s4945] ss:$2 sm:$0xff]
        %v5305 = vld [vmem:[%s4947] ss:$2 sm:$0xff]
        %v5306 = vld [vmem:[%s4949] ss:$2 sm:$0xff]
        %v5307 = vld [vmem:[%s4951] ss:$2 sm:$0xff]
        %v5308 = vld [vmem:[%s4953] ss:$2 sm:$0xff]
        %v5309 = vmul.f32 %v5301, 0.0625
        %v5310 = vmul.f32 %v5302, 0.0625
        %v5311 = vmul.f32 %v5303, 0.0625
        %v5312 = vmul.f32 %v5304, 0.0625
        %v5313 = vmul.f32 %v5305, 0.0625
        %v5314 = vmul.f32 %v5306, 0.0625
        %v5315 = vmul.f32 %v5307, 0.0625
        %v5316 = vmul.f32 %v5308, 0.0625
        %v5317 = vadd.f32 %v5293, %v5309
        %v5318 = vadd.f32 %v5294, %v5310
        %v5319 = vadd.f32 %v5295, %v5311
        %v5320 = vadd.f32 %v5296, %v5312
        %v5321 = vadd.f32 %v5297, %v5313
        %v5322 = vadd.f32 %v5298, %v5314
        %v5323 = vadd.f32 %v5299, %v5315
        %v5324 = vadd.f32 %v5300, %v5316
        %v5325 = vpack.c.bf16 %v5318, %v5317
        %v5326 = vpack.c.bf16 %v5320, %v5319
        %v5327 = vpack.c.bf16 %v5322, %v5321
        %v5328 = vpack.c.bf16 %v5324, %v5323
        %v5329 = vld [vmem:[%s4] sm:$0xf]
        %v5330 = vld [vmem:[%s5] sm:$0xf]
        %v5332 = vsel %vm534, %v5325, 0
        %v5335 = vsel %vm534, %v5326, 0
        %v5338 = vsel %vm534, %v5327, 0
        %v5341 = vsel %vm534, %v5328, 0
        %v5344 = vsel %vm649, %v5330, 0
        %5346 = vmatprep.subr.bf16.mxu0 0
        %5347 = vmatpush1.bf16.msra.mxu0 %v5344
        %5348 = vmatprep.subr.bf16.mxu0 0
        %5349 = vmatpush1.bf16.msra.mxu0 0
        %5350 = vmatprep.subr.bf16.mxu0 0
        %5351 = vmatpush1.bf16.msra.mxu0 0
        %5352 = vmatprep.subr.bf16.mxu0 0
        %5353 = vmatpush1.bf16.msra.mxu0 0
        %5354 = vmatprep.subr.bf16.mxu0 0
        %5355 = vmatpush1.bf16.msra.mxu0 0
        %5356 = vmatprep.subr.bf16.mxu0 0
        %5357 = vmatpush1.bf16.msra.mxu0 0
        %5358 = vmatprep.subr.bf16.mxu0 0
        %5359 = vmatpush1.bf16.msra.mxu0 0
        %5360 = vmatprep.subr.bf16.mxu0 0
        %5361 = vmatpush1.bf16.msra.mxu0 0
        %5362 = vmatprep.subr.bf16.mxu0 0
        %5363 = vmatpush1.bf16.msra.mxu0 0
        %5364 = vmatprep.subr.bf16.mxu0 0
        %5365 = vmatpush1.bf16.msra.mxu0 0
        %5366 = vmatprep.subr.bf16.mxu0 0
        %5367 = vmatpush1.bf16.msra.mxu0 0
        %5368 = vmatprep.subr.bf16.mxu0 0
        %5369 = vmatpush1.bf16.msra.mxu0 0
        %5370 = vmatprep.subr.bf16.mxu0 0
        %5371 = vmatpush1.bf16.msra.mxu0 0
        %5372 = vmatprep.subr.bf16.mxu0 0
        %5373 = vmatpush1.bf16.msra.mxu0 0
        %5374 = vmatprep.subr.bf16.mxu0 0
        %5375 = vmatpush1.bf16.msra.mxu0 0
        %5376 = vmatprep.subr.bf16.mxu0 0
        %5377 = vmatpush1.bf16.msra.mxu0 0
        %5378 = vmatprep.mubr.bf16.mxu0 0
        %5379 = vmatmul.mubr.bf16.gmra.mrb[0].mxu0 %v5332
        %v5380 = vpop.f32.mrb[0].mxu0
        %v5381 = vadd.f32 0.0, %v5380
        %v5382 = vpop.f32.mrb[0].mxu0
        %v5383 = vpop.f32.mrb[0].mxu0
        %v5384 = vadd.f32 0.0, %v5383
        %v5385 = vpop.f32.mrb[0].mxu0
        %5386 = vmatprep.mubr.bf16.mxu0 0
        %5387 = vmatmul.mubr.bf16.gmra.mrb[0].mxu0 %v5335
        %v5388 = vpop.f32.mrb[0].mxu0
        %v5389 = vadd.f32 0.0, %v5388
        %v5390 = vpop.f32.mrb[0].mxu0
        %v5391 = vpop.f32.mrb[0].mxu0
        %v5392 = vadd.f32 0.0, %v5391
        %v5393 = vpop.f32.mrb[0].mxu0
        %5394 = vmatprep.mubr.bf16.mxu0 0
        %5395 = vmatmul.mubr.bf16.gmra.mrb[0].mxu0 %v5338
        %v5396 = vpop.f32.mrb[0].mxu0
        %v5397 = vadd.f32 0.0, %v5396
        %v5398 = vpop.f32.mrb[0].mxu0
        %v5399 = vpop.f32.mrb[0].mxu0
        %v5400 = vadd.f32 0.0, %v5399
        %v5401 = vpop.f32.mrb[0].mxu0
        %5402 = vmatprep.mubr.bf16.mxu0 0
        %5403 = vmatmul.mubr.bf16.gmra.mrb[0].mxu0 %v5341
        %v5404 = vpop.f32.mrb[0].mxu0
        %v5405 = vadd.f32 0.0, %v5404
        %v5406 = vpop.f32.mrb[0].mxu0
        %v5407 = vpop.f32.mrb[0].mxu0
        %v5408 = vadd.f32 0.0, %v5407
        %v5409 = vpop.f32.mrb[0].mxu0
        %5410 = vdwg.mxu0
        %v5412 = vsel %vm534, %v4971, 0
        %v5415 = vsel %vm534, %v4972, 0
        %v5418 = vsel %vm534, %v4973, 0
        %v5421 = vsel %vm534, %v4974, 0
        %v5424 = vsel %vm649, %v5329, 0
        %5426 = vmatprep.subr.bf16.mxu0 0
        %5427 = vmatpush1.bf16.msra.mxu0 %v5424
        %5428 = vmatprep.subr.bf16.mxu0 0
        %5429 = vmatpush1.bf16.msra.mxu0 0
        %5430 = vmatprep.subr.bf16.mxu0 0
        %5431 = vmatpush1.bf16.msra.mxu0 0
        %5432 = vmatprep.subr.bf16.mxu0 0
        %5433 = vmatpush1.bf16.msra.mxu0 0
        %5434 = vmatprep.subr.bf16.mxu0 0
        %5435 = vmatpush1.bf16.msra.mxu0 0
        %5436 = vmatprep.subr.bf16.mxu0 0
        %5437 = vmatpush1.bf16.msra.mxu0 0
        %5438 = vmatprep.subr.bf16.mxu0 0
        %5439 = vmatpush1.bf16.msra.mxu0 0
        %5440 = vmatprep.subr.bf16.mxu0 0
        %5441 = vmatpush1.bf16.msra.mxu0 0
        %5442 = vmatprep.subr.bf16.mxu0 0
        %5443 = vmatpush1.bf16.msra.mxu0 0
        %5444 = vmatprep.subr.bf16.mxu0 0
        %5445 = vmatpush1.bf16.msra.mxu0 0
        %5446 = vmatprep.subr.bf16.mxu0 0
        %5447 = vmatpush1.bf16.msra.mxu0 0
        %5448 = vmatprep.subr.bf16.mxu0 0
        %5449 = vmatpush1.bf16.msra.mxu0 0
        %5450 = vmatprep.subr.bf16.mxu0 0
        %5451 = vmatpush1.bf16.msra.mxu0 0
        %5452 = vmatprep.subr.bf16.mxu0 0
        %5453 = vmatpush1.bf16.msra.mxu0 0
        %5454 = vmatprep.subr.bf16.mxu0 0
        %5455 = vmatpush1.bf16.msra.mxu0 0
        %5456 = vmatprep.subr.bf16.mxu0 0
        %5457 = vmatpush1.bf16.msra.mxu0 0
        %5458 = vmatprep.mubr.bf16.mxu0 0
        %5459 = vmatmul.mubr.bf16.gmra.mrb[0].mxu0 %v5412
        %v5460 = vpop.f32.mrb[0].mxu0
        %v5461 = vadd.f32 %v5381, %v5460
        %v5462 = vpop.f32.mrb[0].mxu0
        %v5463 = vpop.f32.mrb[0].mxu0
        %v5464 = vadd.f32 %v5384, %v5463
        %v5465 = vpop.f32.mrb[0].mxu0
        %5466 = vmatprep.mubr.bf16.mxu0 0
        %5467 = vmatmul.mubr.bf16.gmra.mrb[0].mxu0 %v5415
        %v5468 = vpop.f32.mrb[0].mxu0
        %v5469 = vadd.f32 %v5389, %v5468
        %v5470 = vpop.f32.mrb[0].mxu0
        %v5471 = vpop.f32.mrb[0].mxu0
        %v5472 = vadd.f32 %v5392, %v5471
        %v5473 = vpop.f32.mrb[0].mxu0
        %5474 = vmatprep.mubr.bf16.mxu0 0
        %5475 = vmatmul.mubr.bf16.gmra.mrb[0].mxu0 %v5418
        %v5476 = vpop.f32.mrb[0].mxu0
        %v5477 = vadd.f32 %v5397, %v5476
        %v5478 = vpop.f32.mrb[0].mxu0
        %v5479 = vpop.f32.mrb[0].mxu0
        %v5480 = vadd.f32 %v5400, %v5479
        %v5481 = vpop.f32.mrb[0].mxu0
        %5482 = vmatprep.mubr.bf16.mxu0 0
        %5483 = vmatmul.mubr.bf16.gmra.mrb[0].mxu0 %v5421
        %v5484 = vpop.f32.mrb[0].mxu0
        %v5485 = vadd.f32 %v5405, %v5484
        %v5486 = vpop.f32.mrb[0].mxu0
        %v5487 = vpop.f32.mrb[0].mxu0
        %v5488 = vadd.f32 %v5408, %v5487
        %v5489 = vpop.f32.mrb[0].mxu0
        %5490 = vdwg.mxu0
        %vm5491 = vcmask 130048
        %5492 = vst.msk [vmem:[%s258] sm:$0xff] %vm5491, %v5461
        %5493 = vst.msk [vmem:[%s258 + $0x8] sm:$0xff] %vm5491, %v5464
        %5494 = vst.msk [vmem:[%s258 + $0x10] sm:$0xff] %vm5491, %v5469
        %5495 = vst.msk [vmem:[%s258 + $0x18] sm:$0xff] %vm5491, %v5472
        %5496 = vst.msk [vmem:[%s258 + $0x20] sm:$0xff] %vm5491, %v5477
        %5497 = vst.msk [vmem:[%s258 + $0x28] sm:$0xff] %vm5491, %v5480
        %5498 = vst.msk [vmem:[%s258 + $0x30] sm:$0xff] %vm5491, %v5485
        %5499 = vst.msk [vmem:[%s258 + $0x38] sm:$0xff] %vm5491, %v5488
        %s5500 = sand.u32 %s160, 1
        %s5501 = scalar_lea.sflag [#allocation4], %s5500
        %s5502 = sand.u32 %s160, 1
        %s5503 = smul.addr %s5502, 64
        %s5504 = scalar_lea.vmem [#allocation6], %s5503
        // Predicated region
        $region49: #{residual_downsample_apply.1} parent=43 // pred_check
          %p5505 = pneg %p170
        $region50: #{residual_downsample_apply.1} parent=43 // pred_check_branch
          %5507 = sbr.rel (%p5505) target = $region52
        $region51: #{residual_downsample_apply.1} parent=43 // pred_region
          %s5509 = ssub.s32 1024, 1024
          %5510 = vsyncadd %s5501, %s5509
          %s5511 = smul.addr %s21, 8
          %s5512 = smul.addr %s5511, 128
          %s5513 = scalar_lea.hbm %s6, %s5512
          %s5514 = sshll.u32 %s5504, 4
          %s5515 = int_to_ptr.vmem [resolvable:$true] %s5514
          %5520 = dma.vmem_to_hbm [thread:$0]  %s5515, 1024, %s5513, %s5501, 128, 128, 8
        $region52: #{residual_downsample_apply.1} parent=43 // pred_fallthru
          _
      $region44: #{residual_downsample_apply.1} parent=5 // pred_fallthru
        _
      %p5521 = scmp.le.s32.totalorder 2, %s16
      // Predicated region
      $region53: #{residual_downsample_apply.1} parent=5 // pred_check
        %p5522 = pneg %p5521
      $region54: #{residual_downsample_apply.1} parent=5 // pred_check_branch
        %5524 = sbr.rel (%p5522) target = $region56
      $region55: #{residual_downsample_apply.1} parent=5 // pred_region
        %s5525 = ssub.s32 %s16, 2
        // Predicated region
        $region57: #{residual_downsample_apply.1} parent=55 // pred_check
          %p5526 = pneg %p176
        $region58: #{residual_downsample_apply.1} parent=55 // pred_check_branch
          %5528 = sbr.rel (%p5526) target = $region60
        $region59: #{residual_downsample_apply.1} parent=55 // pred_region
          %s5529 = sand.u32 %s161, 1
          %s5530 = scalar_lea.sflag [#allocation4], %s5529
          %s5531 = sand.u32 %s161, 1
          %s5532 = smul.addr %s5531, 64
          %s5533 = scalar_lea.vmem [#allocation6], %s5532
          %5534 = dma.done %s5530, 1024
        $region60: #{residual_downsample_apply.1} parent=55 // pred_fallthru
          _
      $region56: #{residual_downsample_apply.1} parent=5 // pred_fallthru
        _
    $region6: #{residual_downsample_apply.1} parent=1 // loop_footer
      %s20 = sadd.s32 1, %s16
    $region7: #{residual_downsample_apply.1} parent=1 // loop_footer_branch
      %15 = sbr.rel target = $region3
    $region8: #{residual_downsample_apply.1} parent=1 // loop_exit
      _
    %5535 = vsyncpa [#allocation4], 1
    %s5536 = scalar_lea.sflag [#allocation4], 1
    %5537 = vsyncpa %s5536, 1
    %5538 = vsyncpa [#allocation5], 1
    %s5539 = scalar_lea.sflag [#allocation5], 1
    %5540 = vsyncpa %s5539, 1

</llo_original>
